<compile_context>
chip_gen: v6e
topology: v6e:2x2x1
jax: 0.10.0
libtpu: 0.0.40
codegen_flags: <defaults>
</compile_context>

<pallas_src>
import functools

import jax
import jax.numpy as jnp
from jax.experimental import pallas as pl
from jax.experimental.pallas import tpu as pltpu


TILE_N = 128  # batch rows per grid step: full sublane usage + lane-dense output
              # (re-derive downward for very large L*E or v7x's smaller VMEM)


def _dnn_kernel(num_layers,
                prem_ref, hypo_ref,          # (TILE_N, L, E) bf16
                w1p_ref, w1h_ref, b1_ref,    # (E, H) bf16, (E, H) bf16, (1, H) f32
                wm_ref, bm_ref,              # (H, H) bf16, (1, H) f32
                wp_ref,                      # (1, H) f32
                bp_ref,                      # (1,)  f32  [SMEM]
                out_ref):                    # (1, 1, TILE_N) f32
    # 2. max-pool over the sequence length: (TILE_N, L, E) -> (TILE_N, E)
    prem = jnp.max(prem_ref[...], axis=1)
    hypo = jnp.max(hypo_ref[...], axis=1)

    # 3. first FF layer on concat([prem, hypo], axis=1):
    #    concat @ W1 == prem @ W1[:E] + hypo @ W1[E:]
    #    bf16 MXU inputs, f32 accumulation; bias/ReLU in f32.
    h = (jnp.dot(prem, w1p_ref[...], preferred_element_type=jnp.float32)
         + jnp.dot(hypo, w1h_ref[...], preferred_element_type=jnp.float32)
         + b1_ref[...])
    h = jnp.maximum(h, 0.0)

    # 4. middle layers — PyTorch appends the SAME Linear(H, H) object
    #    (num_layers - 1) times, so the weights are shared.
    #    Bias broadcast is hoisted out of the unrolled loop (no CSE of
    #    broadcast_in_dim in JAX).
    if num_layers > 1:
        bm = jnp.broadcast_to(bm_ref[...], h.shape)
        for _ in range(num_layers - 1):
            h = jnp.dot(h.astype(jnp.bfloat16), wm_ref[...],
                        preferred_element_type=jnp.float32) + bm
            h = jnp.maximum(h, 0.0)

    # 6. prediction layer + sigmoid. wp is (1, H): use a VPU multiply +
    #    lane reduce instead of a 1-wide MXU matmul, then store the TILE_N
    #    logits lane-dense.
    logit = jnp.sum(h * wp_ref[...], axis=-1) + bp_ref[0]      # (TILE_N,)
    out_ref[...] = jax.nn.sigmoid(logit).reshape(out_ref.shape).astype(out_ref.dtype)


def prepare_params(params):
    """One-time weight prep: transpose to (in, out), cast matmul operands to
    bf16, keep biases / the prediction row in f32. Hoisted out of the forward
    path so it doesn't re-run every call."""
    E = params["embedding"].shape[1]
    w1 = params["w1"].T                                   # (2E, H)
    return {
        "emb": params["embedding"].astype(jnp.bfloat16),  # (V, E)
        "w1p": w1[:E].astype(jnp.bfloat16),               # (E, H)
        "w1h": w1[E:].astype(jnp.bfloat16),               # (E, H)
        "b1": params["b1"].reshape(1, -1).astype(jnp.float32),
        "wm": params["wm"].T.astype(jnp.bfloat16),        # (H, H)
        "bm": params["bm"].reshape(1, -1).astype(jnp.float32),
        "wp": params["wp"].reshape(1, -1).astype(jnp.float32),  # (1, H)
        "bp": params["bp"].reshape(-1).astype(jnp.float32),     # (1,)
    }


@functools.partial(jax.jit, static_argnames=("num_layers",))
def dnn_forward(premise, hypothesis, prepared, num_layers=2):
    """premise: (N, L_p) int32, hypothesis: (N, L_h) int32 -> (N,) float32."""
    N, L_p = premise.shape
    _, L_h = hypothesis.shape
    E = prepared["emb"].shape[1]
    H = prepared["wm"].shape[0]

    n_tiles = pl.cdiv(N, TILE_N)
    n_pad = n_tiles * TILE_N
    if n_pad != N:
        premise = jnp.pad(premise, ((0, n_pad - N), (0, 0)))
        hypothesis = jnp.pad(hypothesis, ((0, n_pad - N), (0, 0)))

    # 1. embedding gather (XLA); bf16 halves the HBM bytes of the tensors the
    #    kernel streams.
    prem_emb = jnp.take(prepared["emb"], premise, axis=0)     # (n_pad, L_p, E)
    hypo_emb = jnp.take(prepared["emb"], hypothesis, axis=0)  # (n_pad, L_h, E)

    const2 = lambda i: (0, 0)
    kernel = functools.partial(_dnn_kernel, num_layers)

    out = pl.pallas_call(
        kernel,
        out_shape=jax.ShapeDtypeStruct((n_tiles, 1, TILE_N), jnp.float32),
        grid=(n_tiles,),
        in_specs=[
            pl.BlockSpec((TILE_N, L_p, E), lambda i: (i, 0, 0)),   # premise tile
            pl.BlockSpec((TILE_N, L_h, E), lambda i: (i, 0, 0)),   # hypothesis tile
            pl.BlockSpec((E, H), const2),                          # w1 (premise half)
            pl.BlockSpec((E, H), const2),                          # w1 (hypothesis half)
            pl.BlockSpec((1, H), const2),                          # b1
            pl.BlockSpec((H, H), const2),                          # shared middle weight
            pl.BlockSpec((1, H), const2),                          # shared middle bias
            pl.BlockSpec((1, H), const2),                          # prediction row
            pl.BlockSpec(memory_space=pltpu.MemorySpace.SMEM),     # prediction bias (scalar)
        ],
        out_specs=pl.BlockSpec((1, 1, TILE_N), lambda i: (i, 0, 0)),
        compiler_params=pltpu.CompilerParams(
            dimension_semantics=("parallel",),   # megacore sharding on v7x
            vmem_limit_bytes=32 * 1024 * 1024,
        ),
    )(prem_emb, hypo_emb,
      prepared["w1p"], prepared["w1h"], prepared["b1"],
      prepared["wm"], prepared["bm"], prepared["wp"], prepared["bp"])

    # lane-dense (n_tiles, 1, TILE_N) -> (N,)   (torch.squeeze equivalent)
    return out.reshape(-1)[:N]


def init_params(key, vocab_size, embed_dim, hidden_size):
    """Deterministic synthetic parameters (shapes mirror the nn.Module)."""
    keys = jax.random.split(key, 8)
    E, H = embed_dim, hidden_size
    s = 0.1
    return {
        "embedding": jax.random.normal(keys[0], (vocab_size, E), jnp.float32),
        "w1": s * jax.random.normal(keys[1], (H, 2 * E), jnp.float32),  # Linear(2E, H)
        "b1": s * jax.random.normal(keys[2], (H,), jnp.float32),
        "wm": s * jax.random.normal(keys[3], (H, H), jnp.float32),      # shared Linear(H, H)
        "bm": s * jax.random.normal(keys[4], (H,), jnp.float32),
        "wp": s * jax.random.normal(keys[5], (1, H), jnp.float32),      # layer_pred Linear(H, 1)
        "bp": s * jax.random.normal(keys[6], (1,), jnp.float32),
    }


if __name__ == "__main__":
    N, L_P, L_H = 2, 8, 10
    VOCAB, E, HIDDEN = 50, 16, 32
    NUM_LAYERS = 2

    key = jax.random.PRNGKey(0)
    k_params, k_prem, k_hypo = jax.random.split(key, 3)

    params = init_params(k_params, VOCAB, E, HIDDEN)
    prepared = prepare_params(params)
    premise = jax.random.randint(k_prem, (N, L_P), 0, VOCAB, dtype=jnp.int32)
    hypothesis = jax.random.randint(k_hypo, (N, L_H), 0, VOCAB, dtype=jnp.int32)

    scores = dnn_forward(premise, hypothesis, prepared, num_layers=NUM_LAYERS)
    scores = jax.block_until_ready(scores)
    assert scores.shape == (N,), scores.shape

    # Pure-JAX f32 reference. The kernel uses bf16 matmul inputs with f32
    # accumulation, so the tolerance is loosened accordingly.
    def ref(prem_idx, hypo_idx, p):
        pe = jnp.max(jnp.take(p["embedding"], prem_idx, axis=0), axis=1)
        he = jnp.max(jnp.take(p["embedding"], hypo_idx, axis=0), axis=1)
        h = jnp.concatenate([pe, he], axis=1)
        h = jnp.maximum(h @ p["w1"].T + p["b1"], 0.0)
        for _ in range(NUM_LAYERS - 1):
            h = jnp.maximum(h @ p["wm"].T + p["bm"], 0.0)
        return jax.nn.sigmoid(h @ p["wp"].T + p["bp"]).squeeze(-1)

    expected = ref(premise, hypothesis, params)
    assert jnp.allclose(scores, expected, atol=2e-2, rtol=2e-2), (scores, expected)

    print("KERNEL_OK")
</pallas_src>

<mosaic_0001>
module attributes {stable_mosaic.version = 11 : i64} {
  func.func @_dnn_kernel(%arg0: i32, %arg1: memref<128x8x16xbf16, #tpu.memory_space<vmem>>, %arg2: memref<128x10x16xbf16, #tpu.memory_space<vmem>>, %arg3: memref<16x32xbf16, #tpu.memory_space<vmem>>, %arg4: memref<16x32xbf16, #tpu.memory_space<vmem>>, %arg5: memref<1x32xf32, #tpu.memory_space<vmem>>, %arg6: memref<32x32xbf16, #tpu.memory_space<vmem>>, %arg7: memref<1x32xf32, #tpu.memory_space<vmem>>, %arg8: memref<1x32xf32, #tpu.memory_space<vmem>>, %arg9: memref<1xf32, #tpu.memory_space<smem>>, %arg10: memref<1x1x128xf32, #tpu.memory_space<vmem>>) attributes {dimension_semantics = [#tpu.dimension_semantics<parallel>], iteration_bounds = array<i64: 1>, scalar_prefetch = 0 : i64, scratch_operands = 0 : i64, tpu.core_type = #tpu.core_type<tc>, window_params = [{transform_indices = @transform_0, window_bounds = array<i64: 128, 8, 16>}, {transform_indices = @transform_1, window_bounds = array<i64: 128, 10, 16>}, {pipeline_mode = #tpu.pipeline_mode<synchronous>, transform_indices = @transform_2, window_bounds = array<i64: 16, 32>}, {pipeline_mode = #tpu.pipeline_mode<synchronous>, transform_indices = @transform_3, window_bounds = array<i64: 16, 32>}, {pipeline_mode = #tpu.pipeline_mode<synchronous>, transform_indices = @transform_4, window_bounds = array<i64: 1, 32>}, {pipeline_mode = #tpu.pipeline_mode<synchronous>, transform_indices = @transform_5, window_bounds = array<i64: 32, 32>}, {pipeline_mode = #tpu.pipeline_mode<synchronous>, transform_indices = @transform_6, window_bounds = array<i64: 1, 32>}, {pipeline_mode = #tpu.pipeline_mode<synchronous>, transform_indices = @transform_7, window_bounds = array<i64: 1, 32>}, {transform_indices = @transform_8, window_bounds = array<i64: 1>}, {transform_indices = @transform_9, window_bounds = array<i64: 1, 1, 128>}]} {
    %c0 = arith.constant 0 : index
    %c0_0 = arith.constant 0 : index
    %c0_1 = arith.constant 0 : index
    %0 = vector.load %arg1[%c0, %c0_0, %c0_1] : memref<128x8x16xbf16, #tpu.memory_space<vmem>>, vector<128x8x16xbf16>
    %cst = arith.constant dense<0xFF80> : vector<128x16xbf16>
    %1 = vector.multi_reduction <maximumf>, %0, %cst [1] : vector<128x8x16xbf16> to vector<128x16xbf16>
    %c0_2 = arith.constant 0 : index
    %c0_3 = arith.constant 0 : index
    %c0_4 = arith.constant 0 : index
    %2 = vector.load %arg2[%c0_2, %c0_3, %c0_4] : memref<128x10x16xbf16, #tpu.memory_space<vmem>>, vector<128x10x16xbf16>
    %cst_5 = arith.constant dense<0xFF80> : vector<128x16xbf16>
    %3 = vector.multi_reduction <maximumf>, %2, %cst_5 [1] : vector<128x10x16xbf16> to vector<128x16xbf16>
    %c0_6 = arith.constant 0 : index
    %c0_7 = arith.constant 0 : index
    %4 = vector.load %arg3[%c0_6, %c0_7] : memref<16x32xbf16, #tpu.memory_space<vmem>>, vector<16x32xbf16>
    %cst_8 = arith.constant dense<0.000000e+00> : vector<128x32xf32>
    %5 = tpu.matmul %1, %4, %cst_8 {dimension_numbers = #tpu.dot_dimension_numbers<[1], [0], [0], [1], [0, 0, 1, 1], [], []>} : vector<128x16xbf16>, vector<16x32xbf16>, vector<128x32xf32> -> vector<128x32xf32>
    %c0_9 = arith.constant 0 : index
    %c0_10 = arith.constant 0 : index
    %6 = vector.load %arg4[%c0_9, %c0_10] : memref<16x32xbf16, #tpu.memory_space<vmem>>, vector<16x32xbf16>
    %cst_11 = arith.constant dense<0.000000e+00> : vector<128x32xf32>
    %7 = tpu.matmul %3, %6, %cst_11 {dimension_numbers = #tpu.dot_dimension_numbers<[1], [0], [0], [1], [0, 0, 1, 1], [], []>} : vector<128x16xbf16>, vector<16x32xbf16>, vector<128x32xf32> -> vector<128x32xf32>
    %8 = arith.addf %5, %7 : vector<128x32xf32>
    %c0_12 = arith.constant 0 : index
    %c0_13 = arith.constant 0 : index
    %9 = vector.load %arg5[%c0_12, %c0_13] : memref<1x32xf32, #tpu.memory_space<vmem>>, vector<1x32xf32>
    %10 = vector.broadcast %9 : vector<1x32xf32> to vector<128x32xf32>
    %11 = arith.addf %8, %10 : vector<128x32xf32>
    %cst_14 = arith.constant 0.000000e+00 : f32
    %12 = vector.broadcast %cst_14 : f32 to vector<128x32xf32>
    %13 = arith.maximumf %11, %12 : vector<128x32xf32>
    %c0_15 = arith.constant 0 : index
    %c0_16 = arith.constant 0 : index
    %14 = vector.load %arg7[%c0_15, %c0_16] : memref<1x32xf32, #tpu.memory_space<vmem>>, vector<1x32xf32>
    %15 = vector.shape_cast %14 : vector<1x32xf32> to vector<1x32xf32>
    %16 = vector.broadcast %15 : vector<1x32xf32> to vector<128x32xf32>
    %17 = arith.truncf %13 : vector<128x32xf32> to vector<128x32xbf16>
    %c0_17 = arith.constant 0 : index
    %c0_18 = arith.constant 0 : index
    %18 = vector.load %arg6[%c0_17, %c0_18] : memref<32x32xbf16, #tpu.memory_space<vmem>>, vector<32x32xbf16>
    %cst_19 = arith.constant dense<0.000000e+00> : vector<128x32xf32>
    %19 = tpu.matmul %17, %18, %cst_19 {dimension_numbers = #tpu.dot_dimension_numbers<[1], [0], [0], [1], [0, 0, 1, 1], [], []>} : vector<128x32xbf16>, vector<32x32xbf16>, vector<128x32xf32> -> vector<128x32xf32>
    %20 = arith.addf %19, %16 : vector<128x32xf32>
    %cst_20 = arith.constant 0.000000e+00 : f32
    %21 = vector.broadcast %cst_20 : f32 to vector<128x32xf32>
    %22 = arith.maximumf %20, %21 : vector<128x32xf32>
    %c0_21 = arith.constant 0 : index
    %c0_22 = arith.constant 0 : index
    %23 = vector.load %arg8[%c0_21, %c0_22] : memref<1x32xf32, #tpu.memory_space<vmem>>, vector<1x32xf32>
    %24 = vector.broadcast %23 : vector<1x32xf32> to vector<128x32xf32>
    %25 = arith.mulf %22, %24 : vector<128x32xf32>
    %cst_23 = arith.constant dense<0.000000e+00> : vector<128xf32>
    %26 = vector.multi_reduction <add>, %25, %cst_23 [1] : vector<128x32xf32> to vector<128xf32>
    %c0_24 = arith.constant 0 : index
    %27 = memref.load %arg9[%c0_24] : memref<1xf32, #tpu.memory_space<smem>>
    %28 = vector.broadcast %27 : f32 to vector<128xf32>
    %29 = arith.addf %26, %28 : vector<128xf32>
    %30 = arith.negf %29 : vector<128xf32>
    %31 = math.exp %30 : vector<128xf32>
    %cst_25 = arith.constant 1.000000e+00 : f32
    %32 = vector.broadcast %cst_25 : f32 to vector<128xf32>
    %33 = arith.addf %32, %31 : vector<128xf32>
    %34 = arith.divf %32, %33 : vector<128xf32>
    %35 = vector.shape_cast %34 : vector<128xf32> to vector<1x1x128xf32>
    %c0_26 = arith.constant 0 : index
    %c0_27 = arith.constant 0 : index
    %c0_28 = arith.constant 0 : index
    %36 = vector.load %arg10[%c0_26, %c0_27, %c0_28] : memref<1x1x128xf32, #tpu.memory_space<vmem>>, vector<1x1x128xf32>
    tpu.vector_store %arg10[%c0_26, %c0_27, %c0_28], %35 {strides = array<i32>} : memref<1x1x128xf32, #tpu.memory_space<vmem>>, vector<1x1x128xf32>,
    return
  }
  func.func @transform_0(%arg0: i32) -> (i32, i32, i32) {
    %c0_i32 = arith.constant 0 : i32
    %c0_i32_0 = arith.constant 0 : i32
    %c0_i32_1 = arith.constant 0 : i32
    return %arg0, %c0_i32, %c0_i32_0 : i32, i32, i32
  }
  func.func @transform_1(%arg0: i32) -> (i32, i32, i32) {
    %c0_i32 = arith.constant 0 : i32
    %c0_i32_0 = arith.constant 0 : i32
    %c0_i32_1 = arith.constant 0 : i32
    return %arg0, %c0_i32, %c0_i32_0 : i32, i32, i32
  }
  func.func @transform_2(%arg0: i32) -> (i32, i32) {
    %c0_i32 = arith.constant 0 : i32
    %c0_i32_0 = arith.constant 0 : i32
    %c0_i32_1 = arith.constant 0 : i32
    return %c0_i32, %c0_i32_0 : i32, i32
  }
  func.func @transform_3(%arg0: i32) -> (i32, i32) {
    %c0_i32 = arith.constant 0 : i32
    %c0_i32_0 = arith.constant 0 : i32
    %c0_i32_1 = arith.constant 0 : i32
    return %c0_i32, %c0_i32_0 : i32, i32
  }
  func.func @transform_4(%arg0: i32) -> (i32, i32) {
    %c0_i32 = arith.constant 0 : i32
    %c0_i32_0 = arith.constant 0 : i32
    %c0_i32_1 = arith.constant 0 : i32
    return %c0_i32, %c0_i32_0 : i32, i32
  }
  func.func @transform_5(%arg0: i32) -> (i32, i32) {
    %c0_i32 = arith.constant 0 : i32
    %c0_i32_0 = arith.constant 0 : i32
    %c0_i32_1 = arith.constant 0 : i32
    return %c0_i32, %c0_i32_0 : i32, i32
  }
  func.func @transform_6(%arg0: i32) -> (i32, i32) {
    %c0_i32 = arith.constant 0 : i32
    %c0_i32_0 = arith.constant 0 : i32
    %c0_i32_1 = arith.constant 0 : i32
    return %c0_i32, %c0_i32_0 : i32, i32
  }
  func.func @transform_7(%arg0: i32) -> (i32, i32) {
    %c0_i32 = arith.constant 0 : i32
    %c0_i32_0 = arith.constant 0 : i32
    %c0_i32_1 = arith.constant 0 : i32
    return %c0_i32, %c0_i32_0 : i32, i32
  }
  func.func @transform_8(%arg0: i32) -> i32 {
    %c0_i32 = arith.constant 0 : i32
    %c0_i32_0 = arith.constant 0 : i32
    return %c0_i32 : i32
  }
  func.func @transform_9(%arg0: i32) -> (i32, i32, i32) {
    %c0_i32 = arith.constant 0 : i32
    %c0_i32_0 = arith.constant 0 : i32
    %c0_i32_1 = arith.constant 0 : i32
    return %arg0, %c0_i32, %c0_i32_0 : i32, i32, i32
  }
}

</mosaic_0001>

<llo_original>
// kernel: dnn_forward.1
$region0: #{dnn_forward.1}
  #allocation0 [shape = 'u32[]', space=smem, size = 0x4, offset = 0x4, fixed_abs, tag = 'smem constant byte address 0x4 - core index']
  #allocation1 [shape = 'u32[144,128]{1,0:T(1,128)}', space=vmem, size = 0x12000, scoped, tag = 'internal scratch']
  #allocation2 [shape = 'f32[1]{0:T(128)S(6)}', space=smem, size = 0x200, scoped, tag = 'scoped memory for dnn_forward.1']
  %s0 = inlined_call_operand.vmem [shape: bf16[128,8,16], index: 0, kind: input, shape index: {}]
  %s1 = inlined_call_operand.vmem [shape: bf16[128,10,16], index: 1, kind: input, shape index: {}]
  %s2 = inlined_call_operand.vmem [shape: bf16[16,32], index: 2, kind: input, shape index: {}]
  %s3 = inlined_call_operand.vmem [shape: bf16[16,32], index: 3, kind: input, shape index: {}]
  %s4 = inlined_call_operand.vmem [shape: f32[1,32], index: 4, kind: input, shape index: {}]
  %s5 = inlined_call_operand.vmem [shape: bf16[32,32], index: 5, kind: input, shape index: {}]
  %s6 = inlined_call_operand.vmem [shape: f32[1,32], index: 6, kind: input, shape index: {}]
  %s7 = inlined_call_operand.vmem [shape: f32[1,32], index: 7, kind: input, shape index: {}]
  %s8 = inlined_call_operand.<no memory space> [shape: f32[1], index: 8, kind: input, shape index: {}]
  %s9 = inlined_call_operand.vmem [shape: f32[1,1,128], index: 9, kind: output, shape index: {}]
  %s10 = sld [smem:[#allocation0]]
  $region46: #{dnn_forward.1} parent=0
    _
  %s12 = ssub.s32 1, %s10
  %s13 = scalar_select 0, %s12, %s10
  %14 = sst [smem:[#allocation2]] %s8
  // Predicated region
  $region2: #{dnn_forward.1} parent=0 // pred_check
    _
  $region3: #{dnn_forward.1} parent=0 // pred_check_branch
    %16 = sbr.rel (0) target = $region5
  $region4: #{dnn_forward.1} parent=0 // pred_region
    _
  $region5: #{dnn_forward.1} parent=0 // pred_fallthru
    _
  // Predicated region
  $region6: #{dnn_forward.1} parent=0 // pred_check
    _
  $region7: #{dnn_forward.1} parent=0 // pred_check_branch
    %18 = sbr.rel (0) target = $region9
  $region8: #{dnn_forward.1} parent=0 // pred_region
    _
  $region9: #{dnn_forward.1} parent=0 // pred_fallthru
    _
  // Predicated region
  $region10: #{dnn_forward.1} parent=0 // pred_check
    _
  $region11: #{dnn_forward.1} parent=0 // pred_check_branch
    %20 = sbr.rel (0) target = $region13
  $region12: #{dnn_forward.1} parent=0 // pred_region
    _
  $region13: #{dnn_forward.1} parent=0 // pred_fallthru
    _
  // Predicated region
  $region14: #{dnn_forward.1} parent=0 // pred_check
    _
  $region15: #{dnn_forward.1} parent=0 // pred_check_branch
    %22 = sbr.rel (0) target = $region17
  $region16: #{dnn_forward.1} parent=0 // pred_region
    _
  $region17: #{dnn_forward.1} parent=0 // pred_fallthru
    _
  // Predicated region
  $region18: #{dnn_forward.1} parent=0 // pred_check
    _
  $region19: #{dnn_forward.1} parent=0 // pred_check_branch
    %24 = sbr.rel (0) target = $region21
  $region20: #{dnn_forward.1} parent=0 // pred_region
    _
  $region21: #{dnn_forward.1} parent=0 // pred_fallthru
    _
  // Predicated region
  $region22: #{dnn_forward.1} parent=0 // pred_check
    _
  $region23: #{dnn_forward.1} parent=0 // pred_check_branch
    %26 = sbr.rel (0) target = $region25
  $region24: #{dnn_forward.1} parent=0 // pred_region
    _
  $region25: #{dnn_forward.1} parent=0 // pred_fallthru
    _
  // Predicated region
  $region26: #{dnn_forward.1} parent=0 // pred_check
    _
  $region27: #{dnn_forward.1} parent=0 // pred_check_branch
    %28 = sbr.rel (0) target = $region29
  $region28: #{dnn_forward.1} parent=0 // pred_region
    _
  $region29: #{dnn_forward.1} parent=0 // pred_fallthru
    _
  // Predicated region
  $region30: #{dnn_forward.1} parent=0 // pred_check
    _
  $region31: #{dnn_forward.1} parent=0 // pred_check_branch
    %30 = sbr.rel (0) target = $region33
  $region32: #{dnn_forward.1} parent=0 // pred_region
    _
  $region33: #{dnn_forward.1} parent=0 // pred_fallthru
    _
  // Predicated region
  $region34: #{dnn_forward.1} parent=0 // pred_check
    _
  $region35: #{dnn_forward.1} parent=0 // pred_check_branch
    %32 = sbr.rel (0) target = $region37
  $region36: #{dnn_forward.1} parent=0 // pred_region
    _
  $region37: #{dnn_forward.1} parent=0 // pred_fallthru
    _
  %v35 = vld [vmem:[%s0] sm:$0xf]
  %v36 = vld [vmem:[%s0 + $0x4] sm:$0xf]
  %v37 = vld [vmem:[%s0 + $0x8] sm:$0xf]
  %v38 = vld [vmem:[%s0 + $0xc] sm:$0xf]
  %v39 = vld [vmem:[%s0 + $0x10] sm:$0xf]
  %v40 = vld [vmem:[%s0 + $0x14] sm:$0xf]
  %v41 = vld [vmem:[%s0 + $0x18] sm:$0xf]
  %v42 = vld [vmem:[%s0 + $0x1c] sm:$0xf]
  %v43 = vld [vmem:[%s0 + $0x20] sm:$0xf]
  %v44 = vld [vmem:[%s0 + $0x24] sm:$0xf]
  %v45 = vld [vmem:[%s0 + $0x28] sm:$0xf]
  %v46 = vld [vmem:[%s0 + $0x2c] sm:$0xf]
  %v47 = vld [vmem:[%s0 + $0x30] sm:$0xf]
  %v48 = vld [vmem:[%s0 + $0x34] sm:$0xf]
  %v49 = vld [vmem:[%s0 + $0x38] sm:$0xf]
  %v50 = vld [vmem:[%s0 + $0x3c] sm:$0xf]
  %v51 = vld [vmem:[%s0 + $0x40] sm:$0xf]
  %v52 = vld [vmem:[%s0 + $0x44] sm:$0xf]
  %v53 = vld [vmem:[%s0 + $0x48] sm:$0xf]
  %v54 = vld [vmem:[%s0 + $0x4c] sm:$0xf]
  %v55 = vld [vmem:[%s0 + $0x50] sm:$0xf]
  %v56 = vld [vmem:[%s0 + $0x54] sm:$0xf]
  %v57 = vld [vmem:[%s0 + $0x58] sm:$0xf]
  %v58 = vld [vmem:[%s0 + $0x5c] sm:$0xf]
  %v59 = vld [vmem:[%s0 + $0x60] sm:$0xf]
  %v60 = vld [vmem:[%s0 + $0x64] sm:$0xf]
  %v61 = vld [vmem:[%s0 + $0x68] sm:$0xf]
  %v62 = vld [vmem:[%s0 + $0x6c] sm:$0xf]
  %v63 = vld [vmem:[%s0 + $0x70] sm:$0xf]
  %v64 = vld [vmem:[%s0 + $0x74] sm:$0xf]
  %v65 = vld [vmem:[%s0 + $0x78] sm:$0xf]
  %v66 = vld [vmem:[%s0 + $0x7c] sm:$0xf]
  %v67 = vld [vmem:[%s0 + $0x80] sm:$0xf]
  %v68 = vld [vmem:[%s0 + $0x84] sm:$0xf]
  %v69 = vld [vmem:[%s0 + $0x88] sm:$0xf]
  %v70 = vld [vmem:[%s0 + $0x8c] sm:$0xf]
  %v71 = vld [vmem:[%s0 + $0x90] sm:$0xf]
  %v72 = vld [vmem:[%s0 + $0x94] sm:$0xf]
  %v73 = vld [vmem:[%s0 + $0x98] sm:$0xf]
  %v74 = vld [vmem:[%s0 + $0x9c] sm:$0xf]
  %v75 = vld [vmem:[%s0 + $0xa0] sm:$0xf]
  %v76 = vld [vmem:[%s0 + $0xa4] sm:$0xf]
  %v77 = vld [vmem:[%s0 + $0xa8] sm:$0xf]
  %v78 = vld [vmem:[%s0 + $0xac] sm:$0xf]
  %v79 = vld [vmem:[%s0 + $0xb0] sm:$0xf]
  %v80 = vld [vmem:[%s0 + $0xb4] sm:$0xf]
  %v81 = vld [vmem:[%s0 + $0xb8] sm:$0xf]
  %v82 = vld [vmem:[%s0 + $0xbc] sm:$0xf]
  %v83 = vld [vmem:[%s0 + $0xc0] sm:$0xf]
  %v84 = vld [vmem:[%s0 + $0xc4] sm:$0xf]
  %v85 = vld [vmem:[%s0 + $0xc8] sm:$0xf]
  %v86 = vld [vmem:[%s0 + $0xcc] sm:$0xf]
  %v87 = vld [vmem:[%s0 + $0xd0] sm:$0xf]
  %v88 = vld [vmem:[%s0 + $0xd4] sm:$0xf]
  %v89 = vld [vmem:[%s0 + $0xd8] sm:$0xf]
  %v90 = vld [vmem:[%s0 + $0xdc] sm:$0xf]
  %v91 = vld [vmem:[%s0 + $0xe0] sm:$0xf]
  %v92 = vld [vmem:[%s0 + $0xe4] sm:$0xf]
  %v93 = vld [vmem:[%s0 + $0xe8] sm:$0xf]
  %v94 = vld [vmem:[%s0 + $0xec] sm:$0xf]
  %v95 = vld [vmem:[%s0 + $0xf0] sm:$0xf]
  %v96 = vld [vmem:[%s0 + $0xf4] sm:$0xf]
  %v97 = vld [vmem:[%s0 + $0xf8] sm:$0xf]
  %v98 = vld [vmem:[%s0 + $0xfc] sm:$0xf]
  %v99 = vld [vmem:[%s0 + $0x100] sm:$0xf]
  %v100 = vld [vmem:[%s0 + $0x104] sm:$0xf]
  %v101 = vld [vmem:[%s0 + $0x108] sm:$0xf]
  %v102 = vld [vmem:[%s0 + $0x10c] sm:$0xf]
  %v103 = vld [vmem:[%s0 + $0x110] sm:$0xf]
  %v104 = vld [vmem:[%s0 + $0x114] sm:$0xf]
  %v105 = vld [vmem:[%s0 + $0x118] sm:$0xf]
  %v106 = vld [vmem:[%s0 + $0x11c] sm:$0xf]
  %v107 = vld [vmem:[%s0 + $0x120] sm:$0xf]
  %v108 = vld [vmem:[%s0 + $0x124] sm:$0xf]
  %v109 = vld [vmem:[%s0 + $0x128] sm:$0xf]
  %v110 = vld [vmem:[%s0 + $0x12c] sm:$0xf]
  %v111 = vld [vmem:[%s0 + $0x130] sm:$0xf]
  %v112 = vld [vmem:[%s0 + $0x134] sm:$0xf]
  %v113 = vld [vmem:[%s0 + $0x138] sm:$0xf]
  %v114 = vld [vmem:[%s0 + $0x13c] sm:$0xf]
  %v115 = vld [vmem:[%s0 + $0x140] sm:$0xf]
  %v116 = vld [vmem:[%s0 + $0x144] sm:$0xf]
  %v117 = vld [vmem:[%s0 + $0x148] sm:$0xf]
  %v118 = vld [vmem:[%s0 + $0x14c] sm:$0xf]
  %v119 = vld [vmem:[%s0 + $0x150] sm:$0xf]
  %v120 = vld [vmem:[%s0 + $0x154] sm:$0xf]
  %v121 = vld [vmem:[%s0 + $0x158] sm:$0xf]
  %v122 = vld [vmem:[%s0 + $0x15c] sm:$0xf]
  %v123 = vld [vmem:[%s0 + $0x160] sm:$0xf]
  %v124 = vld [vmem:[%s0 + $0x164] sm:$0xf]
  %v125 = vld [vmem:[%s0 + $0x168] sm:$0xf]
  %v126 = vld [vmem:[%s0 + $0x16c] sm:$0xf]
  %v127 = vld [vmem:[%s0 + $0x170] sm:$0xf]
  %v128 = vld [vmem:[%s0 + $0x174] sm:$0xf]
  %v129 = vld [vmem:[%s0 + $0x178] sm:$0xf]
  %v130 = vld [vmem:[%s0 + $0x17c] sm:$0xf]
  %v131 = vld [vmem:[%s0 + $0x180] sm:$0xf]
  %v132 = vld [vmem:[%s0 + $0x184] sm:$0xf]
  %v133 = vld [vmem:[%s0 + $0x188] sm:$0xf]
  %v134 = vld [vmem:[%s0 + $0x18c] sm:$0xf]
  %v135 = vld [vmem:[%s0 + $0x190] sm:$0xf]
  %v136 = vld [vmem:[%s0 + $0x194] sm:$0xf]
  %v137 = vld [vmem:[%s0 + $0x198] sm:$0xf]
  %v138 = vld [vmem:[%s0 + $0x19c] sm:$0xf]
  %v139 = vld [vmem:[%s0 + $0x1a0] sm:$0xf]
  %v140 = vld [vmem:[%s0 + $0x1a4] sm:$0xf]
  %v141 = vld [vmem:[%s0 + $0x1a8] sm:$0xf]
  %v142 = vld [vmem:[%s0 + $0x1ac] sm:$0xf]
  %v143 = vld [vmem:[%s0 + $0x1b0] sm:$0xf]
  %v144 = vld [vmem:[%s0 + $0x1b4] sm:$0xf]
  %v145 = vld [vmem:[%s0 + $0x1b8] sm:$0xf]
  %v146 = vld [vmem:[%s0 + $0x1bc] sm:$0xf]
  %v147 = vld [vmem:[%s0 + $0x1c0] sm:$0xf]
  %v148 = vld [vmem:[%s0 + $0x1c4] sm:$0xf]
  %v149 = vld [vmem:[%s0 + $0x1c8] sm:$0xf]
  %v150 = vld [vmem:[%s0 + $0x1cc] sm:$0xf]
  %v151 = vld [vmem:[%s0 + $0x1d0] sm:$0xf]
  %v152 = vld [vmem:[%s0 + $0x1d4] sm:$0xf]
  %v153 = vld [vmem:[%s0 + $0x1d8] sm:$0xf]
  %v154 = vld [vmem:[%s0 + $0x1dc] sm:$0xf]
  %v155 = vld [vmem:[%s0 + $0x1e0] sm:$0xf]
  %v156 = vld [vmem:[%s0 + $0x1e4] sm:$0xf]
  %v157 = vld [vmem:[%s0 + $0x1e8] sm:$0xf]
  %v158 = vld [vmem:[%s0 + $0x1ec] sm:$0xf]
  %v159 = vld [vmem:[%s0 + $0x1f0] sm:$0xf]
  %v160 = vld [vmem:[%s0 + $0x1f4] sm:$0xf]
  %v161 = vld [vmem:[%s0 + $0x1f8] sm:$0xf]
  %v162 = vld [vmem:[%s0 + $0x1fc] sm:$0xf]
  %vm163 = vcmask 125952
  %v166 = vsel %vm163, %v35, 4286644096
  %v168 = vunpack.i.l.bf16 %v166
  %v169 = vunpack.i.h.bf16 %v166
  %v170 = vmax.f32 %v168, %v169
  %v171 = vrot.slane %v170, 4
  %v172 = vmax.f32 %v170, %v171
  %v173 = vrot.slane %v172, 2
  %v174 = vmax.f32 %v172, %v173
  %v175 = vrot.slane %v174, 1
  %v176 = vmax.f32 %v174, %v175
  %v177 = vpack.i.bf16 %v176, %v176
  %v179 = vsel %vm163, %v36, 4286644096
  %v181 = vunpack.i.l.bf16 %v179
  %v182 = vunpack.i.h.bf16 %v179
  %v183 = vmax.f32 %v181, %v182
  %v184 = vrot.slane %v183, 4
  %v185 = vmax.f32 %v183, %v184
  %v186 = vrot.slane %v185, 2
  %v187 = vmax.f32 %v185, %v186
  %v188 = vrot.slane %v187, 1
  %v189 = vmax.f32 %v187, %v188
  %v190 = vpack.i.bf16 %v189, %v189
  %v192 = vsel %vm163, %v37, 4286644096
  %v194 = vunpack.i.l.bf16 %v192
  %v195 = vunpack.i.h.bf16 %v192
  %v196 = vmax.f32 %v194, %v195
  %v197 = vrot.slane %v196, 4
  %v198 = vmax.f32 %v196, %v197
  %v199 = vrot.slane %v198, 2
  %v200 = vmax.f32 %v198, %v199
  %v201 = vrot.slane %v200, 1
  %v202 = vmax.f32 %v200, %v201
  %v203 = vpack.i.bf16 %v202, %v202
  %v205 = vsel %vm163, %v38, 4286644096
  %v207 = vunpack.i.l.bf16 %v205
  %v208 = vunpack.i.h.bf16 %v205
  %v209 = vmax.f32 %v207, %v208
  %v210 = vrot.slane %v209, 4
  %v211 = vmax.f32 %v209, %v210
  %v212 = vrot.slane %v211, 2
  %v213 = vmax.f32 %v211, %v212
  %v214 = vrot.slane %v213, 1
  %v215 = vmax.f32 %v213, %v214
  %v216 = vpack.i.bf16 %v215, %v215
  %v218 = vsel %vm163, %v39, 4286644096
  %v220 = vunpack.i.l.bf16 %v218
  %v221 = vunpack.i.h.bf16 %v218
  %v222 = vmax.f32 %v220, %v221
  %v223 = vrot.slane %v222, 4
  %v224 = vmax.f32 %v222, %v223
  %v225 = vrot.slane %v224, 2
  %v226 = vmax.f32 %v224, %v225
  %v227 = vrot.slane %v226, 1
  %v228 = vmax.f32 %v226, %v227
  %v229 = vpack.i.bf16 %v228, %v228
  %v231 = vsel %vm163, %v40, 4286644096
  %v233 = vunpack.i.l.bf16 %v231
  %v234 = vunpack.i.h.bf16 %v231
  %v235 = vmax.f32 %v233, %v234
  %v236 = vrot.slane %v235, 4
  %v237 = vmax.f32 %v235, %v236
  %v238 = vrot.slane %v237, 2
  %v239 = vmax.f32 %v237, %v238
  %v240 = vrot.slane %v239, 1
  %v241 = vmax.f32 %v239, %v240
  %v242 = vpack.i.bf16 %v241, %v241
  %v244 = vsel %vm163, %v41, 4286644096
  %v246 = vunpack.i.l.bf16 %v244
  %v247 = vunpack.i.h.bf16 %v244
  %v248 = vmax.f32 %v246, %v247
  %v249 = vrot.slane %v248, 4
  %v250 = vmax.f32 %v248, %v249
  %v251 = vrot.slane %v250, 2
  %v252 = vmax.f32 %v250, %v251
  %v253 = vrot.slane %v252, 1
  %v254 = vmax.f32 %v252, %v253
  %v255 = vpack.i.bf16 %v254, %v254
  %v257 = vsel %vm163, %v42, 4286644096
  %v259 = vunpack.i.l.bf16 %v257
  %v260 = vunpack.i.h.bf16 %v257
  %v261 = vmax.f32 %v259, %v260
  %v262 = vrot.slane %v261, 4
  %v263 = vmax.f32 %v261, %v262
  %v264 = vrot.slane %v263, 2
  %v265 = vmax.f32 %v263, %v264
  %v266 = vrot.slane %v265, 1
  %v267 = vmax.f32 %v265, %v266
  %v268 = vpack.i.bf16 %v267, %v267
  %v270 = vsel %vm163, %v43, 4286644096
  %v272 = vunpack.i.l.bf16 %v270
  %v273 = vunpack.i.h.bf16 %v270
  %v274 = vmax.f32 %v272, %v273
  %v275 = vrot.slane %v274, 4
  %v276 = vmax.f32 %v274, %v275
  %v277 = vrot.slane %v276, 2
  %v278 = vmax.f32 %v276, %v277
  %v279 = vrot.slane %v278, 1
  %v280 = vmax.f32 %v278, %v279
  %v281 = vpack.i.bf16 %v280, %v280
  %v283 = vsel %vm163, %v44, 4286644096
  %v285 = vunpack.i.l.bf16 %v283
  %v286 = vunpack.i.h.bf16 %v283
  %v287 = vmax.f32 %v285, %v286
  %v288 = vrot.slane %v287, 4
  %v289 = vmax.f32 %v287, %v288
  %v290 = vrot.slane %v289, 2
  %v291 = vmax.f32 %v289, %v290
  %v292 = vrot.slane %v291, 1
  %v293 = vmax.f32 %v291, %v292
  %v294 = vpack.i.bf16 %v293, %v293
  %v296 = vsel %vm163, %v45, 4286644096
  %v298 = vunpack.i.l.bf16 %v296
  %v299 = vunpack.i.h.bf16 %v296
  %v300 = vmax.f32 %v298, %v299
  %v301 = vrot.slane %v300, 4
  %v302 = vmax.f32 %v300, %v301
  %v303 = vrot.slane %v302, 2
  %v304 = vmax.f32 %v302, %v303
  %v305 = vrot.slane %v304, 1
  %v306 = vmax.f32 %v304, %v305
  %v307 = vpack.i.bf16 %v306, %v306
  %v309 = vsel %vm163, %v46, 4286644096
  %v311 = vunpack.i.l.bf16 %v309
  %v312 = vunpack.i.h.bf16 %v309
  %v313 = vmax.f32 %v311, %v312
  %v314 = vrot.slane %v313, 4
  %v315 = vmax.f32 %v313, %v314
  %v316 = vrot.slane %v315, 2
  %v317 = vmax.f32 %v315, %v316
  %v318 = vrot.slane %v317, 1
  %v319 = vmax.f32 %v317, %v318
  %v320 = vpack.i.bf16 %v319, %v319
  %v322 = vsel %vm163, %v47, 4286644096
  %v324 = vunpack.i.l.bf16 %v322
  %v325 = vunpack.i.h.bf16 %v322
  %v326 = vmax.f32 %v324, %v325
  %v327 = vrot.slane %v326, 4
  %v328 = vmax.f32 %v326, %v327
  %v329 = vrot.slane %v328, 2
  %v330 = vmax.f32 %v328, %v329
  %v331 = vrot.slane %v330, 1
  %v332 = vmax.f32 %v330, %v331
  %v333 = vpack.i.bf16 %v332, %v332
  %v335 = vsel %vm163, %v48, 4286644096
  %v337 = vunpack.i.l.bf16 %v335
  %v338 = vunpack.i.h.bf16 %v335
  %v339 = vmax.f32 %v337, %v338
  %v340 = vrot.slane %v339, 4
  %v341 = vmax.f32 %v339, %v340
  %v342 = vrot.slane %v341, 2
  %v343 = vmax.f32 %v341, %v342
  %v344 = vrot.slane %v343, 1
  %v345 = vmax.f32 %v343, %v344
  %v346 = vpack.i.bf16 %v345, %v345
  %v348 = vsel %vm163, %v49, 4286644096
  %v350 = vunpack.i.l.bf16 %v348
  %v351 = vunpack.i.h.bf16 %v348
  %v352 = vmax.f32 %v350, %v351
  %v353 = vrot.slane %v352, 4
  %v354 = vmax.f32 %v352, %v353
  %v355 = vrot.slane %v354, 2
  %v356 = vmax.f32 %v354, %v355
  %v357 = vrot.slane %v356, 1
  %v358 = vmax.f32 %v356, %v357
  %v359 = vpack.i.bf16 %v358, %v358
  %v361 = vsel %vm163, %v50, 4286644096
  %v363 = vunpack.i.l.bf16 %v361
  %v364 = vunpack.i.h.bf16 %v361
  %v365 = vmax.f32 %v363, %v364
  %v366 = vrot.slane %v365, 4
  %v367 = vmax.f32 %v365, %v366
  %v368 = vrot.slane %v367, 2
  %v369 = vmax.f32 %v367, %v368
  %v370 = vrot.slane %v369, 1
  %v371 = vmax.f32 %v369, %v370
  %v372 = vpack.i.bf16 %v371, %v371
  %v374 = vsel %vm163, %v51, 4286644096
  %v376 = vunpack.i.l.bf16 %v374
  %v377 = vunpack.i.h.bf16 %v374
  %v378 = vmax.f32 %v376, %v377
  %v379 = vrot.slane %v378, 4
  %v380 = vmax.f32 %v378, %v379
  %v381 = vrot.slane %v380, 2
  %v382 = vmax.f32 %v380, %v381
  %v383 = vrot.slane %v382, 1
  %v384 = vmax.f32 %v382, %v383
  %v385 = vpack.i.bf16 %v384, %v384
  %v387 = vsel %vm163, %v52, 4286644096
  %v389 = vunpack.i.l.bf16 %v387
  %v390 = vunpack.i.h.bf16 %v387
  %v391 = vmax.f32 %v389, %v390
  %v392 = vrot.slane %v391, 4
  %v393 = vmax.f32 %v391, %v392
  %v394 = vrot.slane %v393, 2
  %v395 = vmax.f32 %v393, %v394
  %v396 = vrot.slane %v395, 1
  %v397 = vmax.f32 %v395, %v396
  %v398 = vpack.i.bf16 %v397, %v397
  %v400 = vsel %vm163, %v53, 4286644096
  %v402 = vunpack.i.l.bf16 %v400
  %v403 = vunpack.i.h.bf16 %v400
  %v404 = vmax.f32 %v402, %v403
  %v405 = vrot.slane %v404, 4
  %v406 = vmax.f32 %v404, %v405
  %v407 = vrot.slane %v406, 2
  %v408 = vmax.f32 %v406, %v407
  %v409 = vrot.slane %v408, 1
  %v410 = vmax.f32 %v408, %v409
  %v411 = vpack.i.bf16 %v410, %v410
  %v413 = vsel %vm163, %v54, 4286644096
  %v415 = vunpack.i.l.bf16 %v413
  %v416 = vunpack.i.h.bf16 %v413
  %v417 = vmax.f32 %v415, %v416
  %v418 = vrot.slane %v417, 4
  %v419 = vmax.f32 %v417, %v418
  %v420 = vrot.slane %v419, 2
  %v421 = vmax.f32 %v419, %v420
  %v422 = vrot.slane %v421, 1
  %v423 = vmax.f32 %v421, %v422
  %v424 = vpack.i.bf16 %v423, %v423
  %v426 = vsel %vm163, %v55, 4286644096
  %v428 = vunpack.i.l.bf16 %v426
  %v429 = vunpack.i.h.bf16 %v426
  %v430 = vmax.f32 %v428, %v429
  %v431 = vrot.slane %v430, 4
  %v432 = vmax.f32 %v430, %v431
  %v433 = vrot.slane %v432, 2
  %v434 = vmax.f32 %v432, %v433
  %v435 = vrot.slane %v434, 1
  %v436 = vmax.f32 %v434, %v435
  %v437 = vpack.i.bf16 %v436, %v436
  %v439 = vsel %vm163, %v56, 4286644096
  %v441 = vunpack.i.l.bf16 %v439
  %v442 = vunpack.i.h.bf16 %v439
  %v443 = vmax.f32 %v441, %v442
  %v444 = vrot.slane %v443, 4
  %v445 = vmax.f32 %v443, %v444
  %v446 = vrot.slane %v445, 2
  %v447 = vmax.f32 %v445, %v446
  %v448 = vrot.slane %v447, 1
  %v449 = vmax.f32 %v447, %v448
  %v450 = vpack.i.bf16 %v449, %v449
  %v452 = vsel %vm163, %v57, 4286644096
  %v454 = vunpack.i.l.bf16 %v452
  %v455 = vunpack.i.h.bf16 %v452
  %v456 = vmax.f32 %v454, %v455
  %v457 = vrot.slane %v456, 4
  %v458 = vmax.f32 %v456, %v457
  %v459 = vrot.slane %v458, 2
  %v460 = vmax.f32 %v458, %v459
  %v461 = vrot.slane %v460, 1
  %v462 = vmax.f32 %v460, %v461
  %v463 = vpack.i.bf16 %v462, %v462
  %v465 = vsel %vm163, %v58, 4286644096
  %v467 = vunpack.i.l.bf16 %v465
  %v468 = vunpack.i.h.bf16 %v465
  %v469 = vmax.f32 %v467, %v468
  %v470 = vrot.slane %v469, 4
  %v471 = vmax.f32 %v469, %v470
  %v472 = vrot.slane %v471, 2
  %v473 = vmax.f32 %v471, %v472
  %v474 = vrot.slane %v473, 1
  %v475 = vmax.f32 %v473, %v474
  %v476 = vpack.i.bf16 %v475, %v475
  %v478 = vsel %vm163, %v59, 4286644096
  %v480 = vunpack.i.l.bf16 %v478
  %v481 = vunpack.i.h.bf16 %v478
  %v482 = vmax.f32 %v480, %v481
  %v483 = vrot.slane %v482, 4
  %v484 = vmax.f32 %v482, %v483
  %v485 = vrot.slane %v484, 2
  %v486 = vmax.f32 %v484, %v485
  %v487 = vrot.slane %v486, 1
  %v488 = vmax.f32 %v486, %v487
  %v489 = vpack.i.bf16 %v488, %v488
  %v491 = vsel %vm163, %v60, 4286644096
  %v493 = vunpack.i.l.bf16 %v491
  %v494 = vunpack.i.h.bf16 %v491
  %v495 = vmax.f32 %v493, %v494
  %v496 = vrot.slane %v495, 4
  %v497 = vmax.f32 %v495, %v496
  %v498 = vrot.slane %v497, 2
  %v499 = vmax.f32 %v497, %v498
  %v500 = vrot.slane %v499, 1
  %v501 = vmax.f32 %v499, %v500
  %v502 = vpack.i.bf16 %v501, %v501
  %v504 = vsel %vm163, %v61, 4286644096
  %v506 = vunpack.i.l.bf16 %v504
  %v507 = vunpack.i.h.bf16 %v504
  %v508 = vmax.f32 %v506, %v507
  %v509 = vrot.slane %v508, 4
  %v510 = vmax.f32 %v508, %v509
  %v511 = vrot.slane %v510, 2
  %v512 = vmax.f32 %v510, %v511
  %v513 = vrot.slane %v512, 1
  %v514 = vmax.f32 %v512, %v513
  %v515 = vpack.i.bf16 %v514, %v514
  %v517 = vsel %vm163, %v62, 4286644096
  %v519 = vunpack.i.l.bf16 %v517
  %v520 = vunpack.i.h.bf16 %v517
  %v521 = vmax.f32 %v519, %v520
  %v522 = vrot.slane %v521, 4
  %v523 = vmax.f32 %v521, %v522
  %v524 = vrot.slane %v523, 2
  %v525 = vmax.f32 %v523, %v524
  %v526 = vrot.slane %v525, 1
  %v527 = vmax.f32 %v525, %v526
  %v528 = vpack.i.bf16 %v527, %v527
  %v530 = vsel %vm163, %v63, 4286644096
  %v532 = vunpack.i.l.bf16 %v530
  %v533 = vunpack.i.h.bf16 %v530
  %v534 = vmax.f32 %v532, %v533
  %v535 = vrot.slane %v534, 4
  %v536 = vmax.f32 %v534, %v535
  %v537 = vrot.slane %v536, 2
  %v538 = vmax.f32 %v536, %v537
  %v539 = vrot.slane %v538, 1
  %v540 = vmax.f32 %v538, %v539
  %v541 = vpack.i.bf16 %v540, %v540
  %v543 = vsel %vm163, %v64, 4286644096
  %v545 = vunpack.i.l.bf16 %v543
  %v546 = vunpack.i.h.bf16 %v543
  %v547 = vmax.f32 %v545, %v546
  %v548 = vrot.slane %v547, 4
  %v549 = vmax.f32 %v547, %v548
  %v550 = vrot.slane %v549, 2
  %v551 = vmax.f32 %v549, %v550
  %v552 = vrot.slane %v551, 1
  %v553 = vmax.f32 %v551, %v552
  %v554 = vpack.i.bf16 %v553, %v553
  %v556 = vsel %vm163, %v65, 4286644096
  %v558 = vunpack.i.l.bf16 %v556
  %v559 = vunpack.i.h.bf16 %v556
  %v560 = vmax.f32 %v558, %v559
  %v561 = vrot.slane %v560, 4
  %v562 = vmax.f32 %v560, %v561
  %v563 = vrot.slane %v562, 2
  %v564 = vmax.f32 %v562, %v563
  %v565 = vrot.slane %v564, 1
  %v566 = vmax.f32 %v564, %v565
  %v567 = vpack.i.bf16 %v566, %v566
  %v569 = vsel %vm163, %v66, 4286644096
  %v571 = vunpack.i.l.bf16 %v569
  %v572 = vunpack.i.h.bf16 %v569
  %v573 = vmax.f32 %v571, %v572
  %v574 = vrot.slane %v573, 4
  %v575 = vmax.f32 %v573, %v574
  %v576 = vrot.slane %v575, 2
  %v577 = vmax.f32 %v575, %v576
  %v578 = vrot.slane %v577, 1
  %v579 = vmax.f32 %v577, %v578
  %v580 = vpack.i.bf16 %v579, %v579
  %v582 = vsel %vm163, %v67, 4286644096
  %v584 = vunpack.i.l.bf16 %v582
  %v585 = vunpack.i.h.bf16 %v582
  %v586 = vmax.f32 %v584, %v585
  %v587 = vrot.slane %v586, 4
  %v588 = vmax.f32 %v586, %v587
  %v589 = vrot.slane %v588, 2
  %v590 = vmax.f32 %v588, %v589
  %v591 = vrot.slane %v590, 1
  %v592 = vmax.f32 %v590, %v591
  %v593 = vpack.i.bf16 %v592, %v592
  %v595 = vsel %vm163, %v68, 4286644096
  %v597 = vunpack.i.l.bf16 %v595
  %v598 = vunpack.i.h.bf16 %v595
  %v599 = vmax.f32 %v597, %v598
  %v600 = vrot.slane %v599, 4
  %v601 = vmax.f32 %v599, %v600
  %v602 = vrot.slane %v601, 2
  %v603 = vmax.f32 %v601, %v602
  %v604 = vrot.slane %v603, 1
  %v605 = vmax.f32 %v603, %v604
  %v606 = vpack.i.bf16 %v605, %v605
  %v608 = vsel %vm163, %v69, 4286644096
  %v610 = vunpack.i.l.bf16 %v608
  %v611 = vunpack.i.h.bf16 %v608
  %v612 = vmax.f32 %v610, %v611
  %v613 = vrot.slane %v612, 4
  %v614 = vmax.f32 %v612, %v613
  %v615 = vrot.slane %v614, 2
  %v616 = vmax.f32 %v614, %v615
  %v617 = vrot.slane %v616, 1
  %v618 = vmax.f32 %v616, %v617
  %v619 = vpack.i.bf16 %v618, %v618
  %v621 = vsel %vm163, %v70, 4286644096
  %v623 = vunpack.i.l.bf16 %v621
  %v624 = vunpack.i.h.bf16 %v621
  %v625 = vmax.f32 %v623, %v624
  %v626 = vrot.slane %v625, 4
  %v627 = vmax.f32 %v625, %v626
  %v628 = vrot.slane %v627, 2
  %v629 = vmax.f32 %v627, %v628
  %v630 = vrot.slane %v629, 1
  %v631 = vmax.f32 %v629, %v630
  %v632 = vpack.i.bf16 %v631, %v631
  %v634 = vsel %vm163, %v71, 4286644096
  %v636 = vunpack.i.l.bf16 %v634
  %v637 = vunpack.i.h.bf16 %v634
  %v638 = vmax.f32 %v636, %v637
  %v639 = vrot.slane %v638, 4
  %v640 = vmax.f32 %v638, %v639
  %v641 = vrot.slane %v640, 2
  %v642 = vmax.f32 %v640, %v641
  %v643 = vrot.slane %v642, 1
  %v644 = vmax.f32 %v642, %v643
  %v645 = vpack.i.bf16 %v644, %v644
  %v647 = vsel %vm163, %v72, 4286644096
  %v649 = vunpack.i.l.bf16 %v647
  %v650 = vunpack.i.h.bf16 %v647
  %v651 = vmax.f32 %v649, %v650
  %v652 = vrot.slane %v651, 4
  %v653 = vmax.f32 %v651, %v652
  %v654 = vrot.slane %v653, 2
  %v655 = vmax.f32 %v653, %v654
  %v656 = vrot.slane %v655, 1
  %v657 = vmax.f32 %v655, %v656
  %v658 = vpack.i.bf16 %v657, %v657
  %v660 = vsel %vm163, %v73, 4286644096
  %v662 = vunpack.i.l.bf16 %v660
  %v663 = vunpack.i.h.bf16 %v660
  %v664 = vmax.f32 %v662, %v663
  %v665 = vrot.slane %v664, 4
  %v666 = vmax.f32 %v664, %v665
  %v667 = vrot.slane %v666, 2
  %v668 = vmax.f32 %v666, %v667
  %v669 = vrot.slane %v668, 1
  %v670 = vmax.f32 %v668, %v669
  %v671 = vpack.i.bf16 %v670, %v670
  %v673 = vsel %vm163, %v74, 4286644096
  %v675 = vunpack.i.l.bf16 %v673
  %v676 = vunpack.i.h.bf16 %v673
  %v677 = vmax.f32 %v675, %v676
  %v678 = vrot.slane %v677, 4
  %v679 = vmax.f32 %v677, %v678
  %v680 = vrot.slane %v679, 2
  %v681 = vmax.f32 %v679, %v680
  %v682 = vrot.slane %v681, 1
  %v683 = vmax.f32 %v681, %v682
  %v684 = vpack.i.bf16 %v683, %v683
  %v686 = vsel %vm163, %v75, 4286644096
  %v688 = vunpack.i.l.bf16 %v686
  %v689 = vunpack.i.h.bf16 %v686
  %v690 = vmax.f32 %v688, %v689
  %v691 = vrot.slane %v690, 4
  %v692 = vmax.f32 %v690, %v691
  %v693 = vrot.slane %v692, 2
  %v694 = vmax.f32 %v692, %v693
  %v695 = vrot.slane %v694, 1
  %v696 = vmax.f32 %v694, %v695
  %v697 = vpack.i.bf16 %v696, %v696
  %v699 = vsel %vm163, %v76, 4286644096
  %v701 = vunpack.i.l.bf16 %v699
  %v702 = vunpack.i.h.bf16 %v699
  %v703 = vmax.f32 %v701, %v702
  %v704 = vrot.slane %v703, 4
  %v705 = vmax.f32 %v703, %v704
  %v706 = vrot.slane %v705, 2
  %v707 = vmax.f32 %v705, %v706
  %v708 = vrot.slane %v707, 1
  %v709 = vmax.f32 %v707, %v708
  %v710 = vpack.i.bf16 %v709, %v709
  %v712 = vsel %vm163, %v77, 4286644096
  %v714 = vunpack.i.l.bf16 %v712
  %v715 = vunpack.i.h.bf16 %v712
  %v716 = vmax.f32 %v714, %v715
  %v717 = vrot.slane %v716, 4
  %v718 = vmax.f32 %v716, %v717
  %v719 = vrot.slane %v718, 2
  %v720 = vmax.f32 %v718, %v719
  %v721 = vrot.slane %v720, 1
  %v722 = vmax.f32 %v720, %v721
  %v723 = vpack.i.bf16 %v722, %v722
  %v725 = vsel %vm163, %v78, 4286644096
  %v727 = vunpack.i.l.bf16 %v725
  %v728 = vunpack.i.h.bf16 %v725
  %v729 = vmax.f32 %v727, %v728
  %v730 = vrot.slane %v729, 4
  %v731 = vmax.f32 %v729, %v730
  %v732 = vrot.slane %v731, 2
  %v733 = vmax.f32 %v731, %v732
  %v734 = vrot.slane %v733, 1
  %v735 = vmax.f32 %v733, %v734
  %v736 = vpack.i.bf16 %v735, %v735
  %v738 = vsel %vm163, %v79, 4286644096
  %v740 = vunpack.i.l.bf16 %v738
  %v741 = vunpack.i.h.bf16 %v738
  %v742 = vmax.f32 %v740, %v741
  %v743 = vrot.slane %v742, 4
  %v744 = vmax.f32 %v742, %v743
  %v745 = vrot.slane %v744, 2
  %v746 = vmax.f32 %v744, %v745
  %v747 = vrot.slane %v746, 1
  %v748 = vmax.f32 %v746, %v747
  %v749 = vpack.i.bf16 %v748, %v748
  %v751 = vsel %vm163, %v80, 4286644096
  %v753 = vunpack.i.l.bf16 %v751
  %v754 = vunpack.i.h.bf16 %v751
  %v755 = vmax.f32 %v753, %v754
  %v756 = vrot.slane %v755, 4
  %v757 = vmax.f32 %v755, %v756
  %v758 = vrot.slane %v757, 2
  %v759 = vmax.f32 %v757, %v758
  %v760 = vrot.slane %v759, 1
  %v761 = vmax.f32 %v759, %v760
  %v762 = vpack.i.bf16 %v761, %v761
  %v764 = vsel %vm163, %v81, 4286644096
  %v766 = vunpack.i.l.bf16 %v764
  %v767 = vunpack.i.h.bf16 %v764
  %v768 = vmax.f32 %v766, %v767
  %v769 = vrot.slane %v768, 4
  %v770 = vmax.f32 %v768, %v769
  %v771 = vrot.slane %v770, 2
  %v772 = vmax.f32 %v770, %v771
  %v773 = vrot.slane %v772, 1
  %v774 = vmax.f32 %v772, %v773
  %v775 = vpack.i.bf16 %v774, %v774
  %v777 = vsel %vm163, %v82, 4286644096
  %v779 = vunpack.i.l.bf16 %v777
  %v780 = vunpack.i.h.bf16 %v777
  %v781 = vmax.f32 %v779, %v780
  %v782 = vrot.slane %v781, 4
  %v783 = vmax.f32 %v781, %v782
  %v784 = vrot.slane %v783, 2
  %v785 = vmax.f32 %v783, %v784
  %v786 = vrot.slane %v785, 1
  %v787 = vmax.f32 %v785, %v786
  %v788 = vpack.i.bf16 %v787, %v787
  %v790 = vsel %vm163, %v83, 4286644096
  %v792 = vunpack.i.l.bf16 %v790
  %v793 = vunpack.i.h.bf16 %v790
  %v794 = vmax.f32 %v792, %v793
  %v795 = vrot.slane %v794, 4
  %v796 = vmax.f32 %v794, %v795
  %v797 = vrot.slane %v796, 2
  %v798 = vmax.f32 %v796, %v797
  %v799 = vrot.slane %v798, 1
  %v800 = vmax.f32 %v798, %v799
  %v801 = vpack.i.bf16 %v800, %v800
  %v803 = vsel %vm163, %v84, 4286644096
  %v805 = vunpack.i.l.bf16 %v803
  %v806 = vunpack.i.h.bf16 %v803
  %v807 = vmax.f32 %v805, %v806
  %v808 = vrot.slane %v807, 4
  %v809 = vmax.f32 %v807, %v808
  %v810 = vrot.slane %v809, 2
  %v811 = vmax.f32 %v809, %v810
  %v812 = vrot.slane %v811, 1
  %v813 = vmax.f32 %v811, %v812
  %v814 = vpack.i.bf16 %v813, %v813
  %v816 = vsel %vm163, %v85, 4286644096
  %v818 = vunpack.i.l.bf16 %v816
  %v819 = vunpack.i.h.bf16 %v816
  %v820 = vmax.f32 %v818, %v819
  %v821 = vrot.slane %v820, 4
  %v822 = vmax.f32 %v820, %v821
  %v823 = vrot.slane %v822, 2
  %v824 = vmax.f32 %v822, %v823
  %v825 = vrot.slane %v824, 1
  %v826 = vmax.f32 %v824, %v825
  %v827 = vpack.i.bf16 %v826, %v826
  %v829 = vsel %vm163, %v86, 4286644096
  %v831 = vunpack.i.l.bf16 %v829
  %v832 = vunpack.i.h.bf16 %v829
  %v833 = vmax.f32 %v831, %v832
  %v834 = vrot.slane %v833, 4
  %v835 = vmax.f32 %v833, %v834
  %v836 = vrot.slane %v835, 2
  %v837 = vmax.f32 %v835, %v836
  %v838 = vrot.slane %v837, 1
  %v839 = vmax.f32 %v837, %v838
  %v840 = vpack.i.bf16 %v839, %v839
  %v842 = vsel %vm163, %v87, 4286644096
  %v844 = vunpack.i.l.bf16 %v842
  %v845 = vunpack.i.h.bf16 %v842
  %v846 = vmax.f32 %v844, %v845
  %v847 = vrot.slane %v846, 4
  %v848 = vmax.f32 %v846, %v847
  %v849 = vrot.slane %v848, 2
  %v850 = vmax.f32 %v848, %v849
  %v851 = vrot.slane %v850, 1
  %v852 = vmax.f32 %v850, %v851
  %v853 = vpack.i.bf16 %v852, %v852
  %v855 = vsel %vm163, %v88, 4286644096
  %v857 = vunpack.i.l.bf16 %v855
  %v858 = vunpack.i.h.bf16 %v855
  %v859 = vmax.f32 %v857, %v858
  %v860 = vrot.slane %v859, 4
  %v861 = vmax.f32 %v859, %v860
  %v862 = vrot.slane %v861, 2
  %v863 = vmax.f32 %v861, %v862
  %v864 = vrot.slane %v863, 1
  %v865 = vmax.f32 %v863, %v864
  %v866 = vpack.i.bf16 %v865, %v865
  %v868 = vsel %vm163, %v89, 4286644096
  %v870 = vunpack.i.l.bf16 %v868
  %v871 = vunpack.i.h.bf16 %v868
  %v872 = vmax.f32 %v870, %v871
  %v873 = vrot.slane %v872, 4
  %v874 = vmax.f32 %v872, %v873
  %v875 = vrot.slane %v874, 2
  %v876 = vmax.f32 %v874, %v875
  %v877 = vrot.slane %v876, 1
  %v878 = vmax.f32 %v876, %v877
  %v879 = vpack.i.bf16 %v878, %v878
  %v881 = vsel %vm163, %v90, 4286644096
  %v883 = vunpack.i.l.bf16 %v881
  %v884 = vunpack.i.h.bf16 %v881
  %v885 = vmax.f32 %v883, %v884
  %v886 = vrot.slane %v885, 4
  %v887 = vmax.f32 %v885, %v886
  %v888 = vrot.slane %v887, 2
  %v889 = vmax.f32 %v887, %v888
  %v890 = vrot.slane %v889, 1
  %v891 = vmax.f32 %v889, %v890
  %v892 = vpack.i.bf16 %v891, %v891
  %v894 = vsel %vm163, %v91, 4286644096
  %v896 = vunpack.i.l.bf16 %v894
  %v897 = vunpack.i.h.bf16 %v894
  %v898 = vmax.f32 %v896, %v897
  %v899 = vrot.slane %v898, 4
  %v900 = vmax.f32 %v898, %v899
  %v901 = vrot.slane %v900, 2
  %v902 = vmax.f32 %v900, %v901
  %v903 = vrot.slane %v902, 1
  %v904 = vmax.f32 %v902, %v903
  %v905 = vpack.i.bf16 %v904, %v904
  %v907 = vsel %vm163, %v92, 4286644096
  %v909 = vunpack.i.l.bf16 %v907
  %v910 = vunpack.i.h.bf16 %v907
  %v911 = vmax.f32 %v909, %v910
  %v912 = vrot.slane %v911, 4
  %v913 = vmax.f32 %v911, %v912
  %v914 = vrot.slane %v913, 2
  %v915 = vmax.f32 %v913, %v914
  %v916 = vrot.slane %v915, 1
  %v917 = vmax.f32 %v915, %v916
  %v918 = vpack.i.bf16 %v917, %v917
  %v920 = vsel %vm163, %v93, 4286644096
  %v922 = vunpack.i.l.bf16 %v920
  %v923 = vunpack.i.h.bf16 %v920
  %v924 = vmax.f32 %v922, %v923
  %v925 = vrot.slane %v924, 4
  %v926 = vmax.f32 %v924, %v925
  %v927 = vrot.slane %v926, 2
  %v928 = vmax.f32 %v926, %v927
  %v929 = vrot.slane %v928, 1
  %v930 = vmax.f32 %v928, %v929
  %v931 = vpack.i.bf16 %v930, %v930
  %v933 = vsel %vm163, %v94, 4286644096
  %v935 = vunpack.i.l.bf16 %v933
  %v936 = vunpack.i.h.bf16 %v933
  %v937 = vmax.f32 %v935, %v936
  %v938 = vrot.slane %v937, 4
  %v939 = vmax.f32 %v937, %v938
  %v940 = vrot.slane %v939, 2
  %v941 = vmax.f32 %v939, %v940
  %v942 = vrot.slane %v941, 1
  %v943 = vmax.f32 %v941, %v942
  %v944 = vpack.i.bf16 %v943, %v943
  %v946 = vsel %vm163, %v95, 4286644096
  %v948 = vunpack.i.l.bf16 %v946
  %v949 = vunpack.i.h.bf16 %v946
  %v950 = vmax.f32 %v948, %v949
  %v951 = vrot.slane %v950, 4
  %v952 = vmax.f32 %v950, %v951
  %v953 = vrot.slane %v952, 2
  %v954 = vmax.f32 %v952, %v953
  %v955 = vrot.slane %v954, 1
  %v956 = vmax.f32 %v954, %v955
  %v957 = vpack.i.bf16 %v956, %v956
  %v959 = vsel %vm163, %v96, 4286644096
  %v961 = vunpack.i.l.bf16 %v959
  %v962 = vunpack.i.h.bf16 %v959
  %v963 = vmax.f32 %v961, %v962
  %v964 = vrot.slane %v963, 4
  %v965 = vmax.f32 %v963, %v964
  %v966 = vrot.slane %v965, 2
  %v967 = vmax.f32 %v965, %v966
  %v968 = vrot.slane %v967, 1
  %v969 = vmax.f32 %v967, %v968
  %v970 = vpack.i.bf16 %v969, %v969
  %v972 = vsel %vm163, %v97, 4286644096
  %v974 = vunpack.i.l.bf16 %v972
  %v975 = vunpack.i.h.bf16 %v972
  %v976 = vmax.f32 %v974, %v975
  %v977 = vrot.slane %v976, 4
  %v978 = vmax.f32 %v976, %v977
  %v979 = vrot.slane %v978, 2
  %v980 = vmax.f32 %v978, %v979
  %v981 = vrot.slane %v980, 1
  %v982 = vmax.f32 %v980, %v981
  %v983 = vpack.i.bf16 %v982, %v982
  %v985 = vsel %vm163, %v98, 4286644096
  %v987 = vunpack.i.l.bf16 %v985
  %v988 = vunpack.i.h.bf16 %v985
  %v989 = vmax.f32 %v987, %v988
  %v990 = vrot.slane %v989, 4
  %v991 = vmax.f32 %v989, %v990
  %v992 = vrot.slane %v991, 2
  %v993 = vmax.f32 %v991, %v992
  %v994 = vrot.slane %v993, 1
  %v995 = vmax.f32 %v993, %v994
  %v996 = vpack.i.bf16 %v995, %v995
  %v998 = vsel %vm163, %v99, 4286644096
  %v1000 = vunpack.i.l.bf16 %v998
  %v1001 = vunpack.i.h.bf16 %v998
  %v1002 = vmax.f32 %v1000, %v1001
  %v1003 = vrot.slane %v1002, 4
  %v1004 = vmax.f32 %v1002, %v1003
  %v1005 = vrot.slane %v1004, 2
  %v1006 = vmax.f32 %v1004, %v1005
  %v1007 = vrot.slane %v1006, 1
  %v1008 = vmax.f32 %v1006, %v1007
  %v1009 = vpack.i.bf16 %v1008, %v1008
  %v1011 = vsel %vm163, %v100, 4286644096
  %v1013 = vunpack.i.l.bf16 %v1011
  %v1014 = vunpack.i.h.bf16 %v1011
  %v1015 = vmax.f32 %v1013, %v1014
  %v1016 = vrot.slane %v1015, 4
  %v1017 = vmax.f32 %v1015, %v1016
  %v1018 = vrot.slane %v1017, 2
  %v1019 = vmax.f32 %v1017, %v1018
  %v1020 = vrot.slane %v1019, 1
  %v1021 = vmax.f32 %v1019, %v1020
  %v1022 = vpack.i.bf16 %v1021, %v1021
  %v1024 = vsel %vm163, %v101, 4286644096
  %v1026 = vunpack.i.l.bf16 %v1024
  %v1027 = vunpack.i.h.bf16 %v1024
  %v1028 = vmax.f32 %v1026, %v1027
  %v1029 = vrot.slane %v1028, 4
  %v1030 = vmax.f32 %v1028, %v1029
  %v1031 = vrot.slane %v1030, 2
  %v1032 = vmax.f32 %v1030, %v1031
  %v1033 = vrot.slane %v1032, 1
  %v1034 = vmax.f32 %v1032, %v1033
  %v1035 = vpack.i.bf16 %v1034, %v1034
  %v1037 = vsel %vm163, %v102, 4286644096
  %v1039 = vunpack.i.l.bf16 %v1037
  %v1040 = vunpack.i.h.bf16 %v1037
  %v1041 = vmax.f32 %v1039, %v1040
  %v1042 = vrot.slane %v1041, 4
  %v1043 = vmax.f32 %v1041, %v1042
  %v1044 = vrot.slane %v1043, 2
  %v1045 = vmax.f32 %v1043, %v1044
  %v1046 = vrot.slane %v1045, 1
  %v1047 = vmax.f32 %v1045, %v1046
  %v1048 = vpack.i.bf16 %v1047, %v1047
  %v1050 = vsel %vm163, %v103, 4286644096
  %v1052 = vunpack.i.l.bf16 %v1050
  %v1053 = vunpack.i.h.bf16 %v1050
  %v1054 = vmax.f32 %v1052, %v1053
  %v1055 = vrot.slane %v1054, 4
  %v1056 = vmax.f32 %v1054, %v1055
  %v1057 = vrot.slane %v1056, 2
  %v1058 = vmax.f32 %v1056, %v1057
  %v1059 = vrot.slane %v1058, 1
  %v1060 = vmax.f32 %v1058, %v1059
  %v1061 = vpack.i.bf16 %v1060, %v1060
  %v1063 = vsel %vm163, %v104, 4286644096
  %v1065 = vunpack.i.l.bf16 %v1063
  %v1066 = vunpack.i.h.bf16 %v1063
  %v1067 = vmax.f32 %v1065, %v1066
  %v1068 = vrot.slane %v1067, 4
  %v1069 = vmax.f32 %v1067, %v1068
  %v1070 = vrot.slane %v1069, 2
  %v1071 = vmax.f32 %v1069, %v1070
  %v1072 = vrot.slane %v1071, 1
  %v1073 = vmax.f32 %v1071, %v1072
  %v1074 = vpack.i.bf16 %v1073, %v1073
  %v1076 = vsel %vm163, %v105, 4286644096
  %v1078 = vunpack.i.l.bf16 %v1076
  %v1079 = vunpack.i.h.bf16 %v1076
  %v1080 = vmax.f32 %v1078, %v1079
  %v1081 = vrot.slane %v1080, 4
  %v1082 = vmax.f32 %v1080, %v1081
  %v1083 = vrot.slane %v1082, 2
  %v1084 = vmax.f32 %v1082, %v1083
  %v1085 = vrot.slane %v1084, 1
  %v1086 = vmax.f32 %v1084, %v1085
  %v1087 = vpack.i.bf16 %v1086, %v1086
  %v1089 = vsel %vm163, %v106, 4286644096
  %v1091 = vunpack.i.l.bf16 %v1089
  %v1092 = vunpack.i.h.bf16 %v1089
  %v1093 = vmax.f32 %v1091, %v1092
  %v1094 = vrot.slane %v1093, 4
  %v1095 = vmax.f32 %v1093, %v1094
  %v1096 = vrot.slane %v1095, 2
  %v1097 = vmax.f32 %v1095, %v1096
  %v1098 = vrot.slane %v1097, 1
  %v1099 = vmax.f32 %v1097, %v1098
  %v1100 = vpack.i.bf16 %v1099, %v1099
  %v1102 = vsel %vm163, %v107, 4286644096
  %v1104 = vunpack.i.l.bf16 %v1102
  %v1105 = vunpack.i.h.bf16 %v1102
  %v1106 = vmax.f32 %v1104, %v1105
  %v1107 = vrot.slane %v1106, 4
  %v1108 = vmax.f32 %v1106, %v1107
  %v1109 = vrot.slane %v1108, 2
  %v1110 = vmax.f32 %v1108, %v1109
  %v1111 = vrot.slane %v1110, 1
  %v1112 = vmax.f32 %v1110, %v1111
  %v1113 = vpack.i.bf16 %v1112, %v1112
  %v1115 = vsel %vm163, %v108, 4286644096
  %v1117 = vunpack.i.l.bf16 %v1115
  %v1118 = vunpack.i.h.bf16 %v1115
  %v1119 = vmax.f32 %v1117, %v1118
  %v1120 = vrot.slane %v1119, 4
  %v1121 = vmax.f32 %v1119, %v1120
  %v1122 = vrot.slane %v1121, 2
  %v1123 = vmax.f32 %v1121, %v1122
  %v1124 = vrot.slane %v1123, 1
  %v1125 = vmax.f32 %v1123, %v1124
  %v1126 = vpack.i.bf16 %v1125, %v1125
  %v1128 = vsel %vm163, %v109, 4286644096
  %v1130 = vunpack.i.l.bf16 %v1128
  %v1131 = vunpack.i.h.bf16 %v1128
  %v1132 = vmax.f32 %v1130, %v1131
  %v1133 = vrot.slane %v1132, 4
  %v1134 = vmax.f32 %v1132, %v1133
  %v1135 = vrot.slane %v1134, 2
  %v1136 = vmax.f32 %v1134, %v1135
  %v1137 = vrot.slane %v1136, 1
  %v1138 = vmax.f32 %v1136, %v1137
  %v1139 = vpack.i.bf16 %v1138, %v1138
  %v1141 = vsel %vm163, %v110, 4286644096
  %v1143 = vunpack.i.l.bf16 %v1141
  %v1144 = vunpack.i.h.bf16 %v1141
  %v1145 = vmax.f32 %v1143, %v1144
  %v1146 = vrot.slane %v1145, 4
  %v1147 = vmax.f32 %v1145, %v1146
  %v1148 = vrot.slane %v1147, 2
  %v1149 = vmax.f32 %v1147, %v1148
  %v1150 = vrot.slane %v1149, 1
  %v1151 = vmax.f32 %v1149, %v1150
  %v1152 = vpack.i.bf16 %v1151, %v1151
  %v1154 = vsel %vm163, %v111, 4286644096
  %v1156 = vunpack.i.l.bf16 %v1154
  %v1157 = vunpack.i.h.bf16 %v1154
  %v1158 = vmax.f32 %v1156, %v1157
  %v1159 = vrot.slane %v1158, 4
  %v1160 = vmax.f32 %v1158, %v1159
  %v1161 = vrot.slane %v1160, 2
  %v1162 = vmax.f32 %v1160, %v1161
  %v1163 = vrot.slane %v1162, 1
  %v1164 = vmax.f32 %v1162, %v1163
  %v1165 = vpack.i.bf16 %v1164, %v1164
  %v1167 = vsel %vm163, %v112, 4286644096
  %v1169 = vunpack.i.l.bf16 %v1167
  %v1170 = vunpack.i.h.bf16 %v1167
  %v1171 = vmax.f32 %v1169, %v1170
  %v1172 = vrot.slane %v1171, 4
  %v1173 = vmax.f32 %v1171, %v1172
  %v1174 = vrot.slane %v1173, 2
  %v1175 = vmax.f32 %v1173, %v1174
  %v1176 = vrot.slane %v1175, 1
  %v1177 = vmax.f32 %v1175, %v1176
  %v1178 = vpack.i.bf16 %v1177, %v1177
  %v1180 = vsel %vm163, %v113, 4286644096
  %v1182 = vunpack.i.l.bf16 %v1180
  %v1183 = vunpack.i.h.bf16 %v1180
  %v1184 = vmax.f32 %v1182, %v1183
  %v1185 = vrot.slane %v1184, 4
  %v1186 = vmax.f32 %v1184, %v1185
  %v1187 = vrot.slane %v1186, 2
  %v1188 = vmax.f32 %v1186, %v1187
  %v1189 = vrot.slane %v1188, 1
  %v1190 = vmax.f32 %v1188, %v1189
  %v1191 = vpack.i.bf16 %v1190, %v1190
  %v1193 = vsel %vm163, %v114, 4286644096
  %v1195 = vunpack.i.l.bf16 %v1193
  %v1196 = vunpack.i.h.bf16 %v1193
  %v1197 = vmax.f32 %v1195, %v1196
  %v1198 = vrot.slane %v1197, 4
  %v1199 = vmax.f32 %v1197, %v1198
  %v1200 = vrot.slane %v1199, 2
  %v1201 = vmax.f32 %v1199, %v1200
  %v1202 = vrot.slane %v1201, 1
  %v1203 = vmax.f32 %v1201, %v1202
  %v1204 = vpack.i.bf16 %v1203, %v1203
  %v1206 = vsel %vm163, %v115, 4286644096
  %v1208 = vunpack.i.l.bf16 %v1206
  %v1209 = vunpack.i.h.bf16 %v1206
  %v1210 = vmax.f32 %v1208, %v1209
  %v1211 = vrot.slane %v1210, 4
  %v1212 = vmax.f32 %v1210, %v1211
  %v1213 = vrot.slane %v1212, 2
  %v1214 = vmax.f32 %v1212, %v1213
  %v1215 = vrot.slane %v1214, 1
  %v1216 = vmax.f32 %v1214, %v1215
  %v1217 = vpack.i.bf16 %v1216, %v1216
  %v1219 = vsel %vm163, %v116, 4286644096
  %v1221 = vunpack.i.l.bf16 %v1219
  %v1222 = vunpack.i.h.bf16 %v1219
  %v1223 = vmax.f32 %v1221, %v1222
  %v1224 = vrot.slane %v1223, 4
  %v1225 = vmax.f32 %v1223, %v1224
  %v1226 = vrot.slane %v1225, 2
  %v1227 = vmax.f32 %v1225, %v1226
  %v1228 = vrot.slane %v1227, 1
  %v1229 = vmax.f32 %v1227, %v1228
  %v1230 = vpack.i.bf16 %v1229, %v1229
  %v1232 = vsel %vm163, %v117, 4286644096
  %v1234 = vunpack.i.l.bf16 %v1232
  %v1235 = vunpack.i.h.bf16 %v1232
  %v1236 = vmax.f32 %v1234, %v1235
  %v1237 = vrot.slane %v1236, 4
  %v1238 = vmax.f32 %v1236, %v1237
  %v1239 = vrot.slane %v1238, 2
  %v1240 = vmax.f32 %v1238, %v1239
  %v1241 = vrot.slane %v1240, 1
  %v1242 = vmax.f32 %v1240, %v1241
  %v1243 = vpack.i.bf16 %v1242, %v1242
  %v1245 = vsel %vm163, %v118, 4286644096
  %v1247 = vunpack.i.l.bf16 %v1245
  %v1248 = vunpack.i.h.bf16 %v1245
  %v1249 = vmax.f32 %v1247, %v1248
  %v1250 = vrot.slane %v1249, 4
  %v1251 = vmax.f32 %v1249, %v1250
  %v1252 = vrot.slane %v1251, 2
  %v1253 = vmax.f32 %v1251, %v1252
  %v1254 = vrot.slane %v1253, 1
  %v1255 = vmax.f32 %v1253, %v1254
  %v1256 = vpack.i.bf16 %v1255, %v1255
  %v1258 = vsel %vm163, %v119, 4286644096
  %v1260 = vunpack.i.l.bf16 %v1258
  %v1261 = vunpack.i.h.bf16 %v1258
  %v1262 = vmax.f32 %v1260, %v1261
  %v1263 = vrot.slane %v1262, 4
  %v1264 = vmax.f32 %v1262, %v1263
  %v1265 = vrot.slane %v1264, 2
  %v1266 = vmax.f32 %v1264, %v1265
  %v1267 = vrot.slane %v1266, 1
  %v1268 = vmax.f32 %v1266, %v1267
  %v1269 = vpack.i.bf16 %v1268, %v1268
  %v1271 = vsel %vm163, %v120, 4286644096
  %v1273 = vunpack.i.l.bf16 %v1271
  %v1274 = vunpack.i.h.bf16 %v1271
  %v1275 = vmax.f32 %v1273, %v1274
  %v1276 = vrot.slane %v1275, 4
  %v1277 = vmax.f32 %v1275, %v1276
  %v1278 = vrot.slane %v1277, 2
  %v1279 = vmax.f32 %v1277, %v1278
  %v1280 = vrot.slane %v1279, 1
  %v1281 = vmax.f32 %v1279, %v1280
  %v1282 = vpack.i.bf16 %v1281, %v1281
  %v1284 = vsel %vm163, %v121, 4286644096
  %v1286 = vunpack.i.l.bf16 %v1284
  %v1287 = vunpack.i.h.bf16 %v1284
  %v1288 = vmax.f32 %v1286, %v1287
  %v1289 = vrot.slane %v1288, 4
  %v1290 = vmax.f32 %v1288, %v1289
  %v1291 = vrot.slane %v1290, 2
  %v1292 = vmax.f32 %v1290, %v1291
  %v1293 = vrot.slane %v1292, 1
  %v1294 = vmax.f32 %v1292, %v1293
  %v1295 = vpack.i.bf16 %v1294, %v1294
  %v1297 = vsel %vm163, %v122, 4286644096
  %v1299 = vunpack.i.l.bf16 %v1297
  %v1300 = vunpack.i.h.bf16 %v1297
  %v1301 = vmax.f32 %v1299, %v1300
  %v1302 = vrot.slane %v1301, 4
  %v1303 = vmax.f32 %v1301, %v1302
  %v1304 = vrot.slane %v1303, 2
  %v1305 = vmax.f32 %v1303, %v1304
  %v1306 = vrot.slane %v1305, 1
  %v1307 = vmax.f32 %v1305, %v1306
  %v1308 = vpack.i.bf16 %v1307, %v1307
  %v1310 = vsel %vm163, %v123, 4286644096
  %v1312 = vunpack.i.l.bf16 %v1310
  %v1313 = vunpack.i.h.bf16 %v1310
  %v1314 = vmax.f32 %v1312, %v1313
  %v1315 = vrot.slane %v1314, 4
  %v1316 = vmax.f32 %v1314, %v1315
  %v1317 = vrot.slane %v1316, 2
  %v1318 = vmax.f32 %v1316, %v1317
  %v1319 = vrot.slane %v1318, 1
  %v1320 = vmax.f32 %v1318, %v1319
  %v1321 = vpack.i.bf16 %v1320, %v1320
  %v1323 = vsel %vm163, %v124, 4286644096
  %v1325 = vunpack.i.l.bf16 %v1323
  %v1326 = vunpack.i.h.bf16 %v1323
  %v1327 = vmax.f32 %v1325, %v1326
  %v1328 = vrot.slane %v1327, 4
  %v1329 = vmax.f32 %v1327, %v1328
  %v1330 = vrot.slane %v1329, 2
  %v1331 = vmax.f32 %v1329, %v1330
  %v1332 = vrot.slane %v1331, 1
  %v1333 = vmax.f32 %v1331, %v1332
  %v1334 = vpack.i.bf16 %v1333, %v1333
  %v1336 = vsel %vm163, %v125, 4286644096
  %v1338 = vunpack.i.l.bf16 %v1336
  %v1339 = vunpack.i.h.bf16 %v1336
  %v1340 = vmax.f32 %v1338, %v1339
  %v1341 = vrot.slane %v1340, 4
  %v1342 = vmax.f32 %v1340, %v1341
  %v1343 = vrot.slane %v1342, 2
  %v1344 = vmax.f32 %v1342, %v1343
  %v1345 = vrot.slane %v1344, 1
  %v1346 = vmax.f32 %v1344, %v1345
  %v1347 = vpack.i.bf16 %v1346, %v1346
  %v1349 = vsel %vm163, %v126, 4286644096
  %v1351 = vunpack.i.l.bf16 %v1349
  %v1352 = vunpack.i.h.bf16 %v1349
  %v1353 = vmax.f32 %v1351, %v1352
  %v1354 = vrot.slane %v1353, 4
  %v1355 = vmax.f32 %v1353, %v1354
  %v1356 = vrot.slane %v1355, 2
  %v1357 = vmax.f32 %v1355, %v1356
  %v1358 = vrot.slane %v1357, 1
  %v1359 = vmax.f32 %v1357, %v1358
  %v1360 = vpack.i.bf16 %v1359, %v1359
  %v1362 = vsel %vm163, %v127, 4286644096
  %v1364 = vunpack.i.l.bf16 %v1362
  %v1365 = vunpack.i.h.bf16 %v1362
  %v1366 = vmax.f32 %v1364, %v1365
  %v1367 = vrot.slane %v1366, 4
  %v1368 = vmax.f32 %v1366, %v1367
  %v1369 = vrot.slane %v1368, 2
  %v1370 = vmax.f32 %v1368, %v1369
  %v1371 = vrot.slane %v1370, 1
  %v1372 = vmax.f32 %v1370, %v1371
  %v1373 = vpack.i.bf16 %v1372, %v1372
  %v1375 = vsel %vm163, %v128, 4286644096
  %v1377 = vunpack.i.l.bf16 %v1375
  %v1378 = vunpack.i.h.bf16 %v1375
  %v1379 = vmax.f32 %v1377, %v1378
  %v1380 = vrot.slane %v1379, 4
  %v1381 = vmax.f32 %v1379, %v1380
  %v1382 = vrot.slane %v1381, 2
  %v1383 = vmax.f32 %v1381, %v1382
  %v1384 = vrot.slane %v1383, 1
  %v1385 = vmax.f32 %v1383, %v1384
  %v1386 = vpack.i.bf16 %v1385, %v1385
  %v1388 = vsel %vm163, %v129, 4286644096
  %v1390 = vunpack.i.l.bf16 %v1388
  %v1391 = vunpack.i.h.bf16 %v1388
  %v1392 = vmax.f32 %v1390, %v1391
  %v1393 = vrot.slane %v1392, 4
  %v1394 = vmax.f32 %v1392, %v1393
  %v1395 = vrot.slane %v1394, 2
  %v1396 = vmax.f32 %v1394, %v1395
  %v1397 = vrot.slane %v1396, 1
  %v1398 = vmax.f32 %v1396, %v1397
  %v1399 = vpack.i.bf16 %v1398, %v1398
  %v1401 = vsel %vm163, %v130, 4286644096
  %v1403 = vunpack.i.l.bf16 %v1401
  %v1404 = vunpack.i.h.bf16 %v1401
  %v1405 = vmax.f32 %v1403, %v1404
  %v1406 = vrot.slane %v1405, 4
  %v1407 = vmax.f32 %v1405, %v1406
  %v1408 = vrot.slane %v1407, 2
  %v1409 = vmax.f32 %v1407, %v1408
  %v1410 = vrot.slane %v1409, 1
  %v1411 = vmax.f32 %v1409, %v1410
  %v1412 = vpack.i.bf16 %v1411, %v1411
  %v1414 = vsel %vm163, %v131, 4286644096
  %v1416 = vunpack.i.l.bf16 %v1414
  %v1417 = vunpack.i.h.bf16 %v1414
  %v1418 = vmax.f32 %v1416, %v1417
  %v1419 = vrot.slane %v1418, 4
  %v1420 = vmax.f32 %v1418, %v1419
  %v1421 = vrot.slane %v1420, 2
  %v1422 = vmax.f32 %v1420, %v1421
  %v1423 = vrot.slane %v1422, 1
  %v1424 = vmax.f32 %v1422, %v1423
  %v1425 = vpack.i.bf16 %v1424, %v1424
  %v1427 = vsel %vm163, %v132, 4286644096
  %v1429 = vunpack.i.l.bf16 %v1427
  %v1430 = vunpack.i.h.bf16 %v1427
  %v1431 = vmax.f32 %v1429, %v1430
  %v1432 = vrot.slane %v1431, 4
  %v1433 = vmax.f32 %v1431, %v1432
  %v1434 = vrot.slane %v1433, 2
  %v1435 = vmax.f32 %v1433, %v1434
  %v1436 = vrot.slane %v1435, 1
  %v1437 = vmax.f32 %v1435, %v1436
  %v1438 = vpack.i.bf16 %v1437, %v1437
  %v1440 = vsel %vm163, %v133, 4286644096
  %v1442 = vunpack.i.l.bf16 %v1440
  %v1443 = vunpack.i.h.bf16 %v1440
  %v1444 = vmax.f32 %v1442, %v1443
  %v1445 = vrot.slane %v1444, 4
  %v1446 = vmax.f32 %v1444, %v1445
  %v1447 = vrot.slane %v1446, 2
  %v1448 = vmax.f32 %v1446, %v1447
  %v1449 = vrot.slane %v1448, 1
  %v1450 = vmax.f32 %v1448, %v1449
  %v1451 = vpack.i.bf16 %v1450, %v1450
  %v1453 = vsel %vm163, %v134, 4286644096
  %v1455 = vunpack.i.l.bf16 %v1453
  %v1456 = vunpack.i.h.bf16 %v1453
  %v1457 = vmax.f32 %v1455, %v1456
  %v1458 = vrot.slane %v1457, 4
  %v1459 = vmax.f32 %v1457, %v1458
  %v1460 = vrot.slane %v1459, 2
  %v1461 = vmax.f32 %v1459, %v1460
  %v1462 = vrot.slane %v1461, 1
  %v1463 = vmax.f32 %v1461, %v1462
  %v1464 = vpack.i.bf16 %v1463, %v1463
  %v1466 = vsel %vm163, %v135, 4286644096
  %v1468 = vunpack.i.l.bf16 %v1466
  %v1469 = vunpack.i.h.bf16 %v1466
  %v1470 = vmax.f32 %v1468, %v1469
  %v1471 = vrot.slane %v1470, 4
  %v1472 = vmax.f32 %v1470, %v1471
  %v1473 = vrot.slane %v1472, 2
  %v1474 = vmax.f32 %v1472, %v1473
  %v1475 = vrot.slane %v1474, 1
  %v1476 = vmax.f32 %v1474, %v1475
  %v1477 = vpack.i.bf16 %v1476, %v1476
  %v1479 = vsel %vm163, %v136, 4286644096
  %v1481 = vunpack.i.l.bf16 %v1479
  %v1482 = vunpack.i.h.bf16 %v1479
  %v1483 = vmax.f32 %v1481, %v1482
  %v1484 = vrot.slane %v1483, 4
  %v1485 = vmax.f32 %v1483, %v1484
  %v1486 = vrot.slane %v1485, 2
  %v1487 = vmax.f32 %v1485, %v1486
  %v1488 = vrot.slane %v1487, 1
  %v1489 = vmax.f32 %v1487, %v1488
  %v1490 = vpack.i.bf16 %v1489, %v1489
  %v1492 = vsel %vm163, %v137, 4286644096
  %v1494 = vunpack.i.l.bf16 %v1492
  %v1495 = vunpack.i.h.bf16 %v1492
  %v1496 = vmax.f32 %v1494, %v1495
  %v1497 = vrot.slane %v1496, 4
  %v1498 = vmax.f32 %v1496, %v1497
  %v1499 = vrot.slane %v1498, 2
  %v1500 = vmax.f32 %v1498, %v1499
  %v1501 = vrot.slane %v1500, 1
  %v1502 = vmax.f32 %v1500, %v1501
  %v1503 = vpack.i.bf16 %v1502, %v1502
  %v1505 = vsel %vm163, %v138, 4286644096
  %v1507 = vunpack.i.l.bf16 %v1505
  %v1508 = vunpack.i.h.bf16 %v1505
  %v1509 = vmax.f32 %v1507, %v1508
  %v1510 = vrot.slane %v1509, 4
  %v1511 = vmax.f32 %v1509, %v1510
  %v1512 = vrot.slane %v1511, 2
  %v1513 = vmax.f32 %v1511, %v1512
  %v1514 = vrot.slane %v1513, 1
  %v1515 = vmax.f32 %v1513, %v1514
  %v1516 = vpack.i.bf16 %v1515, %v1515
  %v1518 = vsel %vm163, %v139, 4286644096
  %v1520 = vunpack.i.l.bf16 %v1518
  %v1521 = vunpack.i.h.bf16 %v1518
  %v1522 = vmax.f32 %v1520, %v1521
  %v1523 = vrot.slane %v1522, 4
  %v1524 = vmax.f32 %v1522, %v1523
  %v1525 = vrot.slane %v1524, 2
  %v1526 = vmax.f32 %v1524, %v1525
  %v1527 = vrot.slane %v1526, 1
  %v1528 = vmax.f32 %v1526, %v1527
  %v1529 = vpack.i.bf16 %v1528, %v1528
  %v1531 = vsel %vm163, %v140, 4286644096
  %v1533 = vunpack.i.l.bf16 %v1531
  %v1534 = vunpack.i.h.bf16 %v1531
  %v1535 = vmax.f32 %v1533, %v1534
  %v1536 = vrot.slane %v1535, 4
  %v1537 = vmax.f32 %v1535, %v1536
  %v1538 = vrot.slane %v1537, 2
  %v1539 = vmax.f32 %v1537, %v1538
  %v1540 = vrot.slane %v1539, 1
  %v1541 = vmax.f32 %v1539, %v1540
  %v1542 = vpack.i.bf16 %v1541, %v1541
  %v1544 = vsel %vm163, %v141, 4286644096
  %v1546 = vunpack.i.l.bf16 %v1544
  %v1547 = vunpack.i.h.bf16 %v1544
  %v1548 = vmax.f32 %v1546, %v1547
  %v1549 = vrot.slane %v1548, 4
  %v1550 = vmax.f32 %v1548, %v1549
  %v1551 = vrot.slane %v1550, 2
  %v1552 = vmax.f32 %v1550, %v1551
  %v1553 = vrot.slane %v1552, 1
  %v1554 = vmax.f32 %v1552, %v1553
  %v1555 = vpack.i.bf16 %v1554, %v1554
  %v1557 = vsel %vm163, %v142, 4286644096
  %v1559 = vunpack.i.l.bf16 %v1557
  %v1560 = vunpack.i.h.bf16 %v1557
  %v1561 = vmax.f32 %v1559, %v1560
  %v1562 = vrot.slane %v1561, 4
  %v1563 = vmax.f32 %v1561, %v1562
  %v1564 = vrot.slane %v1563, 2
  %v1565 = vmax.f32 %v1563, %v1564
  %v1566 = vrot.slane %v1565, 1
  %v1567 = vmax.f32 %v1565, %v1566
  %v1568 = vpack.i.bf16 %v1567, %v1567
  %v1570 = vsel %vm163, %v143, 4286644096
  %v1572 = vunpack.i.l.bf16 %v1570
  %v1573 = vunpack.i.h.bf16 %v1570
  %v1574 = vmax.f32 %v1572, %v1573
  %v1575 = vrot.slane %v1574, 4
  %v1576 = vmax.f32 %v1574, %v1575
  %v1577 = vrot.slane %v1576, 2
  %v1578 = vmax.f32 %v1576, %v1577
  %v1579 = vrot.slane %v1578, 1
  %v1580 = vmax.f32 %v1578, %v1579
  %v1581 = vpack.i.bf16 %v1580, %v1580
  %v1583 = vsel %vm163, %v144, 4286644096
  %v1585 = vunpack.i.l.bf16 %v1583
  %v1586 = vunpack.i.h.bf16 %v1583
  %v1587 = vmax.f32 %v1585, %v1586
  %v1588 = vrot.slane %v1587, 4
  %v1589 = vmax.f32 %v1587, %v1588
  %v1590 = vrot.slane %v1589, 2
  %v1591 = vmax.f32 %v1589, %v1590
  %v1592 = vrot.slane %v1591, 1
  %v1593 = vmax.f32 %v1591, %v1592
  %v1594 = vpack.i.bf16 %v1593, %v1593
  %v1596 = vsel %vm163, %v145, 4286644096
  %v1598 = vunpack.i.l.bf16 %v1596
  %v1599 = vunpack.i.h.bf16 %v1596
  %v1600 = vmax.f32 %v1598, %v1599
  %v1601 = vrot.slane %v1600, 4
  %v1602 = vmax.f32 %v1600, %v1601
  %v1603 = vrot.slane %v1602, 2
  %v1604 = vmax.f32 %v1602, %v1603
  %v1605 = vrot.slane %v1604, 1
  %v1606 = vmax.f32 %v1604, %v1605
  %v1607 = vpack.i.bf16 %v1606, %v1606
  %v1609 = vsel %vm163, %v146, 4286644096
  %v1611 = vunpack.i.l.bf16 %v1609
  %v1612 = vunpack.i.h.bf16 %v1609
  %v1613 = vmax.f32 %v1611, %v1612
  %v1614 = vrot.slane %v1613, 4
  %v1615 = vmax.f32 %v1613, %v1614
  %v1616 = vrot.slane %v1615, 2
  %v1617 = vmax.f32 %v1615, %v1616
  %v1618 = vrot.slane %v1617, 1
  %v1619 = vmax.f32 %v1617, %v1618
  %v1620 = vpack.i.bf16 %v1619, %v1619
  %v1622 = vsel %vm163, %v147, 4286644096
  %v1624 = vunpack.i.l.bf16 %v1622
  %v1625 = vunpack.i.h.bf16 %v1622
  %v1626 = vmax.f32 %v1624, %v1625
  %v1627 = vrot.slane %v1626, 4
  %v1628 = vmax.f32 %v1626, %v1627
  %v1629 = vrot.slane %v1628, 2
  %v1630 = vmax.f32 %v1628, %v1629
  %v1631 = vrot.slane %v1630, 1
  %v1632 = vmax.f32 %v1630, %v1631
  %v1633 = vpack.i.bf16 %v1632, %v1632
  %v1635 = vsel %vm163, %v148, 4286644096
  %v1637 = vunpack.i.l.bf16 %v1635
  %v1638 = vunpack.i.h.bf16 %v1635
  %v1639 = vmax.f32 %v1637, %v1638
  %v1640 = vrot.slane %v1639, 4
  %v1641 = vmax.f32 %v1639, %v1640
  %v1642 = vrot.slane %v1641, 2
  %v1643 = vmax.f32 %v1641, %v1642
  %v1644 = vrot.slane %v1643, 1
  %v1645 = vmax.f32 %v1643, %v1644
  %v1646 = vpack.i.bf16 %v1645, %v1645
  %v1648 = vsel %vm163, %v149, 4286644096
  %v1650 = vunpack.i.l.bf16 %v1648
  %v1651 = vunpack.i.h.bf16 %v1648
  %v1652 = vmax.f32 %v1650, %v1651
  %v1653 = vrot.slane %v1652, 4
  %v1654 = vmax.f32 %v1652, %v1653
  %v1655 = vrot.slane %v1654, 2
  %v1656 = vmax.f32 %v1654, %v1655
  %v1657 = vrot.slane %v1656, 1
  %v1658 = vmax.f32 %v1656, %v1657
  %v1659 = vpack.i.bf16 %v1658, %v1658
  %v1661 = vsel %vm163, %v150, 4286644096
  %v1663 = vunpack.i.l.bf16 %v1661
  %v1664 = vunpack.i.h.bf16 %v1661
  %v1665 = vmax.f32 %v1663, %v1664
  %v1666 = vrot.slane %v1665, 4
  %v1667 = vmax.f32 %v1665, %v1666
  %v1668 = vrot.slane %v1667, 2
  %v1669 = vmax.f32 %v1667, %v1668
  %v1670 = vrot.slane %v1669, 1
  %v1671 = vmax.f32 %v1669, %v1670
  %v1672 = vpack.i.bf16 %v1671, %v1671
  %v1674 = vsel %vm163, %v151, 4286644096
  %v1676 = vunpack.i.l.bf16 %v1674
  %v1677 = vunpack.i.h.bf16 %v1674
  %v1678 = vmax.f32 %v1676, %v1677
  %v1679 = vrot.slane %v1678, 4
  %v1680 = vmax.f32 %v1678, %v1679
  %v1681 = vrot.slane %v1680, 2
  %v1682 = vmax.f32 %v1680, %v1681
  %v1683 = vrot.slane %v1682, 1
  %v1684 = vmax.f32 %v1682, %v1683
  %v1685 = vpack.i.bf16 %v1684, %v1684
  %v1687 = vsel %vm163, %v152, 4286644096
  %v1689 = vunpack.i.l.bf16 %v1687
  %v1690 = vunpack.i.h.bf16 %v1687
  %v1691 = vmax.f32 %v1689, %v1690
  %v1692 = vrot.slane %v1691, 4
  %v1693 = vmax.f32 %v1691, %v1692
  %v1694 = vrot.slane %v1693, 2
  %v1695 = vmax.f32 %v1693, %v1694
  %v1696 = vrot.slane %v1695, 1
  %v1697 = vmax.f32 %v1695, %v1696
  %v1698 = vpack.i.bf16 %v1697, %v1697
  %v1700 = vsel %vm163, %v153, 4286644096
  %v1702 = vunpack.i.l.bf16 %v1700
  %v1703 = vunpack.i.h.bf16 %v1700
  %v1704 = vmax.f32 %v1702, %v1703
  %v1705 = vrot.slane %v1704, 4
  %v1706 = vmax.f32 %v1704, %v1705
  %v1707 = vrot.slane %v1706, 2
  %v1708 = vmax.f32 %v1706, %v1707
  %v1709 = vrot.slane %v1708, 1
  %v1710 = vmax.f32 %v1708, %v1709
  %v1711 = vpack.i.bf16 %v1710, %v1710
  %v1713 = vsel %vm163, %v154, 4286644096
  %v1715 = vunpack.i.l.bf16 %v1713
  %v1716 = vunpack.i.h.bf16 %v1713
  %v1717 = vmax.f32 %v1715, %v1716
  %v1718 = vrot.slane %v1717, 4
  %v1719 = vmax.f32 %v1717, %v1718
  %v1720 = vrot.slane %v1719, 2
  %v1721 = vmax.f32 %v1719, %v1720
  %v1722 = vrot.slane %v1721, 1
  %v1723 = vmax.f32 %v1721, %v1722
  %v1724 = vpack.i.bf16 %v1723, %v1723
  %v1726 = vsel %vm163, %v155, 4286644096
  %v1728 = vunpack.i.l.bf16 %v1726
  %v1729 = vunpack.i.h.bf16 %v1726
  %v1730 = vmax.f32 %v1728, %v1729
  %v1731 = vrot.slane %v1730, 4
  %v1732 = vmax.f32 %v1730, %v1731
  %v1733 = vrot.slane %v1732, 2
  %v1734 = vmax.f32 %v1732, %v1733
  %v1735 = vrot.slane %v1734, 1
  %v1736 = vmax.f32 %v1734, %v1735
  %v1737 = vpack.i.bf16 %v1736, %v1736
  %v1739 = vsel %vm163, %v156, 4286644096
  %v1741 = vunpack.i.l.bf16 %v1739
  %v1742 = vunpack.i.h.bf16 %v1739
  %v1743 = vmax.f32 %v1741, %v1742
  %v1744 = vrot.slane %v1743, 4
  %v1745 = vmax.f32 %v1743, %v1744
  %v1746 = vrot.slane %v1745, 2
  %v1747 = vmax.f32 %v1745, %v1746
  %v1748 = vrot.slane %v1747, 1
  %v1749 = vmax.f32 %v1747, %v1748
  %v1750 = vpack.i.bf16 %v1749, %v1749
  %v1752 = vsel %vm163, %v157, 4286644096
  %v1754 = vunpack.i.l.bf16 %v1752
  %v1755 = vunpack.i.h.bf16 %v1752
  %v1756 = vmax.f32 %v1754, %v1755
  %v1757 = vrot.slane %v1756, 4
  %v1758 = vmax.f32 %v1756, %v1757
  %v1759 = vrot.slane %v1758, 2
  %v1760 = vmax.f32 %v1758, %v1759
  %v1761 = vrot.slane %v1760, 1
  %v1762 = vmax.f32 %v1760, %v1761
  %v1763 = vpack.i.bf16 %v1762, %v1762
  %v1765 = vsel %vm163, %v158, 4286644096
  %v1767 = vunpack.i.l.bf16 %v1765
  %v1768 = vunpack.i.h.bf16 %v1765
  %v1769 = vmax.f32 %v1767, %v1768
  %v1770 = vrot.slane %v1769, 4
  %v1771 = vmax.f32 %v1769, %v1770
  %v1772 = vrot.slane %v1771, 2
  %v1773 = vmax.f32 %v1771, %v1772
  %v1774 = vrot.slane %v1773, 1
  %v1775 = vmax.f32 %v1773, %v1774
  %v1776 = vpack.i.bf16 %v1775, %v1775
  %v1778 = vsel %vm163, %v159, 4286644096
  %v1780 = vunpack.i.l.bf16 %v1778
  %v1781 = vunpack.i.h.bf16 %v1778
  %v1782 = vmax.f32 %v1780, %v1781
  %v1783 = vrot.slane %v1782, 4
  %v1784 = vmax.f32 %v1782, %v1783
  %v1785 = vrot.slane %v1784, 2
  %v1786 = vmax.f32 %v1784, %v1785
  %v1787 = vrot.slane %v1786, 1
  %v1788 = vmax.f32 %v1786, %v1787
  %v1789 = vpack.i.bf16 %v1788, %v1788
  %v1791 = vsel %vm163, %v160, 4286644096
  %v1793 = vunpack.i.l.bf16 %v1791
  %v1794 = vunpack.i.h.bf16 %v1791
  %v1795 = vmax.f32 %v1793, %v1794
  %v1796 = vrot.slane %v1795, 4
  %v1797 = vmax.f32 %v1795, %v1796
  %v1798 = vrot.slane %v1797, 2
  %v1799 = vmax.f32 %v1797, %v1798
  %v1800 = vrot.slane %v1799, 1
  %v1801 = vmax.f32 %v1799, %v1800
  %v1802 = vpack.i.bf16 %v1801, %v1801
  %v1804 = vsel %vm163, %v161, 4286644096
  %v1806 = vunpack.i.l.bf16 %v1804
  %v1807 = vunpack.i.h.bf16 %v1804
  %v1808 = vmax.f32 %v1806, %v1807
  %v1809 = vrot.slane %v1808, 4
  %v1810 = vmax.f32 %v1808, %v1809
  %v1811 = vrot.slane %v1810, 2
  %v1812 = vmax.f32 %v1810, %v1811
  %v1813 = vrot.slane %v1812, 1
  %v1814 = vmax.f32 %v1812, %v1813
  %v1815 = vpack.i.bf16 %v1814, %v1814
  %v1817 = vsel %vm163, %v162, 4286644096
  %v1819 = vunpack.i.l.bf16 %v1817
  %v1820 = vunpack.i.h.bf16 %v1817
  %v1821 = vmax.f32 %v1819, %v1820
  %v1822 = vrot.slane %v1821, 4
  %v1823 = vmax.f32 %v1821, %v1822
  %v1824 = vrot.slane %v1823, 2
  %v1825 = vmax.f32 %v1823, %v1824
  %v1826 = vrot.slane %v1825, 1
  %v1827 = vmax.f32 %v1825, %v1826
  %v1828 = vpack.i.bf16 %v1827, %v1827
  %v1829 = vld [vmem:[%s1] sm:$0xf]
  %v1830 = vld [vmem:[%s1 + $0x4] sm:$0x1]
  %v1831 = vld [vmem:[%s1 + $0x8] sm:$0xf]
  %v1832 = vld [vmem:[%s1 + $0xc] sm:$0x1]
  %v1833 = vld [vmem:[%s1 + $0x10] sm:$0xf]
  %v1834 = vld [vmem:[%s1 + $0x14] sm:$0x1]
  %v1835 = vld [vmem:[%s1 + $0x18] sm:$0xf]
  %v1836 = vld [vmem:[%s1 + $0x1c] sm:$0x1]
  %v1837 = vld [vmem:[%s1 + $0x20] sm:$0xf]
  %v1838 = vld [vmem:[%s1 + $0x24] sm:$0x1]
  %v1839 = vld [vmem:[%s1 + $0x28] sm:$0xf]
  %v1840 = vld [vmem:[%s1 + $0x2c] sm:$0x1]
  %v1841 = vld [vmem:[%s1 + $0x30] sm:$0xf]
  %v1842 = vld [vmem:[%s1 + $0x34] sm:$0x1]
  %v1843 = vld [vmem:[%s1 + $0x38] sm:$0xf]
  %v1844 = vld [vmem:[%s1 + $0x3c] sm:$0x1]
  %v1845 = vld [vmem:[%s1 + $0x40] sm:$0xf]
  %v1846 = vld [vmem:[%s1 + $0x44] sm:$0x1]
  %v1847 = vld [vmem:[%s1 + $0x48] sm:$0xf]
  %v1848 = vld [vmem:[%s1 + $0x4c] sm:$0x1]
  %v1849 = vld [vmem:[%s1 + $0x50] sm:$0xf]
  %v1850 = vld [vmem:[%s1 + $0x54] sm:$0x1]
  %v1851 = vld [vmem:[%s1 + $0x58] sm:$0xf]
  %v1852 = vld [vmem:[%s1 + $0x5c] sm:$0x1]
  %v1853 = vld [vmem:[%s1 + $0x60] sm:$0xf]
  %v1854 = vld [vmem:[%s1 + $0x64] sm:$0x1]
  %v1855 = vld [vmem:[%s1 + $0x68] sm:$0xf]
  %v1856 = vld [vmem:[%s1 + $0x6c] sm:$0x1]
  %v1857 = vld [vmem:[%s1 + $0x70] sm:$0xf]
  %v1858 = vld [vmem:[%s1 + $0x74] sm:$0x1]
  %v1859 = vld [vmem:[%s1 + $0x78] sm:$0xf]
  %v1860 = vld [vmem:[%s1 + $0x7c] sm:$0x1]
  %v1861 = vld [vmem:[%s1 + $0x80] sm:$0xf]
  %v1862 = vld [vmem:[%s1 + $0x84] sm:$0x1]
  %v1863 = vld [vmem:[%s1 + $0x88] sm:$0xf]
  %v1864 = vld [vmem:[%s1 + $0x8c] sm:$0x1]
  %v1865 = vld [vmem:[%s1 + $0x90] sm:$0xf]
  %v1866 = vld [vmem:[%s1 + $0x94] sm:$0x1]
  %v1867 = vld [vmem:[%s1 + $0x98] sm:$0xf]
  %v1868 = vld [vmem:[%s1 + $0x9c] sm:$0x1]
  %v1869 = vld [vmem:[%s1 + $0xa0] sm:$0xf]
  %v1870 = vld [vmem:[%s1 + $0xa4] sm:$0x1]
  %v1871 = vld [vmem:[%s1 + $0xa8] sm:$0xf]
  %v1872 = vld [vmem:[%s1 + $0xac] sm:$0x1]
  %v1873 = vld [vmem:[%s1 + $0xb0] sm:$0xf]
  %v1874 = vld [vmem:[%s1 + $0xb4] sm:$0x1]
  %v1875 = vld [vmem:[%s1 + $0xb8] sm:$0xf]
  %v1876 = vld [vmem:[%s1 + $0xbc] sm:$0x1]
  %v1877 = vld [vmem:[%s1 + $0xc0] sm:$0xf]
  %v1878 = vld [vmem:[%s1 + $0xc4] sm:$0x1]
  %v1879 = vld [vmem:[%s1 + $0xc8] sm:$0xf]
  %v1880 = vld [vmem:[%s1 + $0xcc] sm:$0x1]
  %v1881 = vld [vmem:[%s1 + $0xd0] sm:$0xf]
  %v1882 = vld [vmem:[%s1 + $0xd4] sm:$0x1]
  %v1883 = vld [vmem:[%s1 + $0xd8] sm:$0xf]
  %v1884 = vld [vmem:[%s1 + $0xdc] sm:$0x1]
  %v1885 = vld [vmem:[%s1 + $0xe0] sm:$0xf]
  %v1886 = vld [vmem:[%s1 + $0xe4] sm:$0x1]
  %v1887 = vld [vmem:[%s1 + $0xe8] sm:$0xf]
  %v1888 = vld [vmem:[%s1 + $0xec] sm:$0x1]
  %v1889 = vld [vmem:[%s1 + $0xf0] sm:$0xf]
  %v1890 = vld [vmem:[%s1 + $0xf4] sm:$0x1]
  %v1891 = vld [vmem:[%s1 + $0xf8] sm:$0xf]
  %v1892 = vld [vmem:[%s1 + $0xfc] sm:$0x1]
  %v1893 = vld [vmem:[%s1 + $0x100] sm:$0xf]
  %v1894 = vld [vmem:[%s1 + $0x104] sm:$0x1]
  %v1895 = vld [vmem:[%s1 + $0x108] sm:$0xf]
  %v1896 = vld [vmem:[%s1 + $0x10c] sm:$0x1]
  %v1897 = vld [vmem:[%s1 + $0x110] sm:$0xf]
  %v1898 = vld [vmem:[%s1 + $0x114] sm:$0x1]
  %v1899 = vld [vmem:[%s1 + $0x118] sm:$0xf]
  %v1900 = vld [vmem:[%s1 + $0x11c] sm:$0x1]
  %v1901 = vld [vmem:[%s1 + $0x120] sm:$0xf]
  %v1902 = vld [vmem:[%s1 + $0x124] sm:$0x1]
  %v1903 = vld [vmem:[%s1 + $0x128] sm:$0xf]
  %v1904 = vld [vmem:[%s1 + $0x12c] sm:$0x1]
  %v1905 = vld [vmem:[%s1 + $0x130] sm:$0xf]
  %v1906 = vld [vmem:[%s1 + $0x134] sm:$0x1]
  %v1907 = vld [vmem:[%s1 + $0x138] sm:$0xf]
  %v1908 = vld [vmem:[%s1 + $0x13c] sm:$0x1]
  %v1909 = vld [vmem:[%s1 + $0x140] sm:$0xf]
  %v1910 = vld [vmem:[%s1 + $0x144] sm:$0x1]
  %v1911 = vld [vmem:[%s1 + $0x148] sm:$0xf]
  %v1912 = vld [vmem:[%s1 + $0x14c] sm:$0x1]
  %v1913 = vld [vmem:[%s1 + $0x150] sm:$0xf]
  %v1914 = vld [vmem:[%s1 + $0x154] sm:$0x1]
  %v1915 = vld [vmem:[%s1 + $0x158] sm:$0xf]
  %v1916 = vld [vmem:[%s1 + $0x15c] sm:$0x1]
  %v1917 = vld [vmem:[%s1 + $0x160] sm:$0xf]
  %v1918 = vld [vmem:[%s1 + $0x164] sm:$0x1]
  %v1919 = vld [vmem:[%s1 + $0x168] sm:$0xf]
  %v1920 = vld [vmem:[%s1 + $0x16c] sm:$0x1]
  %v1921 = vld [vmem:[%s1 + $0x170] sm:$0xf]
  %v1922 = vld [vmem:[%s1 + $0x174] sm:$0x1]
  %v1923 = vld [vmem:[%s1 + $0x178] sm:$0xf]
  %v1924 = vld [vmem:[%s1 + $0x17c] sm:$0x1]
  %v1925 = vld [vmem:[%s1 + $0x180] sm:$0xf]
  %v1926 = vld [vmem:[%s1 + $0x184] sm:$0x1]
  %v1927 = vld [vmem:[%s1 + $0x188] sm:$0xf]
  %v1928 = vld [vmem:[%s1 + $0x18c] sm:$0x1]
  %v1929 = vld [vmem:[%s1 + $0x190] sm:$0xf]
  %v1930 = vld [vmem:[%s1 + $0x194] sm:$0x1]
  %v1931 = vld [vmem:[%s1 + $0x198] sm:$0xf]
  %v1932 = vld [vmem:[%s1 + $0x19c] sm:$0x1]
  %v1933 = vld [vmem:[%s1 + $0x1a0] sm:$0xf]
  %v1934 = vld [vmem:[%s1 + $0x1a4] sm:$0x1]
  %v1935 = vld [vmem:[%s1 + $0x1a8] sm:$0xf]
  %v1936 = vld [vmem:[%s1 + $0x1ac] sm:$0x1]
  %v1937 = vld [vmem:[%s1 + $0x1b0] sm:$0xf]
  %v1938 = vld [vmem:[%s1 + $0x1b4] sm:$0x1]
  %v1939 = vld [vmem:[%s1 + $0x1b8] sm:$0xf]
  %v1940 = vld [vmem:[%s1 + $0x1bc] sm:$0x1]
  %v1941 = vld [vmem:[%s1 + $0x1c0] sm:$0xf]
  %v1942 = vld [vmem:[%s1 + $0x1c4] sm:$0x1]
  %v1943 = vld [vmem:[%s1 + $0x1c8] sm:$0xf]
  %v1944 = vld [vmem:[%s1 + $0x1cc] sm:$0x1]
  %v1945 = vld [vmem:[%s1 + $0x1d0] sm:$0xf]
  %v1946 = vld [vmem:[%s1 + $0x1d4] sm:$0x1]
  %v1947 = vld [vmem:[%s1 + $0x1d8] sm:$0xf]
  %v1948 = vld [vmem:[%s1 + $0x1dc] sm:$0x1]
  %v1949 = vld [vmem:[%s1 + $0x1e0] sm:$0xf]
  %v1950 = vld [vmem:[%s1 + $0x1e4] sm:$0x1]
  %v1951 = vld [vmem:[%s1 + $0x1e8] sm:$0xf]
  %v1952 = vld [vmem:[%s1 + $0x1ec] sm:$0x1]
  %v1953 = vld [vmem:[%s1 + $0x1f0] sm:$0xf]
  %v1954 = vld [vmem:[%s1 + $0x1f4] sm:$0x1]
  %v1955 = vld [vmem:[%s1 + $0x1f8] sm:$0xf]
  %v1956 = vld [vmem:[%s1 + $0x1fc] sm:$0x1]
  %v1957 = vld [vmem:[%s1 + $0x200] sm:$0xf]
  %v1958 = vld [vmem:[%s1 + $0x204] sm:$0x1]
  %v1959 = vld [vmem:[%s1 + $0x208] sm:$0xf]
  %v1960 = vld [vmem:[%s1 + $0x20c] sm:$0x1]
  %v1961 = vld [vmem:[%s1 + $0x210] sm:$0xf]
  %v1962 = vld [vmem:[%s1 + $0x214] sm:$0x1]
  %v1963 = vld [vmem:[%s1 + $0x218] sm:$0xf]
  %v1964 = vld [vmem:[%s1 + $0x21c] sm:$0x1]
  %v1965 = vld [vmem:[%s1 + $0x220] sm:$0xf]
  %v1966 = vld [vmem:[%s1 + $0x224] sm:$0x1]
  %v1967 = vld [vmem:[%s1 + $0x228] sm:$0xf]
  %v1968 = vld [vmem:[%s1 + $0x22c] sm:$0x1]
  %v1969 = vld [vmem:[%s1 + $0x230] sm:$0xf]
  %v1970 = vld [vmem:[%s1 + $0x234] sm:$0x1]
  %v1971 = vld [vmem:[%s1 + $0x238] sm:$0xf]
  %v1972 = vld [vmem:[%s1 + $0x23c] sm:$0x1]
  %v1973 = vld [vmem:[%s1 + $0x240] sm:$0xf]
  %v1974 = vld [vmem:[%s1 + $0x244] sm:$0x1]
  %v1975 = vld [vmem:[%s1 + $0x248] sm:$0xf]
  %v1976 = vld [vmem:[%s1 + $0x24c] sm:$0x1]
  %v1977 = vld [vmem:[%s1 + $0x250] sm:$0xf]
  %v1978 = vld [vmem:[%s1 + $0x254] sm:$0x1]
  %v1979 = vld [vmem:[%s1 + $0x258] sm:$0xf]
  %v1980 = vld [vmem:[%s1 + $0x25c] sm:$0x1]
  %v1981 = vld [vmem:[%s1 + $0x260] sm:$0xf]
  %v1982 = vld [vmem:[%s1 + $0x264] sm:$0x1]
  %v1983 = vld [vmem:[%s1 + $0x268] sm:$0xf]
  %v1984 = vld [vmem:[%s1 + $0x26c] sm:$0x1]
  %v1985 = vld [vmem:[%s1 + $0x270] sm:$0xf]
  %v1986 = vld [vmem:[%s1 + $0x274] sm:$0x1]
  %v1987 = vld [vmem:[%s1 + $0x278] sm:$0xf]
  %v1988 = vld [vmem:[%s1 + $0x27c] sm:$0x1]
  %v1989 = vld [vmem:[%s1 + $0x280] sm:$0xf]
  %v1990 = vld [vmem:[%s1 + $0x284] sm:$0x1]
  %v1991 = vld [vmem:[%s1 + $0x288] sm:$0xf]
  %v1992 = vld [vmem:[%s1 + $0x28c] sm:$0x1]
  %v1993 = vld [vmem:[%s1 + $0x290] sm:$0xf]
  %v1994 = vld [vmem:[%s1 + $0x294] sm:$0x1]
  %v1995 = vld [vmem:[%s1 + $0x298] sm:$0xf]
  %v1996 = vld [vmem:[%s1 + $0x29c] sm:$0x1]
  %v1997 = vld [vmem:[%s1 + $0x2a0] sm:$0xf]
  %v1998 = vld [vmem:[%s1 + $0x2a4] sm:$0x1]
  %v1999 = vld [vmem:[%s1 + $0x2a8] sm:$0xf]
  %v2000 = vld [vmem:[%s1 + $0x2ac] sm:$0x1]
  %v2001 = vld [vmem:[%s1 + $0x2b0] sm:$0xf]
  %v2002 = vld [vmem:[%s1 + $0x2b4] sm:$0x1]
  %v2003 = vld [vmem:[%s1 + $0x2b8] sm:$0xf]
  %v2004 = vld [vmem:[%s1 + $0x2bc] sm:$0x1]
  %v2005 = vld [vmem:[%s1 + $0x2c0] sm:$0xf]
  %v2006 = vld [vmem:[%s1 + $0x2c4] sm:$0x1]
  %v2007 = vld [vmem:[%s1 + $0x2c8] sm:$0xf]
  %v2008 = vld [vmem:[%s1 + $0x2cc] sm:$0x1]
  %v2009 = vld [vmem:[%s1 + $0x2d0] sm:$0xf]
  %v2010 = vld [vmem:[%s1 + $0x2d4] sm:$0x1]
  %v2011 = vld [vmem:[%s1 + $0x2d8] sm:$0xf]
  %v2012 = vld [vmem:[%s1 + $0x2dc] sm:$0x1]
  %v2013 = vld [vmem:[%s1 + $0x2e0] sm:$0xf]
  %v2014 = vld [vmem:[%s1 + $0x2e4] sm:$0x1]
  %v2015 = vld [vmem:[%s1 + $0x2e8] sm:$0xf]
  %v2016 = vld [vmem:[%s1 + $0x2ec] sm:$0x1]
  %v2017 = vld [vmem:[%s1 + $0x2f0] sm:$0xf]
  %v2018 = vld [vmem:[%s1 + $0x2f4] sm:$0x1]
  %v2019 = vld [vmem:[%s1 + $0x2f8] sm:$0xf]
  %v2020 = vld [vmem:[%s1 + $0x2fc] sm:$0x1]
  %v2021 = vld [vmem:[%s1 + $0x300] sm:$0xf]
  %v2022 = vld [vmem:[%s1 + $0x304] sm:$0x1]
  %v2023 = vld [vmem:[%s1 + $0x308] sm:$0xf]
  %v2024 = vld [vmem:[%s1 + $0x30c] sm:$0x1]
  %v2025 = vld [vmem:[%s1 + $0x310] sm:$0xf]
  %v2026 = vld [vmem:[%s1 + $0x314] sm:$0x1]
  %v2027 = vld [vmem:[%s1 + $0x318] sm:$0xf]
  %v2028 = vld [vmem:[%s1 + $0x31c] sm:$0x1]
  %v2029 = vld [vmem:[%s1 + $0x320] sm:$0xf]
  %v2030 = vld [vmem:[%s1 + $0x324] sm:$0x1]
  %v2031 = vld [vmem:[%s1 + $0x328] sm:$0xf]
  %v2032 = vld [vmem:[%s1 + $0x32c] sm:$0x1]
  %v2033 = vld [vmem:[%s1 + $0x330] sm:$0xf]
  %v2034 = vld [vmem:[%s1 + $0x334] sm:$0x1]
  %v2035 = vld [vmem:[%s1 + $0x338] sm:$0xf]
  %v2036 = vld [vmem:[%s1 + $0x33c] sm:$0x1]
  %v2037 = vld [vmem:[%s1 + $0x340] sm:$0xf]
  %v2038 = vld [vmem:[%s1 + $0x344] sm:$0x1]
  %v2039 = vld [vmem:[%s1 + $0x348] sm:$0xf]
  %v2040 = vld [vmem:[%s1 + $0x34c] sm:$0x1]
  %v2041 = vld [vmem:[%s1 + $0x350] sm:$0xf]
  %v2042 = vld [vmem:[%s1 + $0x354] sm:$0x1]
  %v2043 = vld [vmem:[%s1 + $0x358] sm:$0xf]
  %v2044 = vld [vmem:[%s1 + $0x35c] sm:$0x1]
  %v2045 = vld [vmem:[%s1 + $0x360] sm:$0xf]
  %v2046 = vld [vmem:[%s1 + $0x364] sm:$0x1]
  %v2047 = vld [vmem:[%s1 + $0x368] sm:$0xf]
  %v2048 = vld [vmem:[%s1 + $0x36c] sm:$0x1]
  %v2049 = vld [vmem:[%s1 + $0x370] sm:$0xf]
  %v2050 = vld [vmem:[%s1 + $0x374] sm:$0x1]
  %v2051 = vld [vmem:[%s1 + $0x378] sm:$0xf]
  %v2052 = vld [vmem:[%s1 + $0x37c] sm:$0x1]
  %v2053 = vld [vmem:[%s1 + $0x380] sm:$0xf]
  %v2054 = vld [vmem:[%s1 + $0x384] sm:$0x1]
  %v2055 = vld [vmem:[%s1 + $0x388] sm:$0xf]
  %v2056 = vld [vmem:[%s1 + $0x38c] sm:$0x1]
  %v2057 = vld [vmem:[%s1 + $0x390] sm:$0xf]
  %v2058 = vld [vmem:[%s1 + $0x394] sm:$0x1]
  %v2059 = vld [vmem:[%s1 + $0x398] sm:$0xf]
  %v2060 = vld [vmem:[%s1 + $0x39c] sm:$0x1]
  %v2061 = vld [vmem:[%s1 + $0x3a0] sm:$0xf]
  %v2062 = vld [vmem:[%s1 + $0x3a4] sm:$0x1]
  %v2063 = vld [vmem:[%s1 + $0x3a8] sm:$0xf]
  %v2064 = vld [vmem:[%s1 + $0x3ac] sm:$0x1]
  %v2065 = vld [vmem:[%s1 + $0x3b0] sm:$0xf]
  %v2066 = vld [vmem:[%s1 + $0x3b4] sm:$0x1]
  %v2067 = vld [vmem:[%s1 + $0x3b8] sm:$0xf]
  %v2068 = vld [vmem:[%s1 + $0x3bc] sm:$0x1]
  %v2069 = vld [vmem:[%s1 + $0x3c0] sm:$0xf]
  %v2070 = vld [vmem:[%s1 + $0x3c4] sm:$0x1]
  %v2071 = vld [vmem:[%s1 + $0x3c8] sm:$0xf]
  %v2072 = vld [vmem:[%s1 + $0x3cc] sm:$0x1]
  %v2073 = vld [vmem:[%s1 + $0x3d0] sm:$0xf]
  %v2074 = vld [vmem:[%s1 + $0x3d4] sm:$0x1]
  %v2075 = vld [vmem:[%s1 + $0x3d8] sm:$0xf]
  %v2076 = vld [vmem:[%s1 + $0x3dc] sm:$0x1]
  %v2077 = vld [vmem:[%s1 + $0x3e0] sm:$0xf]
  %v2078 = vld [vmem:[%s1 + $0x3e4] sm:$0x1]
  %v2079 = vld [vmem:[%s1 + $0x3e8] sm:$0xf]
  %v2080 = vld [vmem:[%s1 + $0x3ec] sm:$0x1]
  %v2081 = vld [vmem:[%s1 + $0x3f0] sm:$0xf]
  %v2082 = vld [vmem:[%s1 + $0x3f4] sm:$0x1]
  %v2083 = vld [vmem:[%s1 + $0x3f8] sm:$0xf]
  %v2084 = vld [vmem:[%s1 + $0x3fc] sm:$0x1]
  %v2341 = vunpack.c.l.b16 %v1829
  %v2342 = vunpack.c.l.b16 %v1830
  %v2343 = vunpack.c.l.b16 %v1831
  %v2344 = vunpack.c.l.b16 %v1832
  %v2345 = vunpack.c.l.b16 %v1833
  %v2346 = vunpack.c.l.b16 %v1834
  %v2347 = vunpack.c.l.b16 %v1835
  %v2348 = vunpack.c.l.b16 %v1836
  %v2349 = vunpack.c.l.b16 %v1837
  %v2350 = vunpack.c.l.b16 %v1838
  %v2351 = vunpack.c.l.b16 %v1839
  %v2352 = vunpack.c.l.b16 %v1840
  %v2353 = vunpack.c.l.b16 %v1841
  %v2354 = vunpack.c.l.b16 %v1842
  %v2355 = vunpack.c.l.b16 %v1843
  %v2356 = vunpack.c.l.b16 %v1844
  %v2357 = vunpack.c.l.b16 %v1845
  %v2358 = vunpack.c.l.b16 %v1846
  %v2359 = vunpack.c.l.b16 %v1847
  %v2360 = vunpack.c.l.b16 %v1848
  %v2361 = vunpack.c.l.b16 %v1849
  %v2362 = vunpack.c.l.b16 %v1850
  %v2363 = vunpack.c.l.b16 %v1851
  %v2364 = vunpack.c.l.b16 %v1852
  %v2365 = vunpack.c.l.b16 %v1853
  %v2366 = vunpack.c.l.b16 %v1854
  %v2367 = vunpack.c.l.b16 %v1855
  %v2368 = vunpack.c.l.b16 %v1856
  %v2369 = vunpack.c.l.b16 %v1857
  %v2370 = vunpack.c.l.b16 %v1858
  %v2371 = vunpack.c.l.b16 %v1859
  %v2372 = vunpack.c.l.b16 %v1860
  %v2373 = vunpack.c.l.b16 %v1861
  %v2374 = vunpack.c.l.b16 %v1862
  %v2375 = vunpack.c.l.b16 %v1863
  %v2376 = vunpack.c.l.b16 %v1864
  %v2377 = vunpack.c.l.b16 %v1865
  %v2378 = vunpack.c.l.b16 %v1866
  %v2379 = vunpack.c.l.b16 %v1867
  %v2380 = vunpack.c.l.b16 %v1868
  %v2381 = vunpack.c.l.b16 %v1869
  %v2382 = vunpack.c.l.b16 %v1870
  %v2383 = vunpack.c.l.b16 %v1871
  %v2384 = vunpack.c.l.b16 %v1872
  %v2385 = vunpack.c.l.b16 %v1873
  %v2386 = vunpack.c.l.b16 %v1874
  %v2387 = vunpack.c.l.b16 %v1875
  %v2388 = vunpack.c.l.b16 %v1876
  %v2389 = vunpack.c.l.b16 %v1877
  %v2390 = vunpack.c.l.b16 %v1878
  %v2391 = vunpack.c.l.b16 %v1879
  %v2392 = vunpack.c.l.b16 %v1880
  %v2393 = vunpack.c.l.b16 %v1881
  %v2394 = vunpack.c.l.b16 %v1882
  %v2395 = vunpack.c.l.b16 %v1883
  %v2396 = vunpack.c.l.b16 %v1884
  %v2397 = vunpack.c.l.b16 %v1885
  %v2398 = vunpack.c.l.b16 %v1886
  %v2399 = vunpack.c.l.b16 %v1887
  %v2400 = vunpack.c.l.b16 %v1888
  %v2401 = vunpack.c.l.b16 %v1889
  %v2402 = vunpack.c.l.b16 %v1890
  %v2403 = vunpack.c.l.b16 %v1891
  %v2404 = vunpack.c.l.b16 %v1892
  %v2405 = vunpack.c.l.b16 %v1893
  %v2406 = vunpack.c.l.b16 %v1894
  %v2407 = vunpack.c.l.b16 %v1895
  %v2408 = vunpack.c.l.b16 %v1896
  %v2409 = vunpack.c.l.b16 %v1897
  %v2410 = vunpack.c.l.b16 %v1898
  %v2411 = vunpack.c.l.b16 %v1899
  %v2412 = vunpack.c.l.b16 %v1900
  %v2413 = vunpack.c.l.b16 %v1901
  %v2414 = vunpack.c.l.b16 %v1902
  %v2415 = vunpack.c.l.b16 %v1903
  %v2416 = vunpack.c.l.b16 %v1904
  %v2417 = vunpack.c.l.b16 %v1905
  %v2418 = vunpack.c.l.b16 %v1906
  %v2419 = vunpack.c.l.b16 %v1907
  %v2420 = vunpack.c.l.b16 %v1908
  %v2421 = vunpack.c.l.b16 %v1909
  %v2422 = vunpack.c.l.b16 %v1910
  %v2423 = vunpack.c.l.b16 %v1911
  %v2424 = vunpack.c.l.b16 %v1912
  %v2425 = vunpack.c.l.b16 %v1913
  %v2426 = vunpack.c.l.b16 %v1914
  %v2427 = vunpack.c.l.b16 %v1915
  %v2428 = vunpack.c.l.b16 %v1916
  %v2429 = vunpack.c.l.b16 %v1917
  %v2430 = vunpack.c.l.b16 %v1918
  %v2431 = vunpack.c.l.b16 %v1919
  %v2432 = vunpack.c.l.b16 %v1920
  %v2433 = vunpack.c.l.b16 %v1921
  %v2434 = vunpack.c.l.b16 %v1922
  %v2435 = vunpack.c.l.b16 %v1923
  %v2436 = vunpack.c.l.b16 %v1924
  %v2437 = vunpack.c.l.b16 %v1925
  %v2438 = vunpack.c.l.b16 %v1926
  %v2439 = vunpack.c.l.b16 %v1927
  %v2440 = vunpack.c.l.b16 %v1928
  %v2441 = vunpack.c.l.b16 %v1929
  %v2442 = vunpack.c.l.b16 %v1930
  %v2443 = vunpack.c.l.b16 %v1931
  %v2444 = vunpack.c.l.b16 %v1932
  %v2445 = vunpack.c.l.b16 %v1933
  %v2446 = vunpack.c.l.b16 %v1934
  %v2447 = vunpack.c.l.b16 %v1935
  %v2448 = vunpack.c.l.b16 %v1936
  %v2449 = vunpack.c.l.b16 %v1937
  %v2450 = vunpack.c.l.b16 %v1938
  %v2451 = vunpack.c.l.b16 %v1939
  %v2452 = vunpack.c.l.b16 %v1940
  %v2453 = vunpack.c.l.b16 %v1941
  %v2454 = vunpack.c.l.b16 %v1942
  %v2455 = vunpack.c.l.b16 %v1943
  %v2456 = vunpack.c.l.b16 %v1944
  %v2457 = vunpack.c.l.b16 %v1945
  %v2458 = vunpack.c.l.b16 %v1946
  %v2459 = vunpack.c.l.b16 %v1947
  %v2460 = vunpack.c.l.b16 %v1948
  %v2461 = vunpack.c.l.b16 %v1949
  %v2462 = vunpack.c.l.b16 %v1950
  %v2463 = vunpack.c.l.b16 %v1951
  %v2464 = vunpack.c.l.b16 %v1952
  %v2465 = vunpack.c.l.b16 %v1953
  %v2466 = vunpack.c.l.b16 %v1954
  %v2467 = vunpack.c.l.b16 %v1955
  %v2468 = vunpack.c.l.b16 %v1956
  %v2469 = vunpack.c.l.b16 %v1957
  %v2470 = vunpack.c.l.b16 %v1958
  %v2471 = vunpack.c.l.b16 %v1959
  %v2472 = vunpack.c.l.b16 %v1960
  %v2473 = vunpack.c.l.b16 %v1961
  %v2474 = vunpack.c.l.b16 %v1962
  %v2475 = vunpack.c.l.b16 %v1963
  %v2476 = vunpack.c.l.b16 %v1964
  %v2477 = vunpack.c.l.b16 %v1965
  %v2478 = vunpack.c.l.b16 %v1966
  %v2479 = vunpack.c.l.b16 %v1967
  %v2480 = vunpack.c.l.b16 %v1968
  %v2481 = vunpack.c.l.b16 %v1969
  %v2482 = vunpack.c.l.b16 %v1970
  %v2483 = vunpack.c.l.b16 %v1971
  %v2484 = vunpack.c.l.b16 %v1972
  %v2485 = vunpack.c.l.b16 %v1973
  %v2486 = vunpack.c.l.b16 %v1974
  %v2487 = vunpack.c.l.b16 %v1975
  %v2488 = vunpack.c.l.b16 %v1976
  %v2489 = vunpack.c.l.b16 %v1977
  %v2490 = vunpack.c.l.b16 %v1978
  %v2491 = vunpack.c.l.b16 %v1979
  %v2492 = vunpack.c.l.b16 %v1980
  %v2493 = vunpack.c.l.b16 %v1981
  %v2494 = vunpack.c.l.b16 %v1982
  %v2495 = vunpack.c.l.b16 %v1983
  %v2496 = vunpack.c.l.b16 %v1984
  %v2497 = vunpack.c.l.b16 %v1985
  %v2498 = vunpack.c.l.b16 %v1986
  %v2499 = vunpack.c.l.b16 %v1987
  %v2500 = vunpack.c.l.b16 %v1988
  %v2501 = vunpack.c.l.b16 %v1989
  %v2502 = vunpack.c.l.b16 %v1990
  %v2503 = vunpack.c.l.b16 %v1991
  %v2504 = vunpack.c.l.b16 %v1992
  %v2505 = vunpack.c.l.b16 %v1993
  %v2506 = vunpack.c.l.b16 %v1994
  %v2507 = vunpack.c.l.b16 %v1995
  %v2508 = vunpack.c.l.b16 %v1996
  %v2509 = vunpack.c.l.b16 %v1997
  %v2510 = vunpack.c.l.b16 %v1998
  %v2511 = vunpack.c.l.b16 %v1999
  %v2512 = vunpack.c.l.b16 %v2000
  %v2513 = vunpack.c.l.b16 %v2001
  %v2514 = vunpack.c.l.b16 %v2002
  %v2515 = vunpack.c.l.b16 %v2003
  %v2516 = vunpack.c.l.b16 %v2004
  %v2517 = vunpack.c.l.b16 %v2005
  %v2518 = vunpack.c.l.b16 %v2006
  %v2519 = vunpack.c.l.b16 %v2007
  %v2520 = vunpack.c.l.b16 %v2008
  %v2521 = vunpack.c.l.b16 %v2009
  %v2522 = vunpack.c.l.b16 %v2010
  %v2523 = vunpack.c.l.b16 %v2011
  %v2524 = vunpack.c.l.b16 %v2012
  %v2525 = vunpack.c.l.b16 %v2013
  %v2526 = vunpack.c.l.b16 %v2014
  %v2527 = vunpack.c.l.b16 %v2015
  %v2528 = vunpack.c.l.b16 %v2016
  %v2529 = vunpack.c.l.b16 %v2017
  %v2530 = vunpack.c.l.b16 %v2018
  %v2531 = vunpack.c.l.b16 %v2019
  %v2532 = vunpack.c.l.b16 %v2020
  %v2533 = vunpack.c.l.b16 %v2021
  %v2534 = vunpack.c.l.b16 %v2022
  %v2535 = vunpack.c.l.b16 %v2023
  %v2536 = vunpack.c.l.b16 %v2024
  %v2537 = vunpack.c.l.b16 %v2025
  %v2538 = vunpack.c.l.b16 %v2026
  %v2539 = vunpack.c.l.b16 %v2027
  %v2540 = vunpack.c.l.b16 %v2028
  %v2541 = vunpack.c.l.b16 %v2029
  %v2542 = vunpack.c.l.b16 %v2030
  %v2543 = vunpack.c.l.b16 %v2031
  %v2544 = vunpack.c.l.b16 %v2032
  %v2545 = vunpack.c.l.b16 %v2033
  %v2546 = vunpack.c.l.b16 %v2034
  %v2547 = vunpack.c.l.b16 %v2035
  %v2548 = vunpack.c.l.b16 %v2036
  %v2549 = vunpack.c.l.b16 %v2037
  %v2550 = vunpack.c.l.b16 %v2038
  %v2551 = vunpack.c.l.b16 %v2039
  %v2552 = vunpack.c.l.b16 %v2040
  %v2553 = vunpack.c.l.b16 %v2041
  %v2554 = vunpack.c.l.b16 %v2042
  %v2555 = vunpack.c.l.b16 %v2043
  %v2556 = vunpack.c.l.b16 %v2044
  %v2557 = vunpack.c.l.b16 %v2045
  %v2558 = vunpack.c.l.b16 %v2046
  %v2559 = vunpack.c.l.b16 %v2047
  %v2560 = vunpack.c.l.b16 %v2048
  %v2561 = vunpack.c.l.b16 %v2049
  %v2562 = vunpack.c.l.b16 %v2050
  %v2563 = vunpack.c.l.b16 %v2051
  %v2564 = vunpack.c.l.b16 %v2052
  %v2565 = vunpack.c.l.b16 %v2053
  %v2566 = vunpack.c.l.b16 %v2054
  %v2567 = vunpack.c.l.b16 %v2055
  %v2568 = vunpack.c.l.b16 %v2056
  %v2569 = vunpack.c.l.b16 %v2057
  %v2570 = vunpack.c.l.b16 %v2058
  %v2571 = vunpack.c.l.b16 %v2059
  %v2572 = vunpack.c.l.b16 %v2060
  %v2573 = vunpack.c.l.b16 %v2061
  %v2574 = vunpack.c.l.b16 %v2062
  %v2575 = vunpack.c.l.b16 %v2063
  %v2576 = vunpack.c.l.b16 %v2064
  %v2577 = vunpack.c.l.b16 %v2065
  %v2578 = vunpack.c.l.b16 %v2066
  %v2579 = vunpack.c.l.b16 %v2067
  %v2580 = vunpack.c.l.b16 %v2068
  %v2581 = vunpack.c.l.b16 %v2069
  %v2582 = vunpack.c.l.b16 %v2070
  %v2583 = vunpack.c.l.b16 %v2071
  %v2584 = vunpack.c.l.b16 %v2072
  %v2585 = vunpack.c.l.b16 %v2073
  %v2586 = vunpack.c.l.b16 %v2074
  %v2587 = vunpack.c.l.b16 %v2075
  %v2588 = vunpack.c.l.b16 %v2076
  %v2589 = vunpack.c.l.b16 %v2077
  %v2590 = vunpack.c.l.b16 %v2078
  %v2591 = vunpack.c.l.b16 %v2079
  %v2592 = vunpack.c.l.b16 %v2080
  %v2593 = vunpack.c.l.b16 %v2081
  %v2594 = vunpack.c.l.b16 %v2082
  %v2595 = vunpack.c.l.b16 %v2083
  %v2596 = vunpack.c.l.b16 %v2084
  %v2597 = vpack.c.b16 %v2342, %v2341
  %v2598 = vpack.c.b16 %v2344, %v2343
  %v2599 = vpack.c.b16 %v2346, %v2345
  %v2600 = vpack.c.b16 %v2348, %v2347
  %v2601 = vpack.c.b16 %v2350, %v2349
  %v2602 = vpack.c.b16 %v2352, %v2351
  %v2603 = vpack.c.b16 %v2354, %v2353
  %v2604 = vpack.c.b16 %v2356, %v2355
  %v2605 = vpack.c.b16 %v2358, %v2357
  %v2606 = vpack.c.b16 %v2360, %v2359
  %v2607 = vpack.c.b16 %v2362, %v2361
  %v2608 = vpack.c.b16 %v2364, %v2363
  %v2609 = vpack.c.b16 %v2366, %v2365
  %v2610 = vpack.c.b16 %v2368, %v2367
  %v2611 = vpack.c.b16 %v2370, %v2369
  %v2612 = vpack.c.b16 %v2372, %v2371
  %v2613 = vpack.c.b16 %v2374, %v2373
  %v2614 = vpack.c.b16 %v2376, %v2375
  %v2615 = vpack.c.b16 %v2378, %v2377
  %v2616 = vpack.c.b16 %v2380, %v2379
  %v2617 = vpack.c.b16 %v2382, %v2381
  %v2618 = vpack.c.b16 %v2384, %v2383
  %v2619 = vpack.c.b16 %v2386, %v2385
  %v2620 = vpack.c.b16 %v2388, %v2387
  %v2621 = vpack.c.b16 %v2390, %v2389
  %v2622 = vpack.c.b16 %v2392, %v2391
  %v2623 = vpack.c.b16 %v2394, %v2393
  %v2624 = vpack.c.b16 %v2396, %v2395
  %v2625 = vpack.c.b16 %v2398, %v2397
  %v2626 = vpack.c.b16 %v2400, %v2399
  %v2627 = vpack.c.b16 %v2402, %v2401
  %v2628 = vpack.c.b16 %v2404, %v2403
  %v2629 = vpack.c.b16 %v2406, %v2405
  %v2630 = vpack.c.b16 %v2408, %v2407
  %v2631 = vpack.c.b16 %v2410, %v2409
  %v2632 = vpack.c.b16 %v2412, %v2411
  %v2633 = vpack.c.b16 %v2414, %v2413
  %v2634 = vpack.c.b16 %v2416, %v2415
  %v2635 = vpack.c.b16 %v2418, %v2417
  %v2636 = vpack.c.b16 %v2420, %v2419
  %v2637 = vpack.c.b16 %v2422, %v2421
  %v2638 = vpack.c.b16 %v2424, %v2423
  %v2639 = vpack.c.b16 %v2426, %v2425
  %v2640 = vpack.c.b16 %v2428, %v2427
  %v2641 = vpack.c.b16 %v2430, %v2429
  %v2642 = vpack.c.b16 %v2432, %v2431
  %v2643 = vpack.c.b16 %v2434, %v2433
  %v2644 = vpack.c.b16 %v2436, %v2435
  %v2645 = vpack.c.b16 %v2438, %v2437
  %v2646 = vpack.c.b16 %v2440, %v2439
  %v2647 = vpack.c.b16 %v2442, %v2441
  %v2648 = vpack.c.b16 %v2444, %v2443
  %v2649 = vpack.c.b16 %v2446, %v2445
  %v2650 = vpack.c.b16 %v2448, %v2447
  %v2651 = vpack.c.b16 %v2450, %v2449
  %v2652 = vpack.c.b16 %v2452, %v2451
  %v2653 = vpack.c.b16 %v2454, %v2453
  %v2654 = vpack.c.b16 %v2456, %v2455
  %v2655 = vpack.c.b16 %v2458, %v2457
  %v2656 = vpack.c.b16 %v2460, %v2459
  %v2657 = vpack.c.b16 %v2462, %v2461
  %v2658 = vpack.c.b16 %v2464, %v2463
  %v2659 = vpack.c.b16 %v2466, %v2465
  %v2660 = vpack.c.b16 %v2468, %v2467
  %v2661 = vpack.c.b16 %v2470, %v2469
  %v2662 = vpack.c.b16 %v2472, %v2471
  %v2663 = vpack.c.b16 %v2474, %v2473
  %v2664 = vpack.c.b16 %v2476, %v2475
  %v2665 = vpack.c.b16 %v2478, %v2477
  %v2666 = vpack.c.b16 %v2480, %v2479
  %v2667 = vpack.c.b16 %v2482, %v2481
  %v2668 = vpack.c.b16 %v2484, %v2483
  %v2669 = vpack.c.b16 %v2486, %v2485
  %v2670 = vpack.c.b16 %v2488, %v2487
  %v2671 = vpack.c.b16 %v2490, %v2489
  %v2672 = vpack.c.b16 %v2492, %v2491
  %v2673 = vpack.c.b16 %v2494, %v2493
  %v2674 = vpack.c.b16 %v2496, %v2495
  %v2675 = vpack.c.b16 %v2498, %v2497
  %v2676 = vpack.c.b16 %v2500, %v2499
  %v2677 = vpack.c.b16 %v2502, %v2501
  %v2678 = vpack.c.b16 %v2504, %v2503
  %v2679 = vpack.c.b16 %v2506, %v2505
  %v2680 = vpack.c.b16 %v2508, %v2507
  %v2681 = vpack.c.b16 %v2510, %v2509
  %v2682 = vpack.c.b16 %v2512, %v2511
  %v2683 = vpack.c.b16 %v2514, %v2513
  %v2684 = vpack.c.b16 %v2516, %v2515
  %v2685 = vpack.c.b16 %v2518, %v2517
  %v2686 = vpack.c.b16 %v2520, %v2519
  %v2687 = vpack.c.b16 %v2522, %v2521
  %v2688 = vpack.c.b16 %v2524, %v2523
  %v2689 = vpack.c.b16 %v2526, %v2525
  %v2690 = vpack.c.b16 %v2528, %v2527
  %v2691 = vpack.c.b16 %v2530, %v2529
  %v2692 = vpack.c.b16 %v2532, %v2531
  %v2693 = vpack.c.b16 %v2534, %v2533
  %v2694 = vpack.c.b16 %v2536, %v2535
  %v2695 = vpack.c.b16 %v2538, %v2537
  %v2696 = vpack.c.b16 %v2540, %v2539
  %v2697 = vpack.c.b16 %v2542, %v2541
  %v2698 = vpack.c.b16 %v2544, %v2543
  %v2699 = vpack.c.b16 %v2546, %v2545
  %v2700 = vpack.c.b16 %v2548, %v2547
  %v2701 = vpack.c.b16 %v2550, %v2549
  %v2702 = vpack.c.b16 %v2552, %v2551
  %v2703 = vpack.c.b16 %v2554, %v2553
  %v2704 = vpack.c.b16 %v2556, %v2555
  %v2705 = vpack.c.b16 %v2558, %v2557
  %v2706 = vpack.c.b16 %v2560, %v2559
  %v2707 = vpack.c.b16 %v2562, %v2561
  %v2708 = vpack.c.b16 %v2564, %v2563
  %v2709 = vpack.c.b16 %v2566, %v2565
  %v2710 = vpack.c.b16 %v2568, %v2567
  %v2711 = vpack.c.b16 %v2570, %v2569
  %v2712 = vpack.c.b16 %v2572, %v2571
  %v2713 = vpack.c.b16 %v2574, %v2573
  %v2714 = vpack.c.b16 %v2576, %v2575
  %v2715 = vpack.c.b16 %v2578, %v2577
  %v2716 = vpack.c.b16 %v2580, %v2579
  %v2717 = vpack.c.b16 %v2582, %v2581
  %v2718 = vpack.c.b16 %v2584, %v2583
  %v2719 = vpack.c.b16 %v2586, %v2585
  %v2720 = vpack.c.b16 %v2588, %v2587
  %v2721 = vpack.c.b16 %v2590, %v2589
  %v2722 = vpack.c.b16 %v2592, %v2591
  %v2723 = vpack.c.b16 %v2594, %v2593
  %v2724 = vpack.c.b16 %v2596, %v2595
  %vm2725 = vcmask 126976
  %v2727 = vsel %vm2725, %v2597, 4286644096
  %v2729 = vunpack.i.l.bf16 %v2727
  %v2730 = vunpack.i.h.bf16 %v2727
  %v2731 = vmax.f32 %v2729, %v2730
  %v2732 = vrot.slane %v2731, 4
  %v2733 = vmax.f32 %v2731, %v2732
  %v2734 = vrot.slane %v2733, 2
  %v2735 = vmax.f32 %v2733, %v2734
  %v2736 = vrot.slane %v2735, 1
  %v2737 = vmax.f32 %v2735, %v2736
  %v2738 = vpack.i.bf16 %v2737, %v2737
  %v2740 = vsel %vm2725, %v2598, 4286644096
  %v2742 = vunpack.i.l.bf16 %v2740
  %v2743 = vunpack.i.h.bf16 %v2740
  %v2744 = vmax.f32 %v2742, %v2743
  %v2745 = vrot.slane %v2744, 4
  %v2746 = vmax.f32 %v2744, %v2745
  %v2747 = vrot.slane %v2746, 2
  %v2748 = vmax.f32 %v2746, %v2747
  %v2749 = vrot.slane %v2748, 1
  %v2750 = vmax.f32 %v2748, %v2749
  %v2751 = vpack.i.bf16 %v2750, %v2750
  %v2753 = vsel %vm2725, %v2599, 4286644096
  %v2755 = vunpack.i.l.bf16 %v2753
  %v2756 = vunpack.i.h.bf16 %v2753
  %v2757 = vmax.f32 %v2755, %v2756
  %v2758 = vrot.slane %v2757, 4
  %v2759 = vmax.f32 %v2757, %v2758
  %v2760 = vrot.slane %v2759, 2
  %v2761 = vmax.f32 %v2759, %v2760
  %v2762 = vrot.slane %v2761, 1
  %v2763 = vmax.f32 %v2761, %v2762
  %v2764 = vpack.i.bf16 %v2763, %v2763
  %v2766 = vsel %vm2725, %v2600, 4286644096
  %v2768 = vunpack.i.l.bf16 %v2766
  %v2769 = vunpack.i.h.bf16 %v2766
  %v2770 = vmax.f32 %v2768, %v2769
  %v2771 = vrot.slane %v2770, 4
  %v2772 = vmax.f32 %v2770, %v2771
  %v2773 = vrot.slane %v2772, 2
  %v2774 = vmax.f32 %v2772, %v2773
  %v2775 = vrot.slane %v2774, 1
  %v2776 = vmax.f32 %v2774, %v2775
  %v2777 = vpack.i.bf16 %v2776, %v2776
  %v2779 = vsel %vm2725, %v2601, 4286644096
  %v2781 = vunpack.i.l.bf16 %v2779
  %v2782 = vunpack.i.h.bf16 %v2779
  %v2783 = vmax.f32 %v2781, %v2782
  %v2784 = vrot.slane %v2783, 4
  %v2785 = vmax.f32 %v2783, %v2784
  %v2786 = vrot.slane %v2785, 2
  %v2787 = vmax.f32 %v2785, %v2786
  %v2788 = vrot.slane %v2787, 1
  %v2789 = vmax.f32 %v2787, %v2788
  %v2790 = vpack.i.bf16 %v2789, %v2789
  %v2792 = vsel %vm2725, %v2602, 4286644096
  %v2794 = vunpack.i.l.bf16 %v2792
  %v2795 = vunpack.i.h.bf16 %v2792
  %v2796 = vmax.f32 %v2794, %v2795
  %v2797 = vrot.slane %v2796, 4
  %v2798 = vmax.f32 %v2796, %v2797
  %v2799 = vrot.slane %v2798, 2
  %v2800 = vmax.f32 %v2798, %v2799
  %v2801 = vrot.slane %v2800, 1
  %v2802 = vmax.f32 %v2800, %v2801
  %v2803 = vpack.i.bf16 %v2802, %v2802
  %v2805 = vsel %vm2725, %v2603, 4286644096
  %v2807 = vunpack.i.l.bf16 %v2805
  %v2808 = vunpack.i.h.bf16 %v2805
  %v2809 = vmax.f32 %v2807, %v2808
  %v2810 = vrot.slane %v2809, 4
  %v2811 = vmax.f32 %v2809, %v2810
  %v2812 = vrot.slane %v2811, 2
  %v2813 = vmax.f32 %v2811, %v2812
  %v2814 = vrot.slane %v2813, 1
  %v2815 = vmax.f32 %v2813, %v2814
  %v2816 = vpack.i.bf16 %v2815, %v2815
  %v2818 = vsel %vm2725, %v2604, 4286644096
  %v2820 = vunpack.i.l.bf16 %v2818
  %v2821 = vunpack.i.h.bf16 %v2818
  %v2822 = vmax.f32 %v2820, %v2821
  %v2823 = vrot.slane %v2822, 4
  %v2824 = vmax.f32 %v2822, %v2823
  %v2825 = vrot.slane %v2824, 2
  %v2826 = vmax.f32 %v2824, %v2825
  %v2827 = vrot.slane %v2826, 1
  %v2828 = vmax.f32 %v2826, %v2827
  %v2829 = vpack.i.bf16 %v2828, %v2828
  %v2831 = vsel %vm2725, %v2605, 4286644096
  %v2833 = vunpack.i.l.bf16 %v2831
  %v2834 = vunpack.i.h.bf16 %v2831
  %v2835 = vmax.f32 %v2833, %v2834
  %v2836 = vrot.slane %v2835, 4
  %v2837 = vmax.f32 %v2835, %v2836
  %v2838 = vrot.slane %v2837, 2
  %v2839 = vmax.f32 %v2837, %v2838
  %v2840 = vrot.slane %v2839, 1
  %v2841 = vmax.f32 %v2839, %v2840
  %v2842 = vpack.i.bf16 %v2841, %v2841
  %v2844 = vsel %vm2725, %v2606, 4286644096
  %v2846 = vunpack.i.l.bf16 %v2844
  %v2847 = vunpack.i.h.bf16 %v2844
  %v2848 = vmax.f32 %v2846, %v2847
  %v2849 = vrot.slane %v2848, 4
  %v2850 = vmax.f32 %v2848, %v2849
  %v2851 = vrot.slane %v2850, 2
  %v2852 = vmax.f32 %v2850, %v2851
  %v2853 = vrot.slane %v2852, 1
  %v2854 = vmax.f32 %v2852, %v2853
  %v2855 = vpack.i.bf16 %v2854, %v2854
  %v2857 = vsel %vm2725, %v2607, 4286644096
  %v2859 = vunpack.i.l.bf16 %v2857
  %v2860 = vunpack.i.h.bf16 %v2857
  %v2861 = vmax.f32 %v2859, %v2860
  %v2862 = vrot.slane %v2861, 4
  %v2863 = vmax.f32 %v2861, %v2862
  %v2864 = vrot.slane %v2863, 2
  %v2865 = vmax.f32 %v2863, %v2864
  %v2866 = vrot.slane %v2865, 1
  %v2867 = vmax.f32 %v2865, %v2866
  %v2868 = vpack.i.bf16 %v2867, %v2867
  %v2870 = vsel %vm2725, %v2608, 4286644096
  %v2872 = vunpack.i.l.bf16 %v2870
  %v2873 = vunpack.i.h.bf16 %v2870
  %v2874 = vmax.f32 %v2872, %v2873
  %v2875 = vrot.slane %v2874, 4
  %v2876 = vmax.f32 %v2874, %v2875
  %v2877 = vrot.slane %v2876, 2
  %v2878 = vmax.f32 %v2876, %v2877
  %v2879 = vrot.slane %v2878, 1
  %v2880 = vmax.f32 %v2878, %v2879
  %v2881 = vpack.i.bf16 %v2880, %v2880
  %v2883 = vsel %vm2725, %v2609, 4286644096
  %v2885 = vunpack.i.l.bf16 %v2883
  %v2886 = vunpack.i.h.bf16 %v2883
  %v2887 = vmax.f32 %v2885, %v2886
  %v2888 = vrot.slane %v2887, 4
  %v2889 = vmax.f32 %v2887, %v2888
  %v2890 = vrot.slane %v2889, 2
  %v2891 = vmax.f32 %v2889, %v2890
  %v2892 = vrot.slane %v2891, 1
  %v2893 = vmax.f32 %v2891, %v2892
  %v2894 = vpack.i.bf16 %v2893, %v2893
  %v2896 = vsel %vm2725, %v2610, 4286644096
  %v2898 = vunpack.i.l.bf16 %v2896
  %v2899 = vunpack.i.h.bf16 %v2896
  %v2900 = vmax.f32 %v2898, %v2899
  %v2901 = vrot.slane %v2900, 4
  %v2902 = vmax.f32 %v2900, %v2901
  %v2903 = vrot.slane %v2902, 2
  %v2904 = vmax.f32 %v2902, %v2903
  %v2905 = vrot.slane %v2904, 1
  %v2906 = vmax.f32 %v2904, %v2905
  %v2907 = vpack.i.bf16 %v2906, %v2906
  %v2909 = vsel %vm2725, %v2611, 4286644096
  %v2911 = vunpack.i.l.bf16 %v2909
  %v2912 = vunpack.i.h.bf16 %v2909
  %v2913 = vmax.f32 %v2911, %v2912
  %v2914 = vrot.slane %v2913, 4
  %v2915 = vmax.f32 %v2913, %v2914
  %v2916 = vrot.slane %v2915, 2
  %v2917 = vmax.f32 %v2915, %v2916
  %v2918 = vrot.slane %v2917, 1
  %v2919 = vmax.f32 %v2917, %v2918
  %v2920 = vpack.i.bf16 %v2919, %v2919
  %v2922 = vsel %vm2725, %v2612, 4286644096
  %v2924 = vunpack.i.l.bf16 %v2922
  %v2925 = vunpack.i.h.bf16 %v2922
  %v2926 = vmax.f32 %v2924, %v2925
  %v2927 = vrot.slane %v2926, 4
  %v2928 = vmax.f32 %v2926, %v2927
  %v2929 = vrot.slane %v2928, 2
  %v2930 = vmax.f32 %v2928, %v2929
  %v2931 = vrot.slane %v2930, 1
  %v2932 = vmax.f32 %v2930, %v2931
  %v2933 = vpack.i.bf16 %v2932, %v2932
  %v2935 = vsel %vm2725, %v2613, 4286644096
  %v2937 = vunpack.i.l.bf16 %v2935
  %v2938 = vunpack.i.h.bf16 %v2935
  %v2939 = vmax.f32 %v2937, %v2938
  %v2940 = vrot.slane %v2939, 4
  %v2941 = vmax.f32 %v2939, %v2940
  %v2942 = vrot.slane %v2941, 2
  %v2943 = vmax.f32 %v2941, %v2942
  %v2944 = vrot.slane %v2943, 1
  %v2945 = vmax.f32 %v2943, %v2944
  %v2946 = vpack.i.bf16 %v2945, %v2945
  %v2948 = vsel %vm2725, %v2614, 4286644096
  %v2950 = vunpack.i.l.bf16 %v2948
  %v2951 = vunpack.i.h.bf16 %v2948
  %v2952 = vmax.f32 %v2950, %v2951
  %v2953 = vrot.slane %v2952, 4
  %v2954 = vmax.f32 %v2952, %v2953
  %v2955 = vrot.slane %v2954, 2
  %v2956 = vmax.f32 %v2954, %v2955
  %v2957 = vrot.slane %v2956, 1
  %v2958 = vmax.f32 %v2956, %v2957
  %v2959 = vpack.i.bf16 %v2958, %v2958
  %v2961 = vsel %vm2725, %v2615, 4286644096
  %v2963 = vunpack.i.l.bf16 %v2961
  %v2964 = vunpack.i.h.bf16 %v2961
  %v2965 = vmax.f32 %v2963, %v2964
  %v2966 = vrot.slane %v2965, 4
  %v2967 = vmax.f32 %v2965, %v2966
  %v2968 = vrot.slane %v2967, 2
  %v2969 = vmax.f32 %v2967, %v2968
  %v2970 = vrot.slane %v2969, 1
  %v2971 = vmax.f32 %v2969, %v2970
  %v2972 = vpack.i.bf16 %v2971, %v2971
  %v2974 = vsel %vm2725, %v2616, 4286644096
  %v2976 = vunpack.i.l.bf16 %v2974
  %v2977 = vunpack.i.h.bf16 %v2974
  %v2978 = vmax.f32 %v2976, %v2977
  %v2979 = vrot.slane %v2978, 4
  %v2980 = vmax.f32 %v2978, %v2979
  %v2981 = vrot.slane %v2980, 2
  %v2982 = vmax.f32 %v2980, %v2981
  %v2983 = vrot.slane %v2982, 1
  %v2984 = vmax.f32 %v2982, %v2983
  %v2985 = vpack.i.bf16 %v2984, %v2984
  %v2987 = vsel %vm2725, %v2617, 4286644096
  %v2989 = vunpack.i.l.bf16 %v2987
  %v2990 = vunpack.i.h.bf16 %v2987
  %v2991 = vmax.f32 %v2989, %v2990
  %v2992 = vrot.slane %v2991, 4
  %v2993 = vmax.f32 %v2991, %v2992
  %v2994 = vrot.slane %v2993, 2
  %v2995 = vmax.f32 %v2993, %v2994
  %v2996 = vrot.slane %v2995, 1
  %v2997 = vmax.f32 %v2995, %v2996
  %v2998 = vpack.i.bf16 %v2997, %v2997
  %v3000 = vsel %vm2725, %v2618, 4286644096
  %v3002 = vunpack.i.l.bf16 %v3000
  %v3003 = vunpack.i.h.bf16 %v3000
  %v3004 = vmax.f32 %v3002, %v3003
  %v3005 = vrot.slane %v3004, 4
  %v3006 = vmax.f32 %v3004, %v3005
  %v3007 = vrot.slane %v3006, 2
  %v3008 = vmax.f32 %v3006, %v3007
  %v3009 = vrot.slane %v3008, 1
  %v3010 = vmax.f32 %v3008, %v3009
  %v3011 = vpack.i.bf16 %v3010, %v3010
  %v3013 = vsel %vm2725, %v2619, 4286644096
  %v3015 = vunpack.i.l.bf16 %v3013
  %v3016 = vunpack.i.h.bf16 %v3013
  %v3017 = vmax.f32 %v3015, %v3016
  %v3018 = vrot.slane %v3017, 4
  %v3019 = vmax.f32 %v3017, %v3018
  %v3020 = vrot.slane %v3019, 2
  %v3021 = vmax.f32 %v3019, %v3020
  %v3022 = vrot.slane %v3021, 1
  %v3023 = vmax.f32 %v3021, %v3022
  %v3024 = vpack.i.bf16 %v3023, %v3023
  %v3026 = vsel %vm2725, %v2620, 4286644096
  %v3028 = vunpack.i.l.bf16 %v3026
  %v3029 = vunpack.i.h.bf16 %v3026
  %v3030 = vmax.f32 %v3028, %v3029
  %v3031 = vrot.slane %v3030, 4
  %v3032 = vmax.f32 %v3030, %v3031
  %v3033 = vrot.slane %v3032, 2
  %v3034 = vmax.f32 %v3032, %v3033
  %v3035 = vrot.slane %v3034, 1
  %v3036 = vmax.f32 %v3034, %v3035
  %v3037 = vpack.i.bf16 %v3036, %v3036
  %v3039 = vsel %vm2725, %v2621, 4286644096
  %v3041 = vunpack.i.l.bf16 %v3039
  %v3042 = vunpack.i.h.bf16 %v3039
  %v3043 = vmax.f32 %v3041, %v3042
  %v3044 = vrot.slane %v3043, 4
  %v3045 = vmax.f32 %v3043, %v3044
  %v3046 = vrot.slane %v3045, 2
  %v3047 = vmax.f32 %v3045, %v3046
  %v3048 = vrot.slane %v3047, 1
  %v3049 = vmax.f32 %v3047, %v3048
  %v3050 = vpack.i.bf16 %v3049, %v3049
  %v3052 = vsel %vm2725, %v2622, 4286644096
  %v3054 = vunpack.i.l.bf16 %v3052
  %v3055 = vunpack.i.h.bf16 %v3052
  %v3056 = vmax.f32 %v3054, %v3055
  %v3057 = vrot.slane %v3056, 4
  %v3058 = vmax.f32 %v3056, %v3057
  %v3059 = vrot.slane %v3058, 2
  %v3060 = vmax.f32 %v3058, %v3059
  %v3061 = vrot.slane %v3060, 1
  %v3062 = vmax.f32 %v3060, %v3061
  %v3063 = vpack.i.bf16 %v3062, %v3062
  %v3065 = vsel %vm2725, %v2623, 4286644096
  %v3067 = vunpack.i.l.bf16 %v3065
  %v3068 = vunpack.i.h.bf16 %v3065
  %v3069 = vmax.f32 %v3067, %v3068
  %v3070 = vrot.slane %v3069, 4
  %v3071 = vmax.f32 %v3069, %v3070
  %v3072 = vrot.slane %v3071, 2
  %v3073 = vmax.f32 %v3071, %v3072
  %v3074 = vrot.slane %v3073, 1
  %v3075 = vmax.f32 %v3073, %v3074
  %v3076 = vpack.i.bf16 %v3075, %v3075
  %v3078 = vsel %vm2725, %v2624, 4286644096
  %v3080 = vunpack.i.l.bf16 %v3078
  %v3081 = vunpack.i.h.bf16 %v3078
  %v3082 = vmax.f32 %v3080, %v3081
  %v3083 = vrot.slane %v3082, 4
  %v3084 = vmax.f32 %v3082, %v3083
  %v3085 = vrot.slane %v3084, 2
  %v3086 = vmax.f32 %v3084, %v3085
  %v3087 = vrot.slane %v3086, 1
  %v3088 = vmax.f32 %v3086, %v3087
  %v3089 = vpack.i.bf16 %v3088, %v3088
  %v3091 = vsel %vm2725, %v2625, 4286644096
  %v3093 = vunpack.i.l.bf16 %v3091
  %v3094 = vunpack.i.h.bf16 %v3091
  %v3095 = vmax.f32 %v3093, %v3094
  %v3096 = vrot.slane %v3095, 4
  %v3097 = vmax.f32 %v3095, %v3096
  %v3098 = vrot.slane %v3097, 2
  %v3099 = vmax.f32 %v3097, %v3098
  %v3100 = vrot.slane %v3099, 1
  %v3101 = vmax.f32 %v3099, %v3100
  %v3102 = vpack.i.bf16 %v3101, %v3101
  %v3104 = vsel %vm2725, %v2626, 4286644096
  %v3106 = vunpack.i.l.bf16 %v3104
  %v3107 = vunpack.i.h.bf16 %v3104
  %v3108 = vmax.f32 %v3106, %v3107
  %v3109 = vrot.slane %v3108, 4
  %v3110 = vmax.f32 %v3108, %v3109
  %v3111 = vrot.slane %v3110, 2
  %v3112 = vmax.f32 %v3110, %v3111
  %v3113 = vrot.slane %v3112, 1
  %v3114 = vmax.f32 %v3112, %v3113
  %v3115 = vpack.i.bf16 %v3114, %v3114
  %v3117 = vsel %vm2725, %v2627, 4286644096
  %v3119 = vunpack.i.l.bf16 %v3117
  %v3120 = vunpack.i.h.bf16 %v3117
  %v3121 = vmax.f32 %v3119, %v3120
  %v3122 = vrot.slane %v3121, 4
  %v3123 = vmax.f32 %v3121, %v3122
  %v3124 = vrot.slane %v3123, 2
  %v3125 = vmax.f32 %v3123, %v3124
  %v3126 = vrot.slane %v3125, 1
  %v3127 = vmax.f32 %v3125, %v3126
  %v3128 = vpack.i.bf16 %v3127, %v3127
  %v3130 = vsel %vm2725, %v2628, 4286644096
  %v3132 = vunpack.i.l.bf16 %v3130
  %v3133 = vunpack.i.h.bf16 %v3130
  %v3134 = vmax.f32 %v3132, %v3133
  %v3135 = vrot.slane %v3134, 4
  %v3136 = vmax.f32 %v3134, %v3135
  %v3137 = vrot.slane %v3136, 2
  %v3138 = vmax.f32 %v3136, %v3137
  %v3139 = vrot.slane %v3138, 1
  %v3140 = vmax.f32 %v3138, %v3139
  %v3141 = vpack.i.bf16 %v3140, %v3140
  %v3143 = vsel %vm2725, %v2629, 4286644096
  %v3145 = vunpack.i.l.bf16 %v3143
  %v3146 = vunpack.i.h.bf16 %v3143
  %v3147 = vmax.f32 %v3145, %v3146
  %v3148 = vrot.slane %v3147, 4
  %v3149 = vmax.f32 %v3147, %v3148
  %v3150 = vrot.slane %v3149, 2
  %v3151 = vmax.f32 %v3149, %v3150
  %v3152 = vrot.slane %v3151, 1
  %v3153 = vmax.f32 %v3151, %v3152
  %v3154 = vpack.i.bf16 %v3153, %v3153
  %v3156 = vsel %vm2725, %v2630, 4286644096
  %v3158 = vunpack.i.l.bf16 %v3156
  %v3159 = vunpack.i.h.bf16 %v3156
  %v3160 = vmax.f32 %v3158, %v3159
  %v3161 = vrot.slane %v3160, 4
  %v3162 = vmax.f32 %v3160, %v3161
  %v3163 = vrot.slane %v3162, 2
  %v3164 = vmax.f32 %v3162, %v3163
  %v3165 = vrot.slane %v3164, 1
  %v3166 = vmax.f32 %v3164, %v3165
  %v3167 = vpack.i.bf16 %v3166, %v3166
  %v3169 = vsel %vm2725, %v2631, 4286644096
  %v3171 = vunpack.i.l.bf16 %v3169
  %v3172 = vunpack.i.h.bf16 %v3169
  %v3173 = vmax.f32 %v3171, %v3172
  %v3174 = vrot.slane %v3173, 4
  %v3175 = vmax.f32 %v3173, %v3174
  %v3176 = vrot.slane %v3175, 2
  %v3177 = vmax.f32 %v3175, %v3176
  %v3178 = vrot.slane %v3177, 1
  %v3179 = vmax.f32 %v3177, %v3178
  %v3180 = vpack.i.bf16 %v3179, %v3179
  %v3182 = vsel %vm2725, %v2632, 4286644096
  %v3184 = vunpack.i.l.bf16 %v3182
  %v3185 = vunpack.i.h.bf16 %v3182
  %v3186 = vmax.f32 %v3184, %v3185
  %v3187 = vrot.slane %v3186, 4
  %v3188 = vmax.f32 %v3186, %v3187
  %v3189 = vrot.slane %v3188, 2
  %v3190 = vmax.f32 %v3188, %v3189
  %v3191 = vrot.slane %v3190, 1
  %v3192 = vmax.f32 %v3190, %v3191
  %v3193 = vpack.i.bf16 %v3192, %v3192
  %v3195 = vsel %vm2725, %v2633, 4286644096
  %v3197 = vunpack.i.l.bf16 %v3195
  %v3198 = vunpack.i.h.bf16 %v3195
  %v3199 = vmax.f32 %v3197, %v3198
  %v3200 = vrot.slane %v3199, 4
  %v3201 = vmax.f32 %v3199, %v3200
  %v3202 = vrot.slane %v3201, 2
  %v3203 = vmax.f32 %v3201, %v3202
  %v3204 = vrot.slane %v3203, 1
  %v3205 = vmax.f32 %v3203, %v3204
  %v3206 = vpack.i.bf16 %v3205, %v3205
  %v3208 = vsel %vm2725, %v2634, 4286644096
  %v3210 = vunpack.i.l.bf16 %v3208
  %v3211 = vunpack.i.h.bf16 %v3208
  %v3212 = vmax.f32 %v3210, %v3211
  %v3213 = vrot.slane %v3212, 4
  %v3214 = vmax.f32 %v3212, %v3213
  %v3215 = vrot.slane %v3214, 2
  %v3216 = vmax.f32 %v3214, %v3215
  %v3217 = vrot.slane %v3216, 1
  %v3218 = vmax.f32 %v3216, %v3217
  %v3219 = vpack.i.bf16 %v3218, %v3218
  %v3221 = vsel %vm2725, %v2635, 4286644096
  %v3223 = vunpack.i.l.bf16 %v3221
  %v3224 = vunpack.i.h.bf16 %v3221
  %v3225 = vmax.f32 %v3223, %v3224
  %v3226 = vrot.slane %v3225, 4
  %v3227 = vmax.f32 %v3225, %v3226
  %v3228 = vrot.slane %v3227, 2
  %v3229 = vmax.f32 %v3227, %v3228
  %v3230 = vrot.slane %v3229, 1
  %v3231 = vmax.f32 %v3229, %v3230
  %v3232 = vpack.i.bf16 %v3231, %v3231
  %v3234 = vsel %vm2725, %v2636, 4286644096
  %v3236 = vunpack.i.l.bf16 %v3234
  %v3237 = vunpack.i.h.bf16 %v3234
  %v3238 = vmax.f32 %v3236, %v3237
  %v3239 = vrot.slane %v3238, 4
  %v3240 = vmax.f32 %v3238, %v3239
  %v3241 = vrot.slane %v3240, 2
  %v3242 = vmax.f32 %v3240, %v3241
  %v3243 = vrot.slane %v3242, 1
  %v3244 = vmax.f32 %v3242, %v3243
  %v3245 = vpack.i.bf16 %v3244, %v3244
  %v3247 = vsel %vm2725, %v2637, 4286644096
  %v3249 = vunpack.i.l.bf16 %v3247
  %v3250 = vunpack.i.h.bf16 %v3247
  %v3251 = vmax.f32 %v3249, %v3250
  %v3252 = vrot.slane %v3251, 4
  %v3253 = vmax.f32 %v3251, %v3252
  %v3254 = vrot.slane %v3253, 2
  %v3255 = vmax.f32 %v3253, %v3254
  %v3256 = vrot.slane %v3255, 1
  %v3257 = vmax.f32 %v3255, %v3256
  %v3258 = vpack.i.bf16 %v3257, %v3257
  %v3260 = vsel %vm2725, %v2638, 4286644096
  %v3262 = vunpack.i.l.bf16 %v3260
  %v3263 = vunpack.i.h.bf16 %v3260
  %v3264 = vmax.f32 %v3262, %v3263
  %v3265 = vrot.slane %v3264, 4
  %v3266 = vmax.f32 %v3264, %v3265
  %v3267 = vrot.slane %v3266, 2
  %v3268 = vmax.f32 %v3266, %v3267
  %v3269 = vrot.slane %v3268, 1
  %v3270 = vmax.f32 %v3268, %v3269
  %v3271 = vpack.i.bf16 %v3270, %v3270
  %v3273 = vsel %vm2725, %v2639, 4286644096
  %v3275 = vunpack.i.l.bf16 %v3273
  %v3276 = vunpack.i.h.bf16 %v3273
  %v3277 = vmax.f32 %v3275, %v3276
  %v3278 = vrot.slane %v3277, 4
  %v3279 = vmax.f32 %v3277, %v3278
  %v3280 = vrot.slane %v3279, 2
  %v3281 = vmax.f32 %v3279, %v3280
  %v3282 = vrot.slane %v3281, 1
  %v3283 = vmax.f32 %v3281, %v3282
  %v3284 = vpack.i.bf16 %v3283, %v3283
  %v3286 = vsel %vm2725, %v2640, 4286644096
  %v3288 = vunpack.i.l.bf16 %v3286
  %v3289 = vunpack.i.h.bf16 %v3286
  %v3290 = vmax.f32 %v3288, %v3289
  %v3291 = vrot.slane %v3290, 4
  %v3292 = vmax.f32 %v3290, %v3291
  %v3293 = vrot.slane %v3292, 2
  %v3294 = vmax.f32 %v3292, %v3293
  %v3295 = vrot.slane %v3294, 1
  %v3296 = vmax.f32 %v3294, %v3295
  %v3297 = vpack.i.bf16 %v3296, %v3296
  %v3299 = vsel %vm2725, %v2641, 4286644096
  %v3301 = vunpack.i.l.bf16 %v3299
  %v3302 = vunpack.i.h.bf16 %v3299
  %v3303 = vmax.f32 %v3301, %v3302
  %v3304 = vrot.slane %v3303, 4
  %v3305 = vmax.f32 %v3303, %v3304
  %v3306 = vrot.slane %v3305, 2
  %v3307 = vmax.f32 %v3305, %v3306
  %v3308 = vrot.slane %v3307, 1
  %v3309 = vmax.f32 %v3307, %v3308
  %v3310 = vpack.i.bf16 %v3309, %v3309
  %v3312 = vsel %vm2725, %v2642, 4286644096
  %v3314 = vunpack.i.l.bf16 %v3312
  %v3315 = vunpack.i.h.bf16 %v3312
  %v3316 = vmax.f32 %v3314, %v3315
  %v3317 = vrot.slane %v3316, 4
  %v3318 = vmax.f32 %v3316, %v3317
  %v3319 = vrot.slane %v3318, 2
  %v3320 = vmax.f32 %v3318, %v3319
  %v3321 = vrot.slane %v3320, 1
  %v3322 = vmax.f32 %v3320, %v3321
  %v3323 = vpack.i.bf16 %v3322, %v3322
  %v3325 = vsel %vm2725, %v2643, 4286644096
  %v3327 = vunpack.i.l.bf16 %v3325
  %v3328 = vunpack.i.h.bf16 %v3325
  %v3329 = vmax.f32 %v3327, %v3328
  %v3330 = vrot.slane %v3329, 4
  %v3331 = vmax.f32 %v3329, %v3330
  %v3332 = vrot.slane %v3331, 2
  %v3333 = vmax.f32 %v3331, %v3332
  %v3334 = vrot.slane %v3333, 1
  %v3335 = vmax.f32 %v3333, %v3334
  %v3336 = vpack.i.bf16 %v3335, %v3335
  %v3338 = vsel %vm2725, %v2644, 4286644096
  %v3340 = vunpack.i.l.bf16 %v3338
  %v3341 = vunpack.i.h.bf16 %v3338
  %v3342 = vmax.f32 %v3340, %v3341
  %v3343 = vrot.slane %v3342, 4
  %v3344 = vmax.f32 %v3342, %v3343
  %v3345 = vrot.slane %v3344, 2
  %v3346 = vmax.f32 %v3344, %v3345
  %v3347 = vrot.slane %v3346, 1
  %v3348 = vmax.f32 %v3346, %v3347
  %v3349 = vpack.i.bf16 %v3348, %v3348
  %v3351 = vsel %vm2725, %v2645, 4286644096
  %v3353 = vunpack.i.l.bf16 %v3351
  %v3354 = vunpack.i.h.bf16 %v3351
  %v3355 = vmax.f32 %v3353, %v3354
  %v3356 = vrot.slane %v3355, 4
  %v3357 = vmax.f32 %v3355, %v3356
  %v3358 = vrot.slane %v3357, 2
  %v3359 = vmax.f32 %v3357, %v3358
  %v3360 = vrot.slane %v3359, 1
  %v3361 = vmax.f32 %v3359, %v3360
  %v3362 = vpack.i.bf16 %v3361, %v3361
  %v3364 = vsel %vm2725, %v2646, 4286644096
  %v3366 = vunpack.i.l.bf16 %v3364
  %v3367 = vunpack.i.h.bf16 %v3364
  %v3368 = vmax.f32 %v3366, %v3367
  %v3369 = vrot.slane %v3368, 4
  %v3370 = vmax.f32 %v3368, %v3369
  %v3371 = vrot.slane %v3370, 2
  %v3372 = vmax.f32 %v3370, %v3371
  %v3373 = vrot.slane %v3372, 1
  %v3374 = vmax.f32 %v3372, %v3373
  %v3375 = vpack.i.bf16 %v3374, %v3374
  %v3377 = vsel %vm2725, %v2647, 4286644096
  %v3379 = vunpack.i.l.bf16 %v3377
  %v3380 = vunpack.i.h.bf16 %v3377
  %v3381 = vmax.f32 %v3379, %v3380
  %v3382 = vrot.slane %v3381, 4
  %v3383 = vmax.f32 %v3381, %v3382
  %v3384 = vrot.slane %v3383, 2
  %v3385 = vmax.f32 %v3383, %v3384
  %v3386 = vrot.slane %v3385, 1
  %v3387 = vmax.f32 %v3385, %v3386
  %v3388 = vpack.i.bf16 %v3387, %v3387
  %v3390 = vsel %vm2725, %v2648, 4286644096
  %v3392 = vunpack.i.l.bf16 %v3390
  %v3393 = vunpack.i.h.bf16 %v3390
  %v3394 = vmax.f32 %v3392, %v3393
  %v3395 = vrot.slane %v3394, 4
  %v3396 = vmax.f32 %v3394, %v3395
  %v3397 = vrot.slane %v3396, 2
  %v3398 = vmax.f32 %v3396, %v3397
  %v3399 = vrot.slane %v3398, 1
  %v3400 = vmax.f32 %v3398, %v3399
  %v3401 = vpack.i.bf16 %v3400, %v3400
  %v3403 = vsel %vm2725, %v2649, 4286644096
  %v3405 = vunpack.i.l.bf16 %v3403
  %v3406 = vunpack.i.h.bf16 %v3403
  %v3407 = vmax.f32 %v3405, %v3406
  %v3408 = vrot.slane %v3407, 4
  %v3409 = vmax.f32 %v3407, %v3408
  %v3410 = vrot.slane %v3409, 2
  %v3411 = vmax.f32 %v3409, %v3410
  %v3412 = vrot.slane %v3411, 1
  %v3413 = vmax.f32 %v3411, %v3412
  %v3414 = vpack.i.bf16 %v3413, %v3413
  %v3416 = vsel %vm2725, %v2650, 4286644096
  %v3418 = vunpack.i.l.bf16 %v3416
  %v3419 = vunpack.i.h.bf16 %v3416
  %v3420 = vmax.f32 %v3418, %v3419
  %v3421 = vrot.slane %v3420, 4
  %v3422 = vmax.f32 %v3420, %v3421
  %v3423 = vrot.slane %v3422, 2
  %v3424 = vmax.f32 %v3422, %v3423
  %v3425 = vrot.slane %v3424, 1
  %v3426 = vmax.f32 %v3424, %v3425
  %v3427 = vpack.i.bf16 %v3426, %v3426
  %v3429 = vsel %vm2725, %v2651, 4286644096
  %v3431 = vunpack.i.l.bf16 %v3429
  %v3432 = vunpack.i.h.bf16 %v3429
  %v3433 = vmax.f32 %v3431, %v3432
  %v3434 = vrot.slane %v3433, 4
  %v3435 = vmax.f32 %v3433, %v3434
  %v3436 = vrot.slane %v3435, 2
  %v3437 = vmax.f32 %v3435, %v3436
  %v3438 = vrot.slane %v3437, 1
  %v3439 = vmax.f32 %v3437, %v3438
  %v3440 = vpack.i.bf16 %v3439, %v3439
  %v3442 = vsel %vm2725, %v2652, 4286644096
  %v3444 = vunpack.i.l.bf16 %v3442
  %v3445 = vunpack.i.h.bf16 %v3442
  %v3446 = vmax.f32 %v3444, %v3445
  %v3447 = vrot.slane %v3446, 4
  %v3448 = vmax.f32 %v3446, %v3447
  %v3449 = vrot.slane %v3448, 2
  %v3450 = vmax.f32 %v3448, %v3449
  %v3451 = vrot.slane %v3450, 1
  %v3452 = vmax.f32 %v3450, %v3451
  %v3453 = vpack.i.bf16 %v3452, %v3452
  %v3455 = vsel %vm2725, %v2653, 4286644096
  %v3457 = vunpack.i.l.bf16 %v3455
  %v3458 = vunpack.i.h.bf16 %v3455
  %v3459 = vmax.f32 %v3457, %v3458
  %v3460 = vrot.slane %v3459, 4
  %v3461 = vmax.f32 %v3459, %v3460
  %v3462 = vrot.slane %v3461, 2
  %v3463 = vmax.f32 %v3461, %v3462
  %v3464 = vrot.slane %v3463, 1
  %v3465 = vmax.f32 %v3463, %v3464
  %v3466 = vpack.i.bf16 %v3465, %v3465
  %v3468 = vsel %vm2725, %v2654, 4286644096
  %v3470 = vunpack.i.l.bf16 %v3468
  %v3471 = vunpack.i.h.bf16 %v3468
  %v3472 = vmax.f32 %v3470, %v3471
  %v3473 = vrot.slane %v3472, 4
  %v3474 = vmax.f32 %v3472, %v3473
  %v3475 = vrot.slane %v3474, 2
  %v3476 = vmax.f32 %v3474, %v3475
  %v3477 = vrot.slane %v3476, 1
  %v3478 = vmax.f32 %v3476, %v3477
  %v3479 = vpack.i.bf16 %v3478, %v3478
  %v3481 = vsel %vm2725, %v2655, 4286644096
  %v3483 = vunpack.i.l.bf16 %v3481
  %v3484 = vunpack.i.h.bf16 %v3481
  %v3485 = vmax.f32 %v3483, %v3484
  %v3486 = vrot.slane %v3485, 4
  %v3487 = vmax.f32 %v3485, %v3486
  %v3488 = vrot.slane %v3487, 2
  %v3489 = vmax.f32 %v3487, %v3488
  %v3490 = vrot.slane %v3489, 1
  %v3491 = vmax.f32 %v3489, %v3490
  %v3492 = vpack.i.bf16 %v3491, %v3491
  %v3494 = vsel %vm2725, %v2656, 4286644096
  %v3496 = vunpack.i.l.bf16 %v3494
  %v3497 = vunpack.i.h.bf16 %v3494
  %v3498 = vmax.f32 %v3496, %v3497
  %v3499 = vrot.slane %v3498, 4
  %v3500 = vmax.f32 %v3498, %v3499
  %v3501 = vrot.slane %v3500, 2
  %v3502 = vmax.f32 %v3500, %v3501
  %v3503 = vrot.slane %v3502, 1
  %v3504 = vmax.f32 %v3502, %v3503
  %v3505 = vpack.i.bf16 %v3504, %v3504
  %v3507 = vsel %vm2725, %v2657, 4286644096
  %v3509 = vunpack.i.l.bf16 %v3507
  %v3510 = vunpack.i.h.bf16 %v3507
  %v3511 = vmax.f32 %v3509, %v3510
  %v3512 = vrot.slane %v3511, 4
  %v3513 = vmax.f32 %v3511, %v3512
  %v3514 = vrot.slane %v3513, 2
  %v3515 = vmax.f32 %v3513, %v3514
  %v3516 = vrot.slane %v3515, 1
  %v3517 = vmax.f32 %v3515, %v3516
  %v3518 = vpack.i.bf16 %v3517, %v3517
  %v3520 = vsel %vm2725, %v2658, 4286644096
  %v3522 = vunpack.i.l.bf16 %v3520
  %v3523 = vunpack.i.h.bf16 %v3520
  %v3524 = vmax.f32 %v3522, %v3523
  %v3525 = vrot.slane %v3524, 4
  %v3526 = vmax.f32 %v3524, %v3525
  %v3527 = vrot.slane %v3526, 2
  %v3528 = vmax.f32 %v3526, %v3527
  %v3529 = vrot.slane %v3528, 1
  %v3530 = vmax.f32 %v3528, %v3529
  %v3531 = vpack.i.bf16 %v3530, %v3530
  %v3533 = vsel %vm2725, %v2659, 4286644096
  %v3535 = vunpack.i.l.bf16 %v3533
  %v3536 = vunpack.i.h.bf16 %v3533
  %v3537 = vmax.f32 %v3535, %v3536
  %v3538 = vrot.slane %v3537, 4
  %v3539 = vmax.f32 %v3537, %v3538
  %v3540 = vrot.slane %v3539, 2
  %v3541 = vmax.f32 %v3539, %v3540
  %v3542 = vrot.slane %v3541, 1
  %v3543 = vmax.f32 %v3541, %v3542
  %v3544 = vpack.i.bf16 %v3543, %v3543
  %v3546 = vsel %vm2725, %v2660, 4286644096
  %v3548 = vunpack.i.l.bf16 %v3546
  %v3549 = vunpack.i.h.bf16 %v3546
  %v3550 = vmax.f32 %v3548, %v3549
  %v3551 = vrot.slane %v3550, 4
  %v3552 = vmax.f32 %v3550, %v3551
  %v3553 = vrot.slane %v3552, 2
  %v3554 = vmax.f32 %v3552, %v3553
  %v3555 = vrot.slane %v3554, 1
  %v3556 = vmax.f32 %v3554, %v3555
  %v3557 = vpack.i.bf16 %v3556, %v3556
  %v3559 = vsel %vm2725, %v2661, 4286644096
  %v3561 = vunpack.i.l.bf16 %v3559
  %v3562 = vunpack.i.h.bf16 %v3559
  %v3563 = vmax.f32 %v3561, %v3562
  %v3564 = vrot.slane %v3563, 4
  %v3565 = vmax.f32 %v3563, %v3564
  %v3566 = vrot.slane %v3565, 2
  %v3567 = vmax.f32 %v3565, %v3566
  %v3568 = vrot.slane %v3567, 1
  %v3569 = vmax.f32 %v3567, %v3568
  %v3570 = vpack.i.bf16 %v3569, %v3569
  %v3572 = vsel %vm2725, %v2662, 4286644096
  %v3574 = vunpack.i.l.bf16 %v3572
  %v3575 = vunpack.i.h.bf16 %v3572
  %v3576 = vmax.f32 %v3574, %v3575
  %v3577 = vrot.slane %v3576, 4
  %v3578 = vmax.f32 %v3576, %v3577
  %v3579 = vrot.slane %v3578, 2
  %v3580 = vmax.f32 %v3578, %v3579
  %v3581 = vrot.slane %v3580, 1
  %v3582 = vmax.f32 %v3580, %v3581
  %v3583 = vpack.i.bf16 %v3582, %v3582
  %v3585 = vsel %vm2725, %v2663, 4286644096
  %v3587 = vunpack.i.l.bf16 %v3585
  %v3588 = vunpack.i.h.bf16 %v3585
  %v3589 = vmax.f32 %v3587, %v3588
  %v3590 = vrot.slane %v3589, 4
  %v3591 = vmax.f32 %v3589, %v3590
  %v3592 = vrot.slane %v3591, 2
  %v3593 = vmax.f32 %v3591, %v3592
  %v3594 = vrot.slane %v3593, 1
  %v3595 = vmax.f32 %v3593, %v3594
  %v3596 = vpack.i.bf16 %v3595, %v3595
  %v3598 = vsel %vm2725, %v2664, 4286644096
  %v3600 = vunpack.i.l.bf16 %v3598
  %v3601 = vunpack.i.h.bf16 %v3598
  %v3602 = vmax.f32 %v3600, %v3601
  %v3603 = vrot.slane %v3602, 4
  %v3604 = vmax.f32 %v3602, %v3603
  %v3605 = vrot.slane %v3604, 2
  %v3606 = vmax.f32 %v3604, %v3605
  %v3607 = vrot.slane %v3606, 1
  %v3608 = vmax.f32 %v3606, %v3607
  %v3609 = vpack.i.bf16 %v3608, %v3608
  %v3611 = vsel %vm2725, %v2665, 4286644096
  %v3613 = vunpack.i.l.bf16 %v3611
  %v3614 = vunpack.i.h.bf16 %v3611
  %v3615 = vmax.f32 %v3613, %v3614
  %v3616 = vrot.slane %v3615, 4
  %v3617 = vmax.f32 %v3615, %v3616
  %v3618 = vrot.slane %v3617, 2
  %v3619 = vmax.f32 %v3617, %v3618
  %v3620 = vrot.slane %v3619, 1
  %v3621 = vmax.f32 %v3619, %v3620
  %v3622 = vpack.i.bf16 %v3621, %v3621
  %v3624 = vsel %vm2725, %v2666, 4286644096
  %v3626 = vunpack.i.l.bf16 %v3624
  %v3627 = vunpack.i.h.bf16 %v3624
  %v3628 = vmax.f32 %v3626, %v3627
  %v3629 = vrot.slane %v3628, 4
  %v3630 = vmax.f32 %v3628, %v3629
  %v3631 = vrot.slane %v3630, 2
  %v3632 = vmax.f32 %v3630, %v3631
  %v3633 = vrot.slane %v3632, 1
  %v3634 = vmax.f32 %v3632, %v3633
  %v3635 = vpack.i.bf16 %v3634, %v3634
  %v3637 = vsel %vm2725, %v2667, 4286644096
  %v3639 = vunpack.i.l.bf16 %v3637
  %v3640 = vunpack.i.h.bf16 %v3637
  %v3641 = vmax.f32 %v3639, %v3640
  %v3642 = vrot.slane %v3641, 4
  %v3643 = vmax.f32 %v3641, %v3642
  %v3644 = vrot.slane %v3643, 2
  %v3645 = vmax.f32 %v3643, %v3644
  %v3646 = vrot.slane %v3645, 1
  %v3647 = vmax.f32 %v3645, %v3646
  %v3648 = vpack.i.bf16 %v3647, %v3647
  %v3650 = vsel %vm2725, %v2668, 4286644096
  %v3652 = vunpack.i.l.bf16 %v3650
  %v3653 = vunpack.i.h.bf16 %v3650
  %v3654 = vmax.f32 %v3652, %v3653
  %v3655 = vrot.slane %v3654, 4
  %v3656 = vmax.f32 %v3654, %v3655
  %v3657 = vrot.slane %v3656, 2
  %v3658 = vmax.f32 %v3656, %v3657
  %v3659 = vrot.slane %v3658, 1
  %v3660 = vmax.f32 %v3658, %v3659
  %v3661 = vpack.i.bf16 %v3660, %v3660
  %v3663 = vsel %vm2725, %v2669, 4286644096
  %v3665 = vunpack.i.l.bf16 %v3663
  %v3666 = vunpack.i.h.bf16 %v3663
  %v3667 = vmax.f32 %v3665, %v3666
  %v3668 = vrot.slane %v3667, 4
  %v3669 = vmax.f32 %v3667, %v3668
  %v3670 = vrot.slane %v3669, 2
  %v3671 = vmax.f32 %v3669, %v3670
  %v3672 = vrot.slane %v3671, 1
  %v3673 = vmax.f32 %v3671, %v3672
  %v3674 = vpack.i.bf16 %v3673, %v3673
  %v3676 = vsel %vm2725, %v2670, 4286644096
  %v3678 = vunpack.i.l.bf16 %v3676
  %v3679 = vunpack.i.h.bf16 %v3676
  %v3680 = vmax.f32 %v3678, %v3679
  %v3681 = vrot.slane %v3680, 4
  %v3682 = vmax.f32 %v3680, %v3681
  %v3683 = vrot.slane %v3682, 2
  %v3684 = vmax.f32 %v3682, %v3683
  %v3685 = vrot.slane %v3684, 1
  %v3686 = vmax.f32 %v3684, %v3685
  %v3687 = vpack.i.bf16 %v3686, %v3686
  %v3689 = vsel %vm2725, %v2671, 4286644096
  %v3691 = vunpack.i.l.bf16 %v3689
  %v3692 = vunpack.i.h.bf16 %v3689
  %v3693 = vmax.f32 %v3691, %v3692
  %v3694 = vrot.slane %v3693, 4
  %v3695 = vmax.f32 %v3693, %v3694
  %v3696 = vrot.slane %v3695, 2
  %v3697 = vmax.f32 %v3695, %v3696
  %v3698 = vrot.slane %v3697, 1
  %v3699 = vmax.f32 %v3697, %v3698
  %v3700 = vpack.i.bf16 %v3699, %v3699
  %v3702 = vsel %vm2725, %v2672, 4286644096
  %v3704 = vunpack.i.l.bf16 %v3702
  %v3705 = vunpack.i.h.bf16 %v3702
  %v3706 = vmax.f32 %v3704, %v3705
  %v3707 = vrot.slane %v3706, 4
  %v3708 = vmax.f32 %v3706, %v3707
  %v3709 = vrot.slane %v3708, 2
  %v3710 = vmax.f32 %v3708, %v3709
  %v3711 = vrot.slane %v3710, 1
  %v3712 = vmax.f32 %v3710, %v3711
  %v3713 = vpack.i.bf16 %v3712, %v3712
  %v3715 = vsel %vm2725, %v2673, 4286644096
  %v3717 = vunpack.i.l.bf16 %v3715
  %v3718 = vunpack.i.h.bf16 %v3715
  %v3719 = vmax.f32 %v3717, %v3718
  %v3720 = vrot.slane %v3719, 4
  %v3721 = vmax.f32 %v3719, %v3720
  %v3722 = vrot.slane %v3721, 2
  %v3723 = vmax.f32 %v3721, %v3722
  %v3724 = vrot.slane %v3723, 1
  %v3725 = vmax.f32 %v3723, %v3724
  %v3726 = vpack.i.bf16 %v3725, %v3725
  %v3728 = vsel %vm2725, %v2674, 4286644096
  %v3730 = vunpack.i.l.bf16 %v3728
  %v3731 = vunpack.i.h.bf16 %v3728
  %v3732 = vmax.f32 %v3730, %v3731
  %v3733 = vrot.slane %v3732, 4
  %v3734 = vmax.f32 %v3732, %v3733
  %v3735 = vrot.slane %v3734, 2
  %v3736 = vmax.f32 %v3734, %v3735
  %v3737 = vrot.slane %v3736, 1
  %v3738 = vmax.f32 %v3736, %v3737
  %v3739 = vpack.i.bf16 %v3738, %v3738
  %v3741 = vsel %vm2725, %v2675, 4286644096
  %v3743 = vunpack.i.l.bf16 %v3741
  %v3744 = vunpack.i.h.bf16 %v3741
  %v3745 = vmax.f32 %v3743, %v3744
  %v3746 = vrot.slane %v3745, 4
  %v3747 = vmax.f32 %v3745, %v3746
  %v3748 = vrot.slane %v3747, 2
  %v3749 = vmax.f32 %v3747, %v3748
  %v3750 = vrot.slane %v3749, 1
  %v3751 = vmax.f32 %v3749, %v3750
  %v3752 = vpack.i.bf16 %v3751, %v3751
  %v3754 = vsel %vm2725, %v2676, 4286644096
  %v3756 = vunpack.i.l.bf16 %v3754
  %v3757 = vunpack.i.h.bf16 %v3754
  %v3758 = vmax.f32 %v3756, %v3757
  %v3759 = vrot.slane %v3758, 4
  %v3760 = vmax.f32 %v3758, %v3759
  %v3761 = vrot.slane %v3760, 2
  %v3762 = vmax.f32 %v3760, %v3761
  %v3763 = vrot.slane %v3762, 1
  %v3764 = vmax.f32 %v3762, %v3763
  %v3765 = vpack.i.bf16 %v3764, %v3764
  %v3767 = vsel %vm2725, %v2677, 4286644096
  %v3769 = vunpack.i.l.bf16 %v3767
  %v3770 = vunpack.i.h.bf16 %v3767
  %v3771 = vmax.f32 %v3769, %v3770
  %v3772 = vrot.slane %v3771, 4
  %v3773 = vmax.f32 %v3771, %v3772
  %v3774 = vrot.slane %v3773, 2
  %v3775 = vmax.f32 %v3773, %v3774
  %v3776 = vrot.slane %v3775, 1
  %v3777 = vmax.f32 %v3775, %v3776
  %v3778 = vpack.i.bf16 %v3777, %v3777
  %v3780 = vsel %vm2725, %v2678, 4286644096
  %v3782 = vunpack.i.l.bf16 %v3780
  %v3783 = vunpack.i.h.bf16 %v3780
  %v3784 = vmax.f32 %v3782, %v3783
  %v3785 = vrot.slane %v3784, 4
  %v3786 = vmax.f32 %v3784, %v3785
  %v3787 = vrot.slane %v3786, 2
  %v3788 = vmax.f32 %v3786, %v3787
  %v3789 = vrot.slane %v3788, 1
  %v3790 = vmax.f32 %v3788, %v3789
  %v3791 = vpack.i.bf16 %v3790, %v3790
  %v3793 = vsel %vm2725, %v2679, 4286644096
  %v3795 = vunpack.i.l.bf16 %v3793
  %v3796 = vunpack.i.h.bf16 %v3793
  %v3797 = vmax.f32 %v3795, %v3796
  %v3798 = vrot.slane %v3797, 4
  %v3799 = vmax.f32 %v3797, %v3798
  %v3800 = vrot.slane %v3799, 2
  %v3801 = vmax.f32 %v3799, %v3800
  %v3802 = vrot.slane %v3801, 1
  %v3803 = vmax.f32 %v3801, %v3802
  %v3804 = vpack.i.bf16 %v3803, %v3803
  %v3806 = vsel %vm2725, %v2680, 4286644096
  %v3808 = vunpack.i.l.bf16 %v3806
  %v3809 = vunpack.i.h.bf16 %v3806
  %v3810 = vmax.f32 %v3808, %v3809
  %v3811 = vrot.slane %v3810, 4
  %v3812 = vmax.f32 %v3810, %v3811
  %v3813 = vrot.slane %v3812, 2
  %v3814 = vmax.f32 %v3812, %v3813
  %v3815 = vrot.slane %v3814, 1
  %v3816 = vmax.f32 %v3814, %v3815
  %v3817 = vpack.i.bf16 %v3816, %v3816
  %v3819 = vsel %vm2725, %v2681, 4286644096
  %v3821 = vunpack.i.l.bf16 %v3819
  %v3822 = vunpack.i.h.bf16 %v3819
  %v3823 = vmax.f32 %v3821, %v3822
  %v3824 = vrot.slane %v3823, 4
  %v3825 = vmax.f32 %v3823, %v3824
  %v3826 = vrot.slane %v3825, 2
  %v3827 = vmax.f32 %v3825, %v3826
  %v3828 = vrot.slane %v3827, 1
  %v3829 = vmax.f32 %v3827, %v3828
  %v3830 = vpack.i.bf16 %v3829, %v3829
  %v3832 = vsel %vm2725, %v2682, 4286644096
  %v3834 = vunpack.i.l.bf16 %v3832
  %v3835 = vunpack.i.h.bf16 %v3832
  %v3836 = vmax.f32 %v3834, %v3835
  %v3837 = vrot.slane %v3836, 4
  %v3838 = vmax.f32 %v3836, %v3837
  %v3839 = vrot.slane %v3838, 2
  %v3840 = vmax.f32 %v3838, %v3839
  %v3841 = vrot.slane %v3840, 1
  %v3842 = vmax.f32 %v3840, %v3841
  %v3843 = vpack.i.bf16 %v3842, %v3842
  %v3845 = vsel %vm2725, %v2683, 4286644096
  %v3847 = vunpack.i.l.bf16 %v3845
  %v3848 = vunpack.i.h.bf16 %v3845
  %v3849 = vmax.f32 %v3847, %v3848
  %v3850 = vrot.slane %v3849, 4
  %v3851 = vmax.f32 %v3849, %v3850
  %v3852 = vrot.slane %v3851, 2
  %v3853 = vmax.f32 %v3851, %v3852
  %v3854 = vrot.slane %v3853, 1
  %v3855 = vmax.f32 %v3853, %v3854
  %v3856 = vpack.i.bf16 %v3855, %v3855
  %v3858 = vsel %vm2725, %v2684, 4286644096
  %v3860 = vunpack.i.l.bf16 %v3858
  %v3861 = vunpack.i.h.bf16 %v3858
  %v3862 = vmax.f32 %v3860, %v3861
  %v3863 = vrot.slane %v3862, 4
  %v3864 = vmax.f32 %v3862, %v3863
  %v3865 = vrot.slane %v3864, 2
  %v3866 = vmax.f32 %v3864, %v3865
  %v3867 = vrot.slane %v3866, 1
  %v3868 = vmax.f32 %v3866, %v3867
  %v3869 = vpack.i.bf16 %v3868, %v3868
  %v3871 = vsel %vm2725, %v2685, 4286644096
  %v3873 = vunpack.i.l.bf16 %v3871
  %v3874 = vunpack.i.h.bf16 %v3871
  %v3875 = vmax.f32 %v3873, %v3874
  %v3876 = vrot.slane %v3875, 4
  %v3877 = vmax.f32 %v3875, %v3876
  %v3878 = vrot.slane %v3877, 2
  %v3879 = vmax.f32 %v3877, %v3878
  %v3880 = vrot.slane %v3879, 1
  %v3881 = vmax.f32 %v3879, %v3880
  %v3882 = vpack.i.bf16 %v3881, %v3881
  %v3884 = vsel %vm2725, %v2686, 4286644096
  %v3886 = vunpack.i.l.bf16 %v3884
  %v3887 = vunpack.i.h.bf16 %v3884
  %v3888 = vmax.f32 %v3886, %v3887
  %v3889 = vrot.slane %v3888, 4
  %v3890 = vmax.f32 %v3888, %v3889
  %v3891 = vrot.slane %v3890, 2
  %v3892 = vmax.f32 %v3890, %v3891
  %v3893 = vrot.slane %v3892, 1
  %v3894 = vmax.f32 %v3892, %v3893
  %v3895 = vpack.i.bf16 %v3894, %v3894
  %v3897 = vsel %vm2725, %v2687, 4286644096
  %v3899 = vunpack.i.l.bf16 %v3897
  %v3900 = vunpack.i.h.bf16 %v3897
  %v3901 = vmax.f32 %v3899, %v3900
  %v3902 = vrot.slane %v3901, 4
  %v3903 = vmax.f32 %v3901, %v3902
  %v3904 = vrot.slane %v3903, 2
  %v3905 = vmax.f32 %v3903, %v3904
  %v3906 = vrot.slane %v3905, 1
  %v3907 = vmax.f32 %v3905, %v3906
  %v3908 = vpack.i.bf16 %v3907, %v3907
  %v3910 = vsel %vm2725, %v2688, 4286644096
  %v3912 = vunpack.i.l.bf16 %v3910
  %v3913 = vunpack.i.h.bf16 %v3910
  %v3914 = vmax.f32 %v3912, %v3913
  %v3915 = vrot.slane %v3914, 4
  %v3916 = vmax.f32 %v3914, %v3915
  %v3917 = vrot.slane %v3916, 2
  %v3918 = vmax.f32 %v3916, %v3917
  %v3919 = vrot.slane %v3918, 1
  %v3920 = vmax.f32 %v3918, %v3919
  %v3921 = vpack.i.bf16 %v3920, %v3920
  %v3923 = vsel %vm2725, %v2689, 4286644096
  %v3925 = vunpack.i.l.bf16 %v3923
  %v3926 = vunpack.i.h.bf16 %v3923
  %v3927 = vmax.f32 %v3925, %v3926
  %v3928 = vrot.slane %v3927, 4
  %v3929 = vmax.f32 %v3927, %v3928
  %v3930 = vrot.slane %v3929, 2
  %v3931 = vmax.f32 %v3929, %v3930
  %v3932 = vrot.slane %v3931, 1
  %v3933 = vmax.f32 %v3931, %v3932
  %v3934 = vpack.i.bf16 %v3933, %v3933
  %v3936 = vsel %vm2725, %v2690, 4286644096
  %v3938 = vunpack.i.l.bf16 %v3936
  %v3939 = vunpack.i.h.bf16 %v3936
  %v3940 = vmax.f32 %v3938, %v3939
  %v3941 = vrot.slane %v3940, 4
  %v3942 = vmax.f32 %v3940, %v3941
  %v3943 = vrot.slane %v3942, 2
  %v3944 = vmax.f32 %v3942, %v3943
  %v3945 = vrot.slane %v3944, 1
  %v3946 = vmax.f32 %v3944, %v3945
  %v3947 = vpack.i.bf16 %v3946, %v3946
  %v3949 = vsel %vm2725, %v2691, 4286644096
  %v3951 = vunpack.i.l.bf16 %v3949
  %v3952 = vunpack.i.h.bf16 %v3949
  %v3953 = vmax.f32 %v3951, %v3952
  %v3954 = vrot.slane %v3953, 4
  %v3955 = vmax.f32 %v3953, %v3954
  %v3956 = vrot.slane %v3955, 2
  %v3957 = vmax.f32 %v3955, %v3956
  %v3958 = vrot.slane %v3957, 1
  %v3959 = vmax.f32 %v3957, %v3958
  %v3960 = vpack.i.bf16 %v3959, %v3959
  %v3962 = vsel %vm2725, %v2692, 4286644096
  %v3964 = vunpack.i.l.bf16 %v3962
  %v3965 = vunpack.i.h.bf16 %v3962
  %v3966 = vmax.f32 %v3964, %v3965
  %v3967 = vrot.slane %v3966, 4
  %v3968 = vmax.f32 %v3966, %v3967
  %v3969 = vrot.slane %v3968, 2
  %v3970 = vmax.f32 %v3968, %v3969
  %v3971 = vrot.slane %v3970, 1
  %v3972 = vmax.f32 %v3970, %v3971
  %v3973 = vpack.i.bf16 %v3972, %v3972
  %v3975 = vsel %vm2725, %v2693, 4286644096
  %v3977 = vunpack.i.l.bf16 %v3975
  %v3978 = vunpack.i.h.bf16 %v3975
  %v3979 = vmax.f32 %v3977, %v3978
  %v3980 = vrot.slane %v3979, 4
  %v3981 = vmax.f32 %v3979, %v3980
  %v3982 = vrot.slane %v3981, 2
  %v3983 = vmax.f32 %v3981, %v3982
  %v3984 = vrot.slane %v3983, 1
  %v3985 = vmax.f32 %v3983, %v3984
  %v3986 = vpack.i.bf16 %v3985, %v3985
  %v3988 = vsel %vm2725, %v2694, 4286644096
  %v3990 = vunpack.i.l.bf16 %v3988
  %v3991 = vunpack.i.h.bf16 %v3988
  %v3992 = vmax.f32 %v3990, %v3991
  %v3993 = vrot.slane %v3992, 4
  %v3994 = vmax.f32 %v3992, %v3993
  %v3995 = vrot.slane %v3994, 2
  %v3996 = vmax.f32 %v3994, %v3995
  %v3997 = vrot.slane %v3996, 1
  %v3998 = vmax.f32 %v3996, %v3997
  %v3999 = vpack.i.bf16 %v3998, %v3998
  %v4001 = vsel %vm2725, %v2695, 4286644096
  %v4003 = vunpack.i.l.bf16 %v4001
  %v4004 = vunpack.i.h.bf16 %v4001
  %v4005 = vmax.f32 %v4003, %v4004
  %v4006 = vrot.slane %v4005, 4
  %v4007 = vmax.f32 %v4005, %v4006
  %v4008 = vrot.slane %v4007, 2
  %v4009 = vmax.f32 %v4007, %v4008
  %v4010 = vrot.slane %v4009, 1
  %v4011 = vmax.f32 %v4009, %v4010
  %v4012 = vpack.i.bf16 %v4011, %v4011
  %v4014 = vsel %vm2725, %v2696, 4286644096
  %v4016 = vunpack.i.l.bf16 %v4014
  %v4017 = vunpack.i.h.bf16 %v4014
  %v4018 = vmax.f32 %v4016, %v4017
  %v4019 = vrot.slane %v4018, 4
  %v4020 = vmax.f32 %v4018, %v4019
  %v4021 = vrot.slane %v4020, 2
  %v4022 = vmax.f32 %v4020, %v4021
  %v4023 = vrot.slane %v4022, 1
  %v4024 = vmax.f32 %v4022, %v4023
  %v4025 = vpack.i.bf16 %v4024, %v4024
  %v4027 = vsel %vm2725, %v2697, 4286644096
  %v4029 = vunpack.i.l.bf16 %v4027
  %v4030 = vunpack.i.h.bf16 %v4027
  %v4031 = vmax.f32 %v4029, %v4030
  %v4032 = vrot.slane %v4031, 4
  %v4033 = vmax.f32 %v4031, %v4032
  %v4034 = vrot.slane %v4033, 2
  %v4035 = vmax.f32 %v4033, %v4034
  %v4036 = vrot.slane %v4035, 1
  %v4037 = vmax.f32 %v4035, %v4036
  %v4038 = vpack.i.bf16 %v4037, %v4037
  %v4040 = vsel %vm2725, %v2698, 4286644096
  %v4042 = vunpack.i.l.bf16 %v4040
  %v4043 = vunpack.i.h.bf16 %v4040
  %v4044 = vmax.f32 %v4042, %v4043
  %v4045 = vrot.slane %v4044, 4
  %v4046 = vmax.f32 %v4044, %v4045
  %v4047 = vrot.slane %v4046, 2
  %v4048 = vmax.f32 %v4046, %v4047
  %v4049 = vrot.slane %v4048, 1
  %v4050 = vmax.f32 %v4048, %v4049
  %v4051 = vpack.i.bf16 %v4050, %v4050
  %v4053 = vsel %vm2725, %v2699, 4286644096
  %v4055 = vunpack.i.l.bf16 %v4053
  %v4056 = vunpack.i.h.bf16 %v4053
  %v4057 = vmax.f32 %v4055, %v4056
  %v4058 = vrot.slane %v4057, 4
  %v4059 = vmax.f32 %v4057, %v4058
  %v4060 = vrot.slane %v4059, 2
  %v4061 = vmax.f32 %v4059, %v4060
  %v4062 = vrot.slane %v4061, 1
  %v4063 = vmax.f32 %v4061, %v4062
  %v4064 = vpack.i.bf16 %v4063, %v4063
  %v4066 = vsel %vm2725, %v2700, 4286644096
  %v4068 = vunpack.i.l.bf16 %v4066
  %v4069 = vunpack.i.h.bf16 %v4066
  %v4070 = vmax.f32 %v4068, %v4069
  %v4071 = vrot.slane %v4070, 4
  %v4072 = vmax.f32 %v4070, %v4071
  %v4073 = vrot.slane %v4072, 2
  %v4074 = vmax.f32 %v4072, %v4073
  %v4075 = vrot.slane %v4074, 1
  %v4076 = vmax.f32 %v4074, %v4075
  %v4077 = vpack.i.bf16 %v4076, %v4076
  %v4079 = vsel %vm2725, %v2701, 4286644096
  %v4081 = vunpack.i.l.bf16 %v4079
  %v4082 = vunpack.i.h.bf16 %v4079
  %v4083 = vmax.f32 %v4081, %v4082
  %v4084 = vrot.slane %v4083, 4
  %v4085 = vmax.f32 %v4083, %v4084
  %v4086 = vrot.slane %v4085, 2
  %v4087 = vmax.f32 %v4085, %v4086
  %v4088 = vrot.slane %v4087, 1
  %v4089 = vmax.f32 %v4087, %v4088
  %v4090 = vpack.i.bf16 %v4089, %v4089
  %v4092 = vsel %vm2725, %v2702, 4286644096
  %v4094 = vunpack.i.l.bf16 %v4092
  %v4095 = vunpack.i.h.bf16 %v4092
  %v4096 = vmax.f32 %v4094, %v4095
  %v4097 = vrot.slane %v4096, 4
  %v4098 = vmax.f32 %v4096, %v4097
  %v4099 = vrot.slane %v4098, 2
  %v4100 = vmax.f32 %v4098, %v4099
  %v4101 = vrot.slane %v4100, 1
  %v4102 = vmax.f32 %v4100, %v4101
  %v4103 = vpack.i.bf16 %v4102, %v4102
  %v4105 = vsel %vm2725, %v2703, 4286644096
  %v4107 = vunpack.i.l.bf16 %v4105
  %v4108 = vunpack.i.h.bf16 %v4105
  %v4109 = vmax.f32 %v4107, %v4108
  %v4110 = vrot.slane %v4109, 4
  %v4111 = vmax.f32 %v4109, %v4110
  %v4112 = vrot.slane %v4111, 2
  %v4113 = vmax.f32 %v4111, %v4112
  %v4114 = vrot.slane %v4113, 1
  %v4115 = vmax.f32 %v4113, %v4114
  %v4116 = vpack.i.bf16 %v4115, %v4115
  %v4118 = vsel %vm2725, %v2704, 4286644096
  %v4120 = vunpack.i.l.bf16 %v4118
  %v4121 = vunpack.i.h.bf16 %v4118
  %v4122 = vmax.f32 %v4120, %v4121
  %v4123 = vrot.slane %v4122, 4
  %v4124 = vmax.f32 %v4122, %v4123
  %v4125 = vrot.slane %v4124, 2
  %v4126 = vmax.f32 %v4124, %v4125
  %v4127 = vrot.slane %v4126, 1
  %v4128 = vmax.f32 %v4126, %v4127
  %v4129 = vpack.i.bf16 %v4128, %v4128
  %v4131 = vsel %vm2725, %v2705, 4286644096
  %v4133 = vunpack.i.l.bf16 %v4131
  %v4134 = vunpack.i.h.bf16 %v4131
  %v4135 = vmax.f32 %v4133, %v4134
  %v4136 = vrot.slane %v4135, 4
  %v4137 = vmax.f32 %v4135, %v4136
  %v4138 = vrot.slane %v4137, 2
  %v4139 = vmax.f32 %v4137, %v4138
  %v4140 = vrot.slane %v4139, 1
  %v4141 = vmax.f32 %v4139, %v4140
  %v4142 = vpack.i.bf16 %v4141, %v4141
  %v4144 = vsel %vm2725, %v2706, 4286644096
  %v4146 = vunpack.i.l.bf16 %v4144
  %v4147 = vunpack.i.h.bf16 %v4144
  %v4148 = vmax.f32 %v4146, %v4147
  %v4149 = vrot.slane %v4148, 4
  %v4150 = vmax.f32 %v4148, %v4149
  %v4151 = vrot.slane %v4150, 2
  %v4152 = vmax.f32 %v4150, %v4151
  %v4153 = vrot.slane %v4152, 1
  %v4154 = vmax.f32 %v4152, %v4153
  %v4155 = vpack.i.bf16 %v4154, %v4154
  %v4157 = vsel %vm2725, %v2707, 4286644096
  %v4159 = vunpack.i.l.bf16 %v4157
  %v4160 = vunpack.i.h.bf16 %v4157
  %v4161 = vmax.f32 %v4159, %v4160
  %v4162 = vrot.slane %v4161, 4
  %v4163 = vmax.f32 %v4161, %v4162
  %v4164 = vrot.slane %v4163, 2
  %v4165 = vmax.f32 %v4163, %v4164
  %v4166 = vrot.slane %v4165, 1
  %v4167 = vmax.f32 %v4165, %v4166
  %v4168 = vpack.i.bf16 %v4167, %v4167
  %v4170 = vsel %vm2725, %v2708, 4286644096
  %v4172 = vunpack.i.l.bf16 %v4170
  %v4173 = vunpack.i.h.bf16 %v4170
  %v4174 = vmax.f32 %v4172, %v4173
  %v4175 = vrot.slane %v4174, 4
  %v4176 = vmax.f32 %v4174, %v4175
  %v4177 = vrot.slane %v4176, 2
  %v4178 = vmax.f32 %v4176, %v4177
  %v4179 = vrot.slane %v4178, 1
  %v4180 = vmax.f32 %v4178, %v4179
  %v4181 = vpack.i.bf16 %v4180, %v4180
  %v4183 = vsel %vm2725, %v2709, 4286644096
  %v4185 = vunpack.i.l.bf16 %v4183
  %v4186 = vunpack.i.h.bf16 %v4183
  %v4187 = vmax.f32 %v4185, %v4186
  %v4188 = vrot.slane %v4187, 4
  %v4189 = vmax.f32 %v4187, %v4188
  %v4190 = vrot.slane %v4189, 2
  %v4191 = vmax.f32 %v4189, %v4190
  %v4192 = vrot.slane %v4191, 1
  %v4193 = vmax.f32 %v4191, %v4192
  %v4194 = vpack.i.bf16 %v4193, %v4193
  %v4196 = vsel %vm2725, %v2710, 4286644096
  %v4198 = vunpack.i.l.bf16 %v4196
  %v4199 = vunpack.i.h.bf16 %v4196
  %v4200 = vmax.f32 %v4198, %v4199
  %v4201 = vrot.slane %v4200, 4
  %v4202 = vmax.f32 %v4200, %v4201
  %v4203 = vrot.slane %v4202, 2
  %v4204 = vmax.f32 %v4202, %v4203
  %v4205 = vrot.slane %v4204, 1
  %v4206 = vmax.f32 %v4204, %v4205
  %v4207 = vpack.i.bf16 %v4206, %v4206
  %v4209 = vsel %vm2725, %v2711, 4286644096
  %v4211 = vunpack.i.l.bf16 %v4209
  %v4212 = vunpack.i.h.bf16 %v4209
  %v4213 = vmax.f32 %v4211, %v4212
  %v4214 = vrot.slane %v4213, 4
  %v4215 = vmax.f32 %v4213, %v4214
  %v4216 = vrot.slane %v4215, 2
  %v4217 = vmax.f32 %v4215, %v4216
  %v4218 = vrot.slane %v4217, 1
  %v4219 = vmax.f32 %v4217, %v4218
  %v4220 = vpack.i.bf16 %v4219, %v4219
  %v4222 = vsel %vm2725, %v2712, 4286644096
  %v4224 = vunpack.i.l.bf16 %v4222
  %v4225 = vunpack.i.h.bf16 %v4222
  %v4226 = vmax.f32 %v4224, %v4225
  %v4227 = vrot.slane %v4226, 4
  %v4228 = vmax.f32 %v4226, %v4227
  %v4229 = vrot.slane %v4228, 2
  %v4230 = vmax.f32 %v4228, %v4229
  %v4231 = vrot.slane %v4230, 1
  %v4232 = vmax.f32 %v4230, %v4231
  %v4233 = vpack.i.bf16 %v4232, %v4232
  %v4235 = vsel %vm2725, %v2713, 4286644096
  %v4237 = vunpack.i.l.bf16 %v4235
  %v4238 = vunpack.i.h.bf16 %v4235
  %v4239 = vmax.f32 %v4237, %v4238
  %v4240 = vrot.slane %v4239, 4
  %v4241 = vmax.f32 %v4239, %v4240
  %v4242 = vrot.slane %v4241, 2
  %v4243 = vmax.f32 %v4241, %v4242
  %v4244 = vrot.slane %v4243, 1
  %v4245 = vmax.f32 %v4243, %v4244
  %v4246 = vpack.i.bf16 %v4245, %v4245
  %v4248 = vsel %vm2725, %v2714, 4286644096
  %v4250 = vunpack.i.l.bf16 %v4248
  %v4251 = vunpack.i.h.bf16 %v4248
  %v4252 = vmax.f32 %v4250, %v4251
  %v4253 = vrot.slane %v4252, 4
  %v4254 = vmax.f32 %v4252, %v4253
  %v4255 = vrot.slane %v4254, 2
  %v4256 = vmax.f32 %v4254, %v4255
  %v4257 = vrot.slane %v4256, 1
  %v4258 = vmax.f32 %v4256, %v4257
  %v4259 = vpack.i.bf16 %v4258, %v4258
  %v4261 = vsel %vm2725, %v2715, 4286644096
  %v4263 = vunpack.i.l.bf16 %v4261
  %v4264 = vunpack.i.h.bf16 %v4261
  %v4265 = vmax.f32 %v4263, %v4264
  %v4266 = vrot.slane %v4265, 4
  %v4267 = vmax.f32 %v4265, %v4266
  %v4268 = vrot.slane %v4267, 2
  %v4269 = vmax.f32 %v4267, %v4268
  %v4270 = vrot.slane %v4269, 1
  %v4271 = vmax.f32 %v4269, %v4270
  %v4272 = vpack.i.bf16 %v4271, %v4271
  %v4274 = vsel %vm2725, %v2716, 4286644096
  %v4276 = vunpack.i.l.bf16 %v4274
  %v4277 = vunpack.i.h.bf16 %v4274
  %v4278 = vmax.f32 %v4276, %v4277
  %v4279 = vrot.slane %v4278, 4
  %v4280 = vmax.f32 %v4278, %v4279
  %v4281 = vrot.slane %v4280, 2
  %v4282 = vmax.f32 %v4280, %v4281
  %v4283 = vrot.slane %v4282, 1
  %v4284 = vmax.f32 %v4282, %v4283
  %v4285 = vpack.i.bf16 %v4284, %v4284
  %v4287 = vsel %vm2725, %v2717, 4286644096
  %v4289 = vunpack.i.l.bf16 %v4287
  %v4290 = vunpack.i.h.bf16 %v4287
  %v4291 = vmax.f32 %v4289, %v4290
  %v4292 = vrot.slane %v4291, 4
  %v4293 = vmax.f32 %v4291, %v4292
  %v4294 = vrot.slane %v4293, 2
  %v4295 = vmax.f32 %v4293, %v4294
  %v4296 = vrot.slane %v4295, 1
  %v4297 = vmax.f32 %v4295, %v4296
  %v4298 = vpack.i.bf16 %v4297, %v4297
  %v4300 = vsel %vm2725, %v2718, 4286644096
  %v4302 = vunpack.i.l.bf16 %v4300
  %v4303 = vunpack.i.h.bf16 %v4300
  %v4304 = vmax.f32 %v4302, %v4303
  %v4305 = vrot.slane %v4304, 4
  %v4306 = vmax.f32 %v4304, %v4305
  %v4307 = vrot.slane %v4306, 2
  %v4308 = vmax.f32 %v4306, %v4307
  %v4309 = vrot.slane %v4308, 1
  %v4310 = vmax.f32 %v4308, %v4309
  %v4311 = vpack.i.bf16 %v4310, %v4310
  %v4313 = vsel %vm2725, %v2719, 4286644096
  %v4315 = vunpack.i.l.bf16 %v4313
  %v4316 = vunpack.i.h.bf16 %v4313
  %v4317 = vmax.f32 %v4315, %v4316
  %v4318 = vrot.slane %v4317, 4
  %v4319 = vmax.f32 %v4317, %v4318
  %v4320 = vrot.slane %v4319, 2
  %v4321 = vmax.f32 %v4319, %v4320
  %v4322 = vrot.slane %v4321, 1
  %v4323 = vmax.f32 %v4321, %v4322
  %v4324 = vpack.i.bf16 %v4323, %v4323
  %v4326 = vsel %vm2725, %v2720, 4286644096
  %v4328 = vunpack.i.l.bf16 %v4326
  %v4329 = vunpack.i.h.bf16 %v4326
  %v4330 = vmax.f32 %v4328, %v4329
  %v4331 = vrot.slane %v4330, 4
  %v4332 = vmax.f32 %v4330, %v4331
  %v4333 = vrot.slane %v4332, 2
  %v4334 = vmax.f32 %v4332, %v4333
  %v4335 = vrot.slane %v4334, 1
  %v4336 = vmax.f32 %v4334, %v4335
  %v4337 = vpack.i.bf16 %v4336, %v4336
  %v4339 = vsel %vm2725, %v2721, 4286644096
  %v4341 = vunpack.i.l.bf16 %v4339
  %v4342 = vunpack.i.h.bf16 %v4339
  %v4343 = vmax.f32 %v4341, %v4342
  %v4344 = vrot.slane %v4343, 4
  %v4345 = vmax.f32 %v4343, %v4344
  %v4346 = vrot.slane %v4345, 2
  %v4347 = vmax.f32 %v4345, %v4346
  %v4348 = vrot.slane %v4347, 1
  %v4349 = vmax.f32 %v4347, %v4348
  %v4350 = vpack.i.bf16 %v4349, %v4349
  %v4352 = vsel %vm2725, %v2722, 4286644096
  %v4354 = vunpack.i.l.bf16 %v4352
  %v4355 = vunpack.i.h.bf16 %v4352
  %v4356 = vmax.f32 %v4354, %v4355
  %v4357 = vrot.slane %v4356, 4
  %v4358 = vmax.f32 %v4356, %v4357
  %v4359 = vrot.slane %v4358, 2
  %v4360 = vmax.f32 %v4358, %v4359
  %v4361 = vrot.slane %v4360, 1
  %v4362 = vmax.f32 %v4360, %v4361
  %v4363 = vpack.i.bf16 %v4362, %v4362
  %v4365 = vsel %vm2725, %v2723, 4286644096
  %v4367 = vunpack.i.l.bf16 %v4365
  %v4368 = vunpack.i.h.bf16 %v4365
  %v4369 = vmax.f32 %v4367, %v4368
  %v4370 = vrot.slane %v4369, 4
  %v4371 = vmax.f32 %v4369, %v4370
  %v4372 = vrot.slane %v4371, 2
  %v4373 = vmax.f32 %v4371, %v4372
  %v4374 = vrot.slane %v4373, 1
  %v4375 = vmax.f32 %v4373, %v4374
  %v4376 = vpack.i.bf16 %v4375, %v4375
  %v4378 = vsel %vm2725, %v2724, 4286644096
  %v4380 = vunpack.i.l.bf16 %v4378
  %v4381 = vunpack.i.h.bf16 %v4378
  %v4382 = vmax.f32 %v4380, %v4381
  %v4383 = vrot.slane %v4382, 4
  %v4384 = vmax.f32 %v4382, %v4383
  %v4385 = vrot.slane %v4384, 2
  %v4386 = vmax.f32 %v4384, %v4385
  %v4387 = vrot.slane %v4386, 1
  %v4388 = vmax.f32 %v4386, %v4387
  %v4389 = vpack.i.bf16 %v4388, %v4388
  %v4390 = vld [vmem:[%s2] sm:$0xf]
  %v4391 = vld [vmem:[%s2 + $0x4] sm:$0xf]
  %v4392 = vld [vmem:[%s3] sm:$0xf]
  %v4393 = vld [vmem:[%s3 + $0x4] sm:$0xf]
  %v4522 = vunpack.c.l.b16 %v2738
  %v4523 = vunpack.c.l.b16 %v2751
  %v4524 = vunpack.c.l.b16 %v2764
  %v4525 = vunpack.c.l.b16 %v2777
  %v4526 = vunpack.c.l.b16 %v2790
  %v4527 = vunpack.c.l.b16 %v2803
  %v4528 = vunpack.c.l.b16 %v2816
  %v4529 = vunpack.c.l.b16 %v2829
  %v4530 = vunpack.c.l.b16 %v2842
  %v4531 = vunpack.c.l.b16 %v2855
  %v4532 = vunpack.c.l.b16 %v2868
  %v4533 = vunpack.c.l.b16 %v2881
  %v4534 = vunpack.c.l.b16 %v2894
  %v4535 = vunpack.c.l.b16 %v2907
  %v4536 = vunpack.c.l.b16 %v2920
  %v4537 = vunpack.c.l.b16 %v2933
  %v4538 = vunpack.c.l.b16 %v2946
  %v4539 = vunpack.c.l.b16 %v2959
  %v4540 = vunpack.c.l.b16 %v2972
  %v4541 = vunpack.c.l.b16 %v2985
  %v4542 = vunpack.c.l.b16 %v2998
  %v4543 = vunpack.c.l.b16 %v3011
  %v4544 = vunpack.c.l.b16 %v3024
  %v4545 = vunpack.c.l.b16 %v3037
  %v4546 = vunpack.c.l.b16 %v3050
  %v4547 = vunpack.c.l.b16 %v3063
  %v4548 = vunpack.c.l.b16 %v3076
  %v4549 = vunpack.c.l.b16 %v3089
  %v4550 = vunpack.c.l.b16 %v3102
  %v4551 = vunpack.c.l.b16 %v3115
  %v4552 = vunpack.c.l.b16 %v3128
  %v4553 = vunpack.c.l.b16 %v3141
  %v4554 = vunpack.c.l.b16 %v3154
  %v4555 = vunpack.c.l.b16 %v3167
  %v4556 = vunpack.c.l.b16 %v3180
  %v4557 = vunpack.c.l.b16 %v3193
  %v4558 = vunpack.c.l.b16 %v3206
  %v4559 = vunpack.c.l.b16 %v3219
  %v4560 = vunpack.c.l.b16 %v3232
  %v4561 = vunpack.c.l.b16 %v3245
  %v4562 = vunpack.c.l.b16 %v3258
  %v4563 = vunpack.c.l.b16 %v3271
  %v4564 = vunpack.c.l.b16 %v3284
  %v4565 = vunpack.c.l.b16 %v3297
  %v4566 = vunpack.c.l.b16 %v3310
  %v4567 = vunpack.c.l.b16 %v3323
  %v4568 = vunpack.c.l.b16 %v3336
  %v4569 = vunpack.c.l.b16 %v3349
  %v4570 = vunpack.c.l.b16 %v3362
  %v4571 = vunpack.c.l.b16 %v3375
  %v4572 = vunpack.c.l.b16 %v3388
  %v4573 = vunpack.c.l.b16 %v3401
  %v4574 = vunpack.c.l.b16 %v3414
  %v4575 = vunpack.c.l.b16 %v3427
  %v4576 = vunpack.c.l.b16 %v3440
  %v4577 = vunpack.c.l.b16 %v3453
  %v4578 = vunpack.c.l.b16 %v3466
  %v4579 = vunpack.c.l.b16 %v3479
  %v4580 = vunpack.c.l.b16 %v3492
  %v4581 = vunpack.c.l.b16 %v3505
  %v4582 = vunpack.c.l.b16 %v3518
  %v4583 = vunpack.c.l.b16 %v3531
  %v4584 = vunpack.c.l.b16 %v3544
  %v4585 = vunpack.c.l.b16 %v3557
  %v4586 = vunpack.c.l.b16 %v3570
  %v4587 = vunpack.c.l.b16 %v3583
  %v4588 = vunpack.c.l.b16 %v3596
  %v4589 = vunpack.c.l.b16 %v3609
  %v4590 = vunpack.c.l.b16 %v3622
  %v4591 = vunpack.c.l.b16 %v3635
  %v4592 = vunpack.c.l.b16 %v3648
  %v4593 = vunpack.c.l.b16 %v3661
  %v4594 = vunpack.c.l.b16 %v3674
  %v4595 = vunpack.c.l.b16 %v3687
  %v4596 = vunpack.c.l.b16 %v3700
  %v4597 = vunpack.c.l.b16 %v3713
  %v4598 = vunpack.c.l.b16 %v3726
  %v4599 = vunpack.c.l.b16 %v3739
  %v4600 = vunpack.c.l.b16 %v3752
  %v4601 = vunpack.c.l.b16 %v3765
  %v4602 = vunpack.c.l.b16 %v3778
  %v4603 = vunpack.c.l.b16 %v3791
  %v4604 = vunpack.c.l.b16 %v3804
  %v4605 = vunpack.c.l.b16 %v3817
  %v4606 = vunpack.c.l.b16 %v3830
  %v4607 = vunpack.c.l.b16 %v3843
  %v4608 = vunpack.c.l.b16 %v3856
  %v4609 = vunpack.c.l.b16 %v3869
  %v4610 = vunpack.c.l.b16 %v3882
  %v4611 = vunpack.c.l.b16 %v3895
  %v4612 = vunpack.c.l.b16 %v3908
  %v4613 = vunpack.c.l.b16 %v3921
  %v4614 = vunpack.c.l.b16 %v3934
  %v4615 = vunpack.c.l.b16 %v3947
  %v4616 = vunpack.c.l.b16 %v3960
  %v4617 = vunpack.c.l.b16 %v3973
  %v4618 = vunpack.c.l.b16 %v3986
  %v4619 = vunpack.c.l.b16 %v3999
  %v4620 = vunpack.c.l.b16 %v4012
  %v4621 = vunpack.c.l.b16 %v4025
  %v4622 = vunpack.c.l.b16 %v4038
  %v4623 = vunpack.c.l.b16 %v4051
  %v4624 = vunpack.c.l.b16 %v4064
  %v4625 = vunpack.c.l.b16 %v4077
  %v4626 = vunpack.c.l.b16 %v4090
  %v4627 = vunpack.c.l.b16 %v4103
  %v4628 = vunpack.c.l.b16 %v4116
  %v4629 = vunpack.c.l.b16 %v4129
  %v4630 = vunpack.c.l.b16 %v4142
  %v4631 = vunpack.c.l.b16 %v4155
  %v4632 = vunpack.c.l.b16 %v4168
  %v4633 = vunpack.c.l.b16 %v4181
  %v4634 = vunpack.c.l.b16 %v4194
  %v4635 = vunpack.c.l.b16 %v4207
  %v4636 = vunpack.c.l.b16 %v4220
  %v4637 = vunpack.c.l.b16 %v4233
  %v4638 = vunpack.c.l.b16 %v4246
  %v4639 = vunpack.c.l.b16 %v4259
  %v4640 = vunpack.c.l.b16 %v4272
  %v4641 = vunpack.c.l.b16 %v4285
  %v4642 = vunpack.c.l.b16 %v4298
  %v4643 = vunpack.c.l.b16 %v4311
  %v4644 = vunpack.c.l.b16 %v4324
  %v4645 = vunpack.c.l.b16 %v4337
  %v4646 = vunpack.c.l.b16 %v4350
  %v4647 = vunpack.c.l.b16 %v4363
  %v4648 = vunpack.c.l.b16 %v4376
  %v4649 = vunpack.c.l.b16 %v4389
  %vm4650 = vcmask 1041409
  %v4651 = vsel %vm4650, %v4523, %v4522
  %vm4652 = vcmask 1042434
  %v4653 = vsel %vm4652, %v4524, %v4651
  %vm4654 = vcmask 1043459
  %v4655 = vsel %vm4654, %v4525, %v4653
  %vm4656 = vcmask 1044484
  %v4657 = vsel %vm4656, %v4526, %v4655
  %vm4658 = vcmask 1045509
  %v4659 = vsel %vm4658, %v4527, %v4657
  %vm4660 = vcmask 1046534
  %v4661 = vsel %vm4660, %v4528, %v4659
  %vm4662 = vcmask 1047559
  %v4663 = vsel %vm4662, %v4529, %v4661
  %v4664 = vsel %vm4650, %v4531, %v4530
  %v4665 = vsel %vm4652, %v4532, %v4664
  %v4666 = vsel %vm4654, %v4533, %v4665
  %v4667 = vsel %vm4656, %v4534, %v4666
  %v4668 = vsel %vm4658, %v4535, %v4667
  %v4669 = vsel %vm4660, %v4536, %v4668
  %v4670 = vsel %vm4662, %v4537, %v4669
  %v4671 = vsel %vm4650, %v4539, %v4538
  %v4672 = vsel %vm4652, %v4540, %v4671
  %v4673 = vsel %vm4654, %v4541, %v4672
  %v4674 = vsel %vm4656, %v4542, %v4673
  %v4675 = vsel %vm4658, %v4543, %v4674
  %v4676 = vsel %vm4660, %v4544, %v4675
  %v4677 = vsel %vm4662, %v4545, %v4676
  %v4678 = vsel %vm4650, %v4547, %v4546
  %v4679 = vsel %vm4652, %v4548, %v4678
  %v4680 = vsel %vm4654, %v4549, %v4679
  %v4681 = vsel %vm4656, %v4550, %v4680
  %v4682 = vsel %vm4658, %v4551, %v4681
  %v4683 = vsel %vm4660, %v4552, %v4682
  %v4684 = vsel %vm4662, %v4553, %v4683
  %v4685 = vsel %vm4650, %v4555, %v4554
  %v4686 = vsel %vm4652, %v4556, %v4685
  %v4687 = vsel %vm4654, %v4557, %v4686
  %v4688 = vsel %vm4656, %v4558, %v4687
  %v4689 = vsel %vm4658, %v4559, %v4688
  %v4690 = vsel %vm4660, %v4560, %v4689
  %v4691 = vsel %vm4662, %v4561, %v4690
  %v4692 = vsel %vm4650, %v4563, %v4562
  %v4693 = vsel %vm4652, %v4564, %v4692
  %v4694 = vsel %vm4654, %v4565, %v4693
  %v4695 = vsel %vm4656, %v4566, %v4694
  %v4696 = vsel %vm4658, %v4567, %v4695
  %v4697 = vsel %vm4660, %v4568, %v4696
  %v4698 = vsel %vm4662, %v4569, %v4697
  %v4699 = vsel %vm4650, %v4571, %v4570
  %v4700 = vsel %vm4652, %v4572, %v4699
  %v4701 = vsel %vm4654, %v4573, %v4700
  %v4702 = vsel %vm4656, %v4574, %v4701
  %v4703 = vsel %vm4658, %v4575, %v4702
  %v4704 = vsel %vm4660, %v4576, %v4703
  %v4705 = vsel %vm4662, %v4577, %v4704
  %v4706 = vsel %vm4650, %v4579, %v4578
  %v4707 = vsel %vm4652, %v4580, %v4706
  %v4708 = vsel %vm4654, %v4581, %v4707
  %v4709 = vsel %vm4656, %v4582, %v4708
  %v4710 = vsel %vm4658, %v4583, %v4709
  %v4711 = vsel %vm4660, %v4584, %v4710
  %v4712 = vsel %vm4662, %v4585, %v4711
  %v4713 = vsel %vm4650, %v4587, %v4586
  %v4714 = vsel %vm4652, %v4588, %v4713
  %v4715 = vsel %vm4654, %v4589, %v4714
  %v4716 = vsel %vm4656, %v4590, %v4715
  %v4717 = vsel %vm4658, %v4591, %v4716
  %v4718 = vsel %vm4660, %v4592, %v4717
  %v4719 = vsel %vm4662, %v4593, %v4718
  %v4720 = vsel %vm4650, %v4595, %v4594
  %v4721 = vsel %vm4652, %v4596, %v4720
  %v4722 = vsel %vm4654, %v4597, %v4721
  %v4723 = vsel %vm4656, %v4598, %v4722
  %v4724 = vsel %vm4658, %v4599, %v4723
  %v4725 = vsel %vm4660, %v4600, %v4724
  %v4726 = vsel %vm4662, %v4601, %v4725
  %v4727 = vsel %vm4650, %v4603, %v4602
  %v4728 = vsel %vm4652, %v4604, %v4727
  %v4729 = vsel %vm4654, %v4605, %v4728
  %v4730 = vsel %vm4656, %v4606, %v4729
  %v4731 = vsel %vm4658, %v4607, %v4730
  %v4732 = vsel %vm4660, %v4608, %v4731
  %v4733 = vsel %vm4662, %v4609, %v4732
  %v4734 = vsel %vm4650, %v4611, %v4610
  %v4735 = vsel %vm4652, %v4612, %v4734
  %v4736 = vsel %vm4654, %v4613, %v4735
  %v4737 = vsel %vm4656, %v4614, %v4736
  %v4738 = vsel %vm4658, %v4615, %v4737
  %v4739 = vsel %vm4660, %v4616, %v4738
  %v4740 = vsel %vm4662, %v4617, %v4739
  %v4741 = vsel %vm4650, %v4619, %v4618
  %v4742 = vsel %vm4652, %v4620, %v4741
  %v4743 = vsel %vm4654, %v4621, %v4742
  %v4744 = vsel %vm4656, %v4622, %v4743
  %v4745 = vsel %vm4658, %v4623, %v4744
  %v4746 = vsel %vm4660, %v4624, %v4745
  %v4747 = vsel %vm4662, %v4625, %v4746
  %v4748 = vsel %vm4650, %v4627, %v4626
  %v4749 = vsel %vm4652, %v4628, %v4748
  %v4750 = vsel %vm4654, %v4629, %v4749
  %v4751 = vsel %vm4656, %v4630, %v4750
  %v4752 = vsel %vm4658, %v4631, %v4751
  %v4753 = vsel %vm4660, %v4632, %v4752
  %v4754 = vsel %vm4662, %v4633, %v4753
  %v4755 = vsel %vm4650, %v4635, %v4634
  %v4756 = vsel %vm4652, %v4636, %v4755
  %v4757 = vsel %vm4654, %v4637, %v4756
  %v4758 = vsel %vm4656, %v4638, %v4757
  %v4759 = vsel %vm4658, %v4639, %v4758
  %v4760 = vsel %vm4660, %v4640, %v4759
  %v4761 = vsel %vm4662, %v4641, %v4760
  %v4762 = vsel %vm4650, %v4643, %v4642
  %v4763 = vsel %vm4652, %v4644, %v4762
  %v4764 = vsel %vm4654, %v4645, %v4763
  %v4765 = vsel %vm4656, %v4646, %v4764
  %v4766 = vsel %vm4658, %v4647, %v4765
  %v4767 = vsel %vm4660, %v4648, %v4766
  %v4768 = vsel %vm4662, %v4649, %v4767
  %v4769 = vpack.c.b16 %v4670, %v4663
  %v4770 = vpack.c.b16 %v4684, %v4677
  %v4771 = vpack.c.b16 %v4698, %v4691
  %v4772 = vpack.c.b16 %v4712, %v4705
  %v4773 = vpack.c.b16 %v4726, %v4719
  %v4774 = vpack.c.b16 %v4740, %v4733
  %v4775 = vpack.c.b16 %v4754, %v4747
  %v4776 = vpack.c.b16 %v4768, %v4761
  %v4779 = vunpack.c.l.b16 %v4392
  %v4780 = vunpack.c.l.b16 %v4393
  %v4781 = vpack.c.b16 %v4780, %v4779
  %vm4783 = vcmask 130048
  %v4785 = vsel %vm4783, %v4769, 0
  %v4788 = vsel %vm4783, %v4770, 0
  %v4791 = vsel %vm4783, %v4771, 0
  %v4794 = vsel %vm4783, %v4772, 0
  %v4797 = vsel %vm4783, %v4773, 0
  %v4800 = vsel %vm4783, %v4774, 0
  %v4803 = vsel %vm4783, %v4775, 0
  %v4806 = vsel %vm4783, %v4776, 0
  %4808 = vmatprep.subr.bf16.mxu0 0
  %4809 = vmatpush1.bf16.msra.mxu0 0
  %4810 = vmatprep.subr.bf16.mxu0 0
  %4811 = vmatpush1.bf16.msra.mxu0 0
  %4812 = vmatprep.subr.bf16.mxu0 0
  %4813 = vmatpush1.bf16.msra.mxu0 0
  %4814 = vmatprep.subr.bf16.mxu0 0
  %4815 = vmatpush1.bf16.msra.mxu0 0
  %4816 = vmatprep.subr.bf16.mxu0 0
  %4817 = vmatpush1.bf16.msra.mxu0 0
  %4818 = vmatprep.subr.bf16.mxu0 0
  %4819 = vmatpush1.bf16.msra.mxu0 0
  %4820 = vmatprep.subr.bf16.mxu0 0
  %4821 = vmatpush1.bf16.msra.mxu0 0
  %4822 = vmatprep.subr.bf16.mxu0 0
  %4823 = vmatpush1.bf16.msra.mxu0 %v4781
  %4824 = vmatprep.subr.bf16.mxu0 0
  %4825 = vmatpush2.bf16.msra.mxu0 0
  %4826 = vmatprep.subr.bf16.mxu0 0
  %4827 = vmatpush2.bf16.msra.mxu0 0
  %4828 = vmatprep.subr.bf16.mxu0 0
  %4829 = vmatpush2.bf16.msra.mxu0 0
  %4830 = vmatprep.subr.bf16.mxu0 0
  %4831 = vmatpush2.bf16.msra.mxu0 0
  %4832 = vmatprep.subr.bf16.mxu0 0
  %4833 = vmatpush2.bf16.msra.mxu0 0
  %4834 = vmatprep.subr.bf16.mxu0 0
  %4835 = vmatpush2.bf16.msra.mxu0 0
  %4836 = vmatprep.subr.bf16.mxu0 0
  %4837 = vmatpush2.bf16.msra.mxu0 0
  %4838 = vmatprep.subr.bf16.mxu0 0
  %4839 = vmatpush2.bf16.msra.mxu0 0
  %4840 = vmatprep.mubr.bf16.mxu0 0
  %4841 = vmatmul.mubr.bf16.gmra.mxu0 %v4785
  %v4842 = vpop.f32.mrf.mxu0
  %v4843 = vadd.f32 0.0, %v4842
  %v4844 = vpop.f32.mrf.mxu0
  %v4845 = vpop.f32.mrf.mxu0
  %v4846 = vadd.f32 0.0, %v4845
  %v4847 = vpop.f32.mrf.mxu0
  %4848 = vmatprep.mubr.bf16.mxu0 0
  %4849 = vmatmul.mubr.bf16.gmra.mxu0 %v4788
  %v4850 = vpop.f32.mrf.mxu0
  %v4851 = vadd.f32 0.0, %v4850
  %v4852 = vpop.f32.mrf.mxu0
  %v4853 = vpop.f32.mrf.mxu0
  %v4854 = vadd.f32 0.0, %v4853
  %v4855 = vpop.f32.mrf.mxu0
  %4856 = vmatprep.mubr.bf16.mxu0 0
  %4857 = vmatmul.mubr.bf16.gmra.mxu0 %v4791
  %v4858 = vpop.f32.mrf.mxu0
  %v4859 = vadd.f32 0.0, %v4858
  %v4860 = vpop.f32.mrf.mxu0
  %v4861 = vpop.f32.mrf.mxu0
  %v4862 = vadd.f32 0.0, %v4861
  %v4863 = vpop.f32.mrf.mxu0
  %4864 = vmatprep.mubr.bf16.mxu0 0
  %4865 = vmatmul.mubr.bf16.gmra.mxu0 %v4794
  %v4866 = vpop.f32.mrf.mxu0
  %v4867 = vadd.f32 0.0, %v4866
  %v4868 = vpop.f32.mrf.mxu0
  %v4869 = vpop.f32.mrf.mxu0
  %v4870 = vadd.f32 0.0, %v4869
  %v4871 = vpop.f32.mrf.mxu0
  %4872 = vmatprep.mubr.bf16.mxu0 0
  %4873 = vmatmul.mubr.bf16.gmra.mxu0 %v4797
  %v4874 = vpop.f32.mrf.mxu0
  %v4875 = vadd.f32 0.0, %v4874
  %v4876 = vpop.f32.mrf.mxu0
  %v4877 = vpop.f32.mrf.mxu0
  %v4878 = vadd.f32 0.0, %v4877
  %v4879 = vpop.f32.mrf.mxu0
  %4880 = vmatprep.mubr.bf16.mxu0 0
  %4881 = vmatmul.mubr.bf16.gmra.mxu0 %v4800
  %v4882 = vpop.f32.mrf.mxu0
  %v4883 = vadd.f32 0.0, %v4882
  %v4884 = vpop.f32.mrf.mxu0
  %v4885 = vpop.f32.mrf.mxu0
  %v4886 = vadd.f32 0.0, %v4885
  %v4887 = vpop.f32.mrf.mxu0
  %4888 = vmatprep.mubr.bf16.mxu0 0
  %4889 = vmatmul.mubr.bf16.gmra.mxu0 %v4803
  %v4890 = vpop.f32.mrf.mxu0
  %v4891 = vadd.f32 0.0, %v4890
  %v4892 = vpop.f32.mrf.mxu0
  %v4893 = vpop.f32.mrf.mxu0
  %v4894 = vadd.f32 0.0, %v4893
  %v4895 = vpop.f32.mrf.mxu0
  %4896 = vmatprep.mubr.bf16.mxu0 0
  %4897 = vmatmul.mubr.bf16.gmra.mxu0 %v4806
  %v4898 = vpop.f32.mrf.mxu0
  %v4899 = vadd.f32 0.0, %v4898
  %v4900 = vpop.f32.mrf.mxu0
  %v4901 = vpop.f32.mrf.mxu0
  %v4902 = vadd.f32 0.0, %v4901
  %v4903 = vpop.f32.mrf.mxu0
  %4904 = vdwg.mxu0
  %v5033 = vunpack.c.l.b16 %v177
  %v5034 = vunpack.c.l.b16 %v190
  %v5035 = vunpack.c.l.b16 %v203
  %v5036 = vunpack.c.l.b16 %v216
  %v5037 = vunpack.c.l.b16 %v229
  %v5038 = vunpack.c.l.b16 %v242
  %v5039 = vunpack.c.l.b16 %v255
  %v5040 = vunpack.c.l.b16 %v268
  %v5041 = vunpack.c.l.b16 %v281
  %v5042 = vunpack.c.l.b16 %v294
  %v5043 = vunpack.c.l.b16 %v307
  %v5044 = vunpack.c.l.b16 %v320
  %v5045 = vunpack.c.l.b16 %v333
  %v5046 = vunpack.c.l.b16 %v346
  %v5047 = vunpack.c.l.b16 %v359
  %v5048 = vunpack.c.l.b16 %v372
  %v5049 = vunpack.c.l.b16 %v385
  %v5050 = vunpack.c.l.b16 %v398
  %v5051 = vunpack.c.l.b16 %v411
  %v5052 = vunpack.c.l.b16 %v424
  %v5053 = vunpack.c.l.b16 %v437
  %v5054 = vunpack.c.l.b16 %v450
  %v5055 = vunpack.c.l.b16 %v463
  %v5056 = vunpack.c.l.b16 %v476
  %v5057 = vunpack.c.l.b16 %v489
  %v5058 = vunpack.c.l.b16 %v502
  %v5059 = vunpack.c.l.b16 %v515
  %v5060 = vunpack.c.l.b16 %v528
  %v5061 = vunpack.c.l.b16 %v541
  %v5062 = vunpack.c.l.b16 %v554
  %v5063 = vunpack.c.l.b16 %v567
  %v5064 = vunpack.c.l.b16 %v580
  %v5065 = vunpack.c.l.b16 %v593
  %v5066 = vunpack.c.l.b16 %v606
  %v5067 = vunpack.c.l.b16 %v619
  %v5068 = vunpack.c.l.b16 %v632
  %v5069 = vunpack.c.l.b16 %v645
  %v5070 = vunpack.c.l.b16 %v658
  %v5071 = vunpack.c.l.b16 %v671
  %v5072 = vunpack.c.l.b16 %v684
  %v5073 = vunpack.c.l.b16 %v697
  %v5074 = vunpack.c.l.b16 %v710
  %v5075 = vunpack.c.l.b16 %v723
  %v5076 = vunpack.c.l.b16 %v736
  %v5077 = vunpack.c.l.b16 %v749
  %v5078 = vunpack.c.l.b16 %v762
  %v5079 = vunpack.c.l.b16 %v775
  %v5080 = vunpack.c.l.b16 %v788
  %v5081 = vunpack.c.l.b16 %v801
  %v5082 = vunpack.c.l.b16 %v814
  %v5083 = vunpack.c.l.b16 %v827
  %v5084 = vunpack.c.l.b16 %v840
  %v5085 = vunpack.c.l.b16 %v853
  %v5086 = vunpack.c.l.b16 %v866
  %v5087 = vunpack.c.l.b16 %v879
  %v5088 = vunpack.c.l.b16 %v892
  %v5089 = vunpack.c.l.b16 %v905
  %v5090 = vunpack.c.l.b16 %v918
  %v5091 = vunpack.c.l.b16 %v931
  %v5092 = vunpack.c.l.b16 %v944
  %v5093 = vunpack.c.l.b16 %v957
  %v5094 = vunpack.c.l.b16 %v970
  %v5095 = vunpack.c.l.b16 %v983
  %v5096 = vunpack.c.l.b16 %v996
  %v5097 = vunpack.c.l.b16 %v1009
  %v5098 = vunpack.c.l.b16 %v1022
  %v5099 = vunpack.c.l.b16 %v1035
  %v5100 = vunpack.c.l.b16 %v1048
  %v5101 = vunpack.c.l.b16 %v1061
  %v5102 = vunpack.c.l.b16 %v1074
  %v5103 = vunpack.c.l.b16 %v1087
  %v5104 = vunpack.c.l.b16 %v1100
  %v5105 = vunpack.c.l.b16 %v1113
  %v5106 = vunpack.c.l.b16 %v1126
  %v5107 = vunpack.c.l.b16 %v1139
  %v5108 = vunpack.c.l.b16 %v1152
  %v5109 = vunpack.c.l.b16 %v1165
  %v5110 = vunpack.c.l.b16 %v1178
  %v5111 = vunpack.c.l.b16 %v1191
  %v5112 = vunpack.c.l.b16 %v1204
  %v5113 = vunpack.c.l.b16 %v1217
  %v5114 = vunpack.c.l.b16 %v1230
  %v5115 = vunpack.c.l.b16 %v1243
  %v5116 = vunpack.c.l.b16 %v1256
  %v5117 = vunpack.c.l.b16 %v1269
  %v5118 = vunpack.c.l.b16 %v1282
  %v5119 = vunpack.c.l.b16 %v1295
  %v5120 = vunpack.c.l.b16 %v1308
  %v5121 = vunpack.c.l.b16 %v1321
  %v5122 = vunpack.c.l.b16 %v1334
  %v5123 = vunpack.c.l.b16 %v1347
  %v5124 = vunpack.c.l.b16 %v1360
  %v5125 = vunpack.c.l.b16 %v1373
  %v5126 = vunpack.c.l.b16 %v1386
  %v5127 = vunpack.c.l.b16 %v1399
  %v5128 = vunpack.c.l.b16 %v1412
  %v5129 = vunpack.c.l.b16 %v1425
  %v5130 = vunpack.c.l.b16 %v1438
  %v5131 = vunpack.c.l.b16 %v1451
  %v5132 = vunpack.c.l.b16 %v1464
  %v5133 = vunpack.c.l.b16 %v1477
  %v5134 = vunpack.c.l.b16 %v1490
  %v5135 = vunpack.c.l.b16 %v1503
  %v5136 = vunpack.c.l.b16 %v1516
  %v5137 = vunpack.c.l.b16 %v1529
  %v5138 = vunpack.c.l.b16 %v1542
  %v5139 = vunpack.c.l.b16 %v1555
  %v5140 = vunpack.c.l.b16 %v1568
  %v5141 = vunpack.c.l.b16 %v1581
  %v5142 = vunpack.c.l.b16 %v1594
  %v5143 = vunpack.c.l.b16 %v1607
  %v5144 = vunpack.c.l.b16 %v1620
  %v5145 = vunpack.c.l.b16 %v1633
  %v5146 = vunpack.c.l.b16 %v1646
  %v5147 = vunpack.c.l.b16 %v1659
  %v5148 = vunpack.c.l.b16 %v1672
  %v5149 = vunpack.c.l.b16 %v1685
  %v5150 = vunpack.c.l.b16 %v1698
  %v5151 = vunpack.c.l.b16 %v1711
  %v5152 = vunpack.c.l.b16 %v1724
  %v5153 = vunpack.c.l.b16 %v1737
  %v5154 = vunpack.c.l.b16 %v1750
  %v5155 = vunpack.c.l.b16 %v1763
  %v5156 = vunpack.c.l.b16 %v1776
  %v5157 = vunpack.c.l.b16 %v1789
  %v5158 = vunpack.c.l.b16 %v1802
  %v5159 = vunpack.c.l.b16 %v1815
  %v5160 = vunpack.c.l.b16 %v1828
  %v5161 = vsel %vm4650, %v5034, %v5033
  %v5162 = vsel %vm4652, %v5035, %v5161
  %v5163 = vsel %vm4654, %v5036, %v5162
  %v5164 = vsel %vm4656, %v5037, %v5163
  %v5165 = vsel %vm4658, %v5038, %v5164
  %v5166 = vsel %vm4660, %v5039, %v5165
  %v5167 = vsel %vm4662, %v5040, %v5166
  %v5168 = vsel %vm4650, %v5042, %v5041
  %v5169 = vsel %vm4652, %v5043, %v5168
  %v5170 = vsel %vm4654, %v5044, %v5169
  %v5171 = vsel %vm4656, %v5045, %v5170
  %v5172 = vsel %vm4658, %v5046, %v5171
  %v5173 = vsel %vm4660, %v5047, %v5172
  %v5174 = vsel %vm4662, %v5048, %v5173
  %v5175 = vsel %vm4650, %v5050, %v5049
  %v5176 = vsel %vm4652, %v5051, %v5175
  %v5177 = vsel %vm4654, %v5052, %v5176
  %v5178 = vsel %vm4656, %v5053, %v5177
  %v5179 = vsel %vm4658, %v5054, %v5178
  %v5180 = vsel %vm4660, %v5055, %v5179
  %v5181 = vsel %vm4662, %v5056, %v5180
  %v5182 = vsel %vm4650, %v5058, %v5057
  %v5183 = vsel %vm4652, %v5059, %v5182
  %v5184 = vsel %vm4654, %v5060, %v5183
  %v5185 = vsel %vm4656, %v5061, %v5184
  %v5186 = vsel %vm4658, %v5062, %v5185
  %v5187 = vsel %vm4660, %v5063, %v5186
  %v5188 = vsel %vm4662, %v5064, %v5187
  %v5189 = vsel %vm4650, %v5066, %v5065
  %v5190 = vsel %vm4652, %v5067, %v5189
  %v5191 = vsel %vm4654, %v5068, %v5190
  %v5192 = vsel %vm4656, %v5069, %v5191
  %v5193 = vsel %vm4658, %v5070, %v5192
  %v5194 = vsel %vm4660, %v5071, %v5193
  %v5195 = vsel %vm4662, %v5072, %v5194
  %v5196 = vsel %vm4650, %v5074, %v5073
  %v5197 = vsel %vm4652, %v5075, %v5196
  %v5198 = vsel %vm4654, %v5076, %v5197
  %v5199 = vsel %vm4656, %v5077, %v5198
  %v5200 = vsel %vm4658, %v5078, %v5199
  %v5201 = vsel %vm4660, %v5079, %v5200
  %v5202 = vsel %vm4662, %v5080, %v5201
  %v5203 = vsel %vm4650, %v5082, %v5081
  %v5204 = vsel %vm4652, %v5083, %v5203
  %v5205 = vsel %vm4654, %v5084, %v5204
  %v5206 = vsel %vm4656, %v5085, %v5205
  %v5207 = vsel %vm4658, %v5086, %v5206
  %v5208 = vsel %vm4660, %v5087, %v5207
  %v5209 = vsel %vm4662, %v5088, %v5208
  %v5210 = vsel %vm4650, %v5090, %v5089
  %v5211 = vsel %vm4652, %v5091, %v5210
  %v5212 = vsel %vm4654, %v5092, %v5211
  %v5213 = vsel %vm4656, %v5093, %v5212
  %v5214 = vsel %vm4658, %v5094, %v5213
  %v5215 = vsel %vm4660, %v5095, %v5214
  %v5216 = vsel %vm4662, %v5096, %v5215
  %v5217 = vsel %vm4650, %v5098, %v5097
  %v5218 = vsel %vm4652, %v5099, %v5217
  %v5219 = vsel %vm4654, %v5100, %v5218
  %v5220 = vsel %vm4656, %v5101, %v5219
  %v5221 = vsel %vm4658, %v5102, %v5220
  %v5222 = vsel %vm4660, %v5103, %v5221
  %v5223 = vsel %vm4662, %v5104, %v5222
  %v5224 = vsel %vm4650, %v5106, %v5105
  %v5225 = vsel %vm4652, %v5107, %v5224
  %v5226 = vsel %vm4654, %v5108, %v5225
  %v5227 = vsel %vm4656, %v5109, %v5226
  %v5228 = vsel %vm4658, %v5110, %v5227
  %v5229 = vsel %vm4660, %v5111, %v5228
  %v5230 = vsel %vm4662, %v5112, %v5229
  %v5231 = vsel %vm4650, %v5114, %v5113
  %v5232 = vsel %vm4652, %v5115, %v5231
  %v5233 = vsel %vm4654, %v5116, %v5232
  %v5234 = vsel %vm4656, %v5117, %v5233
  %v5235 = vsel %vm4658, %v5118, %v5234
  %v5236 = vsel %vm4660, %v5119, %v5235
  %v5237 = vsel %vm4662, %v5120, %v5236
  %v5238 = vsel %vm4650, %v5122, %v5121
  %v5239 = vsel %vm4652, %v5123, %v5238
  %v5240 = vsel %vm4654, %v5124, %v5239
  %v5241 = vsel %vm4656, %v5125, %v5240
  %v5242 = vsel %vm4658, %v5126, %v5241
  %v5243 = vsel %vm4660, %v5127, %v5242
  %v5244 = vsel %vm4662, %v5128, %v5243
  %v5245 = vsel %vm4650, %v5130, %v5129
  %v5246 = vsel %vm4652, %v5131, %v5245
  %v5247 = vsel %vm4654, %v5132, %v5246
  %v5248 = vsel %vm4656, %v5133, %v5247
  %v5249 = vsel %vm4658, %v5134, %v5248
  %v5250 = vsel %vm4660, %v5135, %v5249
  %v5251 = vsel %vm4662, %v5136, %v5250
  %v5252 = vsel %vm4650, %v5138, %v5137
  %v5253 = vsel %vm4652, %v5139, %v5252
  %v5254 = vsel %vm4654, %v5140, %v5253
  %v5255 = vsel %vm4656, %v5141, %v5254
  %v5256 = vsel %vm4658, %v5142, %v5255
  %v5257 = vsel %vm4660, %v5143, %v5256
  %v5258 = vsel %vm4662, %v5144, %v5257
  %v5259 = vsel %vm4650, %v5146, %v5145
  %v5260 = vsel %vm4652, %v5147, %v5259
  %v5261 = vsel %vm4654, %v5148, %v5260
  %v5262 = vsel %vm4656, %v5149, %v5261
  %v5263 = vsel %vm4658, %v5150, %v5262
  %v5264 = vsel %vm4660, %v5151, %v5263
  %v5265 = vsel %vm4662, %v5152, %v5264
  %v5266 = vsel %vm4650, %v5154, %v5153
  %v5267 = vsel %vm4652, %v5155, %v5266
  %v5268 = vsel %vm4654, %v5156, %v5267
  %v5269 = vsel %vm4656, %v5157, %v5268
  %v5270 = vsel %vm4658, %v5158, %v5269
  %v5271 = vsel %vm4660, %v5159, %v5270
  %v5272 = vsel %vm4662, %v5160, %v5271
  %v5273 = vpack.c.b16 %v5174, %v5167
  %v5274 = vpack.c.b16 %v5188, %v5181
  %v5275 = vpack.c.b16 %v5202, %v5195
  %v5276 = vpack.c.b16 %v5216, %v5209
  %v5277 = vpack.c.b16 %v5230, %v5223
  %v5278 = vpack.c.b16 %v5244, %v5237
  %v5279 = vpack.c.b16 %v5258, %v5251
  %v5280 = vpack.c.b16 %v5272, %v5265
  %v5283 = vunpack.c.l.b16 %v4390
  %v5284 = vunpack.c.l.b16 %v4391
  %v5285 = vpack.c.b16 %v5284, %v5283
  %v5288 = vsel %vm4783, %v5273, 0
  %v5291 = vsel %vm4783, %v5274, 0
  %v5294 = vsel %vm4783, %v5275, 0
  %v5297 = vsel %vm4783, %v5276, 0
  %v5300 = vsel %vm4783, %v5277, 0
  %v5303 = vsel %vm4783, %v5278, 0
  %v5306 = vsel %vm4783, %v5279, 0
  %v5309 = vsel %vm4783, %v5280, 0
  %5311 = vmatprep.subr.bf16.mxu0 0
  %5312 = vmatpush1.bf16.msra.mxu0 0
  %5313 = vmatprep.subr.bf16.mxu0 0
  %5314 = vmatpush1.bf16.msra.mxu0 0
  %5315 = vmatprep.subr.bf16.mxu0 0
  %5316 = vmatpush1.bf16.msra.mxu0 0
  %5317 = vmatprep.subr.bf16.mxu0 0
  %5318 = vmatpush1.bf16.msra.mxu0 0
  %5319 = vmatprep.subr.bf16.mxu0 0
  %5320 = vmatpush1.bf16.msra.mxu0 0
  %5321 = vmatprep.subr.bf16.mxu0 0
  %5322 = vmatpush1.bf16.msra.mxu0 0
  %5323 = vmatprep.subr.bf16.mxu0 0
  %5324 = vmatpush1.bf16.msra.mxu0 0
  %5325 = vmatprep.subr.bf16.mxu0 0
  %5326 = vmatpush1.bf16.msra.mxu0 %v5285
  %5327 = vmatprep.subr.bf16.mxu0 0
  %5328 = vmatpush2.bf16.msra.mxu0 0
  %5329 = vmatprep.subr.bf16.mxu0 0
  %5330 = vmatpush2.bf16.msra.mxu0 0
  %5331 = vmatprep.subr.bf16.mxu0 0
  %5332 = vmatpush2.bf16.msra.mxu0 0
  %5333 = vmatprep.subr.bf16.mxu0 0
  %5334 = vmatpush2.bf16.msra.mxu0 0
  %5335 = vmatprep.subr.bf16.mxu0 0
  %5336 = vmatpush2.bf16.msra.mxu0 0
  %5337 = vmatprep.subr.bf16.mxu0 0
  %5338 = vmatpush2.bf16.msra.mxu0 0
  %5339 = vmatprep.subr.bf16.mxu0 0
  %5340 = vmatpush2.bf16.msra.mxu0 0
  %5341 = vmatprep.subr.bf16.mxu0 0
  %5342 = vmatpush2.bf16.msra.mxu0 0
  %5343 = vmatprep.mubr.bf16.mxu0 0
  %5344 = vmatmul.mubr.bf16.gmra.mxu0 %v5288
  %v5345 = vpop.f32.mrf.mxu0
  %v5346 = vadd.f32 %v4843, %v5345
  %v5347 = vpop.f32.mrf.mxu0
  %v5348 = vpop.f32.mrf.mxu0
  %v5349 = vadd.f32 %v4846, %v5348
  %v5350 = vpop.f32.mrf.mxu0
  %5351 = vmatprep.mubr.bf16.mxu0 0
  %5352 = vmatmul.mubr.bf16.gmra.mxu0 %v5291
  %v5353 = vpop.f32.mrf.mxu0
  %v5354 = vadd.f32 %v4851, %v5353
  %v5355 = vpop.f32.mrf.mxu0
  %v5356 = vpop.f32.mrf.mxu0
  %v5357 = vadd.f32 %v4854, %v5356
  %v5358 = vpop.f32.mrf.mxu0
  %5359 = vmatprep.mubr.bf16.mxu0 0
  %5360 = vmatmul.mubr.bf16.gmra.mxu0 %v5294
  %v5361 = vpop.f32.mrf.mxu0
  %v5362 = vadd.f32 %v4859, %v5361
  %v5363 = vpop.f32.mrf.mxu0
  %v5364 = vpop.f32.mrf.mxu0
  %v5365 = vadd.f32 %v4862, %v5364
  %v5366 = vpop.f32.mrf.mxu0
  %5367 = vmatprep.mubr.bf16.mxu0 0
  %5368 = vmatmul.mubr.bf16.gmra.mxu0 %v5297
  %v5369 = vpop.f32.mrf.mxu0
  %v5370 = vadd.f32 %v4867, %v5369
  %v5371 = vpop.f32.mrf.mxu0
  %v5372 = vpop.f32.mrf.mxu0
  %v5373 = vadd.f32 %v4870, %v5372
  %v5374 = vpop.f32.mrf.mxu0
  %5375 = vmatprep.mubr.bf16.mxu0 0
  %5376 = vmatmul.mubr.bf16.gmra.mxu0 %v5300
  %v5377 = vpop.f32.mrf.mxu0
  %v5378 = vadd.f32 %v4875, %v5377
  %v5379 = vpop.f32.mrf.mxu0
  %v5380 = vpop.f32.mrf.mxu0
  %v5381 = vadd.f32 %v4878, %v5380
  %v5382 = vpop.f32.mrf.mxu0
  %5383 = vmatprep.mubr.bf16.mxu0 0
  %5384 = vmatmul.mubr.bf16.gmra.mxu0 %v5303
  %v5385 = vpop.f32.mrf.mxu0
  %v5386 = vadd.f32 %v4883, %v5385
  %v5387 = vpop.f32.mrf.mxu0
  %v5388 = vpop.f32.mrf.mxu0
  %v5389 = vadd.f32 %v4886, %v5388
  %v5390 = vpop.f32.mrf.mxu0
  %5391 = vmatprep.mubr.bf16.mxu0 0
  %5392 = vmatmul.mubr.bf16.gmra.mxu0 %v5306
  %v5393 = vpop.f32.mrf.mxu0
  %v5394 = vadd.f32 %v4891, %v5393
  %v5395 = vpop.f32.mrf.mxu0
  %v5396 = vpop.f32.mrf.mxu0
  %v5397 = vadd.f32 %v4894, %v5396
  %v5398 = vpop.f32.mrf.mxu0
  %5399 = vmatprep.mubr.bf16.mxu0 0
  %5400 = vmatmul.mubr.bf16.gmra.mxu0 %v5309
  %v5401 = vpop.f32.mrf.mxu0
  %v5402 = vadd.f32 %v4899, %v5401
  %v5403 = vpop.f32.mrf.mxu0
  %v5404 = vpop.f32.mrf.mxu0
  %v5405 = vadd.f32 %v4902, %v5404
  %v5406 = vpop.f32.mrf.mxu0
  %5407 = vdwg.mxu0
  %v5408 = vld [vmem:[%s4] sm:$0x1]
  %v5410 = vlaneseq
  %v5411 = vshrl.u32 %v5410, 7
  %v5412 = vsub.s32 0, %v5411
  %v5413 = vrot.slane %v5408, %v5412
  %v5415 = vadd.f32 %v5346, %v5413
  %v5416 = vadd.f32 %v5349, %v5413
  %v5417 = vadd.f32 %v5354, %v5413
  %v5418 = vadd.f32 %v5357, %v5413
  %v5419 = vadd.f32 %v5362, %v5413
  %v5420 = vadd.f32 %v5365, %v5413
  %v5421 = vadd.f32 %v5370, %v5413
  %v5422 = vadd.f32 %v5373, %v5413
  %v5423 = vadd.f32 %v5378, %v5413
  %v5424 = vadd.f32 %v5381, %v5413
  %v5425 = vadd.f32 %v5386, %v5413
  %v5426 = vadd.f32 %v5389, %v5413
  %v5427 = vadd.f32 %v5394, %v5413
  %v5428 = vadd.f32 %v5397, %v5413
  %v5429 = vadd.f32 %v5402, %v5413
  %v5430 = vadd.f32 %v5405, %v5413
  %v5431 = vmax.f32 %v5415, 0.0
  %v5432 = vmax.f32 %v5416, 0.0
  %v5433 = vmax.f32 %v5417, 0.0
  %v5434 = vmax.f32 %v5418, 0.0
  %v5435 = vmax.f32 %v5419, 0.0
  %v5436 = vmax.f32 %v5420, 0.0
  %v5437 = vmax.f32 %v5421, 0.0
  %v5438 = vmax.f32 %v5422, 0.0
  %v5439 = vmax.f32 %v5423, 0.0
  %v5440 = vmax.f32 %v5424, 0.0
  %v5441 = vmax.f32 %v5425, 0.0
  %v5442 = vmax.f32 %v5426, 0.0
  %v5443 = vmax.f32 %v5427, 0.0
  %v5444 = vmax.f32 %v5428, 0.0
  %v5445 = vmax.f32 %v5429, 0.0
  %v5446 = vmax.f32 %v5430, 0.0
  %v5447 = vld [vmem:[%s6] sm:$0x1]
  %v5449 = vlaneseq
  %v5450 = vshrl.u32 %v5449, 7
  %v5451 = vsub.s32 0, %v5450
  %v5452 = vrot.slane %v5447, %v5451
  %v5454 = vpack.c.bf16 %v5432, %v5431
  %v5455 = vpack.c.bf16 %v5434, %v5433
  %v5456 = vpack.c.bf16 %v5436, %v5435
  %v5457 = vpack.c.bf16 %v5438, %v5437
  %v5458 = vpack.c.bf16 %v5440, %v5439
  %v5459 = vpack.c.bf16 %v5442, %v5441
  %v5460 = vpack.c.bf16 %v5444, %v5443
  %v5461 = vpack.c.bf16 %v5446, %v5445
  %v5462 = vld [vmem:[%s5] sm:$0xf]
  %v5463 = vld [vmem:[%s5 + $0x4] sm:$0xf]
  %v5464 = vld [vmem:[%s5 + $0x8] sm:$0xf]
  %v5465 = vld [vmem:[%s5 + $0xc] sm:$0xf]
  %v5470 = vunpack.c.l.b16 %v5462
  %v5471 = vunpack.c.l.b16 %v5463
  %v5472 = vunpack.c.l.b16 %v5464
  %v5473 = vunpack.c.l.b16 %v5465
  %v5474 = vpack.c.b16 %v5471, %v5470
  %v5475 = vpack.c.b16 %v5473, %v5472
  %vm5478 = vcmask 261120
  %v5480 = vsel %vm5478, %v5454, 0
  %v5483 = vsel %vm5478, %v5455, 0
  %v5486 = vsel %vm5478, %v5456, 0
  %v5489 = vsel %vm5478, %v5457, 0
  %v5492 = vsel %vm5478, %v5458, 0
  %v5495 = vsel %vm5478, %v5459, 0
  %v5498 = vsel %vm5478, %v5460, 0
  %v5501 = vsel %vm5478, %v5461, 0
  %5503 = vmatprep.subr.bf16.mxu0 0
  %5504 = vmatpush1.bf16.msra.mxu0 0
  %5505 = vmatprep.subr.bf16.mxu0 0
  %5506 = vmatpush1.bf16.msra.mxu0 0
  %5507 = vmatprep.subr.bf16.mxu0 0
  %5508 = vmatpush1.bf16.msra.mxu0 0
  %5509 = vmatprep.subr.bf16.mxu0 0
  %5510 = vmatpush1.bf16.msra.mxu0 0
  %5511 = vmatprep.subr.bf16.mxu0 0
  %5512 = vmatpush1.bf16.msra.mxu0 0
  %5513 = vmatprep.subr.bf16.mxu0 0
  %5514 = vmatpush1.bf16.msra.mxu0 0
  %5515 = vmatprep.subr.bf16.mxu0 0
  %5516 = vmatpush1.bf16.msra.mxu0 %v5475
  %5517 = vmatprep.subr.bf16.mxu0 0
  %5518 = vmatpush1.bf16.msra.mxu0 %v5474
  %5519 = vmatprep.subr.bf16.mxu0 0
  %5520 = vmatpush2.bf16.msra.mxu0 0
  %5521 = vmatprep.subr.bf16.mxu0 0
  %5522 = vmatpush2.bf16.msra.mxu0 0
  %5523 = vmatprep.subr.bf16.mxu0 0
  %5524 = vmatpush2.bf16.msra.mxu0 0
  %5525 = vmatprep.subr.bf16.mxu0 0
  %5526 = vmatpush2.bf16.msra.mxu0 0
  %5527 = vmatprep.subr.bf16.mxu0 0
  %5528 = vmatpush2.bf16.msra.mxu0 0
  %5529 = vmatprep.subr.bf16.mxu0 0
  %5530 = vmatpush2.bf16.msra.mxu0 0
  %5531 = vmatprep.subr.bf16.mxu0 0
  %5532 = vmatpush2.bf16.msra.mxu0 0
  %5533 = vmatprep.subr.bf16.mxu0 0
  %5534 = vmatpush2.bf16.msra.mxu0 0
  %5535 = vmatprep.mubr.bf16.mxu0 0
  %5536 = vmatmul.mubr.bf16.gmra.mxu0 %v5480
  %v5537 = vpop.f32.mrf.mxu0
  %v5538 = vadd.f32 %v5452, %v5537
  %v5539 = vpop.f32.mrf.mxu0
  %v5540 = vpop.f32.mrf.mxu0
  %v5541 = vadd.f32 %v5452, %v5540
  %v5542 = vpop.f32.mrf.mxu0
  %5543 = vmatprep.mubr.bf16.mxu0 0
  %5544 = vmatmul.mubr.bf16.gmra.mxu0 %v5483
  %v5545 = vpop.f32.mrf.mxu0
  %v5546 = vadd.f32 %v5452, %v5545
  %v5547 = vpop.f32.mrf.mxu0
  %v5548 = vpop.f32.mrf.mxu0
  %v5549 = vadd.f32 %v5452, %v5548
  %v5550 = vpop.f32.mrf.mxu0
  %5551 = vmatprep.mubr.bf16.mxu0 0
  %5552 = vmatmul.mubr.bf16.gmra.mxu0 %v5486
  %v5553 = vpop.f32.mrf.mxu0
  %v5554 = vadd.f32 %v5452, %v5553
  %v5555 = vpop.f32.mrf.mxu0
  %v5556 = vpop.f32.mrf.mxu0
  %v5557 = vadd.f32 %v5452, %v5556
  %v5558 = vpop.f32.mrf.mxu0
  %5559 = vmatprep.mubr.bf16.mxu0 0
  %5560 = vmatmul.mubr.bf16.gmra.mxu0 %v5489
  %v5561 = vpop.f32.mrf.mxu0
  %v5562 = vadd.f32 %v5452, %v5561
  %v5563 = vpop.f32.mrf.mxu0
  %v5564 = vpop.f32.mrf.mxu0
  %v5565 = vadd.f32 %v5452, %v5564
  %v5566 = vpop.f32.mrf.mxu0
  %5567 = vmatprep.mubr.bf16.mxu0 0
  %5568 = vmatmul.mubr.bf16.gmra.mxu0 %v5492
  %v5569 = vpop.f32.mrf.mxu0
  %v5570 = vadd.f32 %v5452, %v5569
  %v5571 = vpop.f32.mrf.mxu0
  %v5572 = vpop.f32.mrf.mxu0
  %v5573 = vadd.f32 %v5452, %v5572
  %v5574 = vpop.f32.mrf.mxu0
  %5575 = vmatprep.mubr.bf16.mxu0 0
  %5576 = vmatmul.mubr.bf16.gmra.mxu0 %v5495
  %v5577 = vpop.f32.mrf.mxu0
  %v5578 = vadd.f32 %v5452, %v5577
  %v5579 = vpop.f32.mrf.mxu0
  %v5580 = vpop.f32.mrf.mxu0
  %v5581 = vadd.f32 %v5452, %v5580
  %v5582 = vpop.f32.mrf.mxu0
  %5583 = vmatprep.mubr.bf16.mxu0 0
  %5584 = vmatmul.mubr.bf16.gmra.mxu0 %v5498
  %v5585 = vpop.f32.mrf.mxu0
  %v5586 = vadd.f32 %v5452, %v5585
  %v5587 = vpop.f32.mrf.mxu0
  %v5588 = vpop.f32.mrf.mxu0
  %v5589 = vadd.f32 %v5452, %v5588
  %v5590 = vpop.f32.mrf.mxu0
  %5591 = vmatprep.mubr.bf16.mxu0 0
  %5592 = vmatmul.mubr.bf16.gmra.mxu0 %v5501
  %v5593 = vpop.f32.mrf.mxu0
  %v5594 = vadd.f32 %v5452, %v5593
  %v5595 = vpop.f32.mrf.mxu0
  %v5596 = vpop.f32.mrf.mxu0
  %v5597 = vadd.f32 %v5452, %v5596
  %v5598 = vpop.f32.mrf.mxu0
  %5599 = vdwg.mxu0
  %v5600 = vmax.f32 %v5538, 0.0
  %v5601 = vmax.f32 %v5541, 0.0
  %v5602 = vmax.f32 %v5546, 0.0
  %v5603 = vmax.f32 %v5549, 0.0
  %v5604 = vmax.f32 %v5554, 0.0
  %v5605 = vmax.f32 %v5557, 0.0
  %v5606 = vmax.f32 %v5562, 0.0
  %v5607 = vmax.f32 %v5565, 0.0
  %v5608 = vmax.f32 %v5570, 0.0
  %v5609 = vmax.f32 %v5573, 0.0
  %v5610 = vmax.f32 %v5578, 0.0
  %v5611 = vmax.f32 %v5581, 0.0
  %v5612 = vmax.f32 %v5586, 0.0
  %v5613 = vmax.f32 %v5589, 0.0
  %v5614 = vmax.f32 %v5594, 0.0
  %v5615 = vmax.f32 %v5597, 0.0
  %v5616 = vld [vmem:[%s7] sm:$0x1]
  %v5618 = vlaneseq
  %v5619 = vshrl.u32 %v5618, 7
  %v5620 = vsub.s32 0, %v5619
  %v5621 = vrot.slane %v5616, %v5620
  %v5623 = vmul.f32 %v5600, %v5621
  %v5624 = vmul.f32 %v5601, %v5621
  %v5625 = vmul.f32 %v5602, %v5621
  %v5626 = vmul.f32 %v5603, %v5621
  %v5627 = vmul.f32 %v5604, %v5621
  %v5628 = vmul.f32 %v5605, %v5621
  %v5629 = vmul.f32 %v5606, %v5621
  %v5630 = vmul.f32 %v5607, %v5621
  %v5631 = vmul.f32 %v5608, %v5621
  %v5632 = vmul.f32 %v5609, %v5621
  %v5633 = vmul.f32 %v5610, %v5621
  %v5634 = vmul.f32 %v5611, %v5621
  %v5635 = vmul.f32 %v5612, %v5621
  %v5636 = vmul.f32 %v5613, %v5621
  %v5637 = vmul.f32 %v5614, %v5621
  %v5638 = vmul.f32 %v5615, %v5621
  %v5639 = vsel %vm5478, %v5623, 0.0
  %5640 = vadd.xlane.f32.xlu0 %v5639
  %v5641 = vpop.xlane.xlu0 %5640
  %v5642 = vsel %vm5478, %v5624, 0.0
  %5643 = vadd.xlane.f32.xlu0 %v5642
  %v5644 = vpop.xlane.xlu0 %5643
  %v5645 = vsel %vm5478, %v5625, 0.0
  %5646 = vadd.xlane.f32.xlu0 %v5645
  %v5647 = vpop.xlane.xlu0 %5646
  %v5648 = vsel %vm5478, %v5626, 0.0
  %5649 = vadd.xlane.f32.xlu0 %v5648
  %v5650 = vpop.xlane.xlu0 %5649
  %v5651 = vsel %vm5478, %v5627, 0.0
  %5652 = vadd.xlane.f32.xlu0 %v5651
  %v5653 = vpop.xlane.xlu0 %5652
  %v5654 = vsel %vm5478, %v5628, 0.0
  %5655 = vadd.xlane.f32.xlu0 %v5654
  %v5656 = vpop.xlane.xlu0 %5655
  %v5657 = vsel %vm5478, %v5629, 0.0
  %5658 = vadd.xlane.f32.xlu0 %v5657
  %v5659 = vpop.xlane.xlu0 %5658
  %v5660 = vsel %vm5478, %v5630, 0.0
  %5661 = vadd.xlane.f32.xlu0 %v5660
  %v5662 = vpop.xlane.xlu0 %5661
  %v5663 = vsel %vm5478, %v5631, 0.0
  %5664 = vadd.xlane.f32.xlu0 %v5663
  %v5665 = vpop.xlane.xlu0 %5664
  %v5666 = vsel %vm5478, %v5632, 0.0
  %5667 = vadd.xlane.f32.xlu0 %v5666
  %v5668 = vpop.xlane.xlu0 %5667
  %v5669 = vsel %vm5478, %v5633, 0.0
  %5670 = vadd.xlane.f32.xlu0 %v5669
  %v5671 = vpop.xlane.xlu0 %5670
  %v5672 = vsel %vm5478, %v5634, 0.0
  %5673 = vadd.xlane.f32.xlu0 %v5672
  %v5674 = vpop.xlane.xlu0 %5673
  %v5675 = vsel %vm5478, %v5635, 0.0
  %5676 = vadd.xlane.f32.xlu0 %v5675
  %v5677 = vpop.xlane.xlu0 %5676
  %v5678 = vsel %vm5478, %v5636, 0.0
  %5679 = vadd.xlane.f32.xlu0 %v5678
  %v5680 = vpop.xlane.xlu0 %5679
  %v5681 = vsel %vm5478, %v5637, 0.0
  %5682 = vadd.xlane.f32.xlu0 %v5681
  %v5683 = vpop.xlane.xlu0 %5682
  %v5684 = vsel %vm5478, %v5638, 0.0
  %5685 = vadd.xlane.f32.xlu0 %v5684
  %v5686 = vpop.xlane.xlu0 %5685
  %s5687 = sld [smem:[#allocation2]]
  %v5688 = vstv %s5687
  %v5689 = vadd.f32 %v5641, %v5688
  %v5690 = vadd.f32 %v5644, %v5688
  %v5691 = vadd.f32 %v5647, %v5688
  %v5692 = vadd.f32 %v5650, %v5688
  %v5693 = vadd.f32 %v5653, %v5688
  %v5694 = vadd.f32 %v5656, %v5688
  %v5695 = vadd.f32 %v5659, %v5688
  %v5696 = vadd.f32 %v5662, %v5688
  %v5697 = vadd.f32 %v5665, %v5688
  %v5698 = vadd.f32 %v5668, %v5688
  %v5699 = vadd.f32 %v5671, %v5688
  %v5700 = vadd.f32 %v5674, %v5688
  %v5701 = vadd.f32 %v5677, %v5688
  %v5702 = vadd.f32 %v5680, %v5688
  %v5703 = vadd.f32 %v5683, %v5688
  %v5704 = vadd.f32 %v5686, %v5688
  %v5705 = vxor.u32 %v5689, 2147483648
  %v5706 = vxor.u32 %v5690, 2147483648
  %v5707 = vxor.u32 %v5691, 2147483648
  %v5708 = vxor.u32 %v5692, 2147483648
  %v5709 = vxor.u32 %v5693, 2147483648
  %v5710 = vxor.u32 %v5694, 2147483648
  %v5711 = vxor.u32 %v5695, 2147483648
  %v5712 = vxor.u32 %v5696, 2147483648
  %v5713 = vxor.u32 %v5697, 2147483648
  %v5714 = vxor.u32 %v5698, 2147483648
  %v5715 = vxor.u32 %v5699, 2147483648
  %v5716 = vxor.u32 %v5700, 2147483648
  %v5717 = vxor.u32 %v5701, 2147483648
  %v5718 = vxor.u32 %v5702, 2147483648
  %v5719 = vxor.u32 %v5703, 2147483648
  %v5720 = vxor.u32 %v5704, 2147483648
  %v5721 = vmul.f32 %v5705, 1.442695
  %v5722 = vpow.pop %v5721
  %v5723 = vmul.f32 %v5706, 1.442695
  %v5724 = vpow.pop %v5723
  %v5725 = vmul.f32 %v5707, 1.442695
  %v5726 = vpow.pop %v5725
  %v5727 = vmul.f32 %v5708, 1.442695
  %v5728 = vpow.pop %v5727
  %v5729 = vmul.f32 %v5709, 1.442695
  %v5730 = vpow.pop %v5729
  %v5731 = vmul.f32 %v5710, 1.442695
  %v5732 = vpow.pop %v5731
  %v5733 = vmul.f32 %v5711, 1.442695
  %v5734 = vpow.pop %v5733
  %v5735 = vmul.f32 %v5712, 1.442695
  %v5736 = vpow.pop %v5735
  %v5737 = vmul.f32 %v5713, 1.442695
  %v5738 = vpow.pop %v5737
  %v5739 = vmul.f32 %v5714, 1.442695
  %v5740 = vpow.pop %v5739
  %v5741 = vmul.f32 %v5715, 1.442695
  %v5742 = vpow.pop %v5741
  %v5743 = vmul.f32 %v5716, 1.442695
  %v5744 = vpow.pop %v5743
  %v5745 = vmul.f32 %v5717, 1.442695
  %v5746 = vpow.pop %v5745
  %v5747 = vmul.f32 %v5718, 1.442695
  %v5748 = vpow.pop %v5747
  %v5749 = vmul.f32 %v5719, 1.442695
  %v5750 = vpow.pop %v5749
  %v5751 = vmul.f32 %v5720, 1.442695
  %v5752 = vpow.pop %v5751
  %v5753 = vadd.f32 %v5722, 1.0
  %v5754 = vadd.f32 %v5724, 1.0
  %v5755 = vadd.f32 %v5726, 1.0
  %v5756 = vadd.f32 %v5728, 1.0
  %v5757 = vadd.f32 %v5730, 1.0
  %v5758 = vadd.f32 %v5732, 1.0
  %v5759 = vadd.f32 %v5734, 1.0
  %v5760 = vadd.f32 %v5736, 1.0
  %v5761 = vadd.f32 %v5738, 1.0
  %v5762 = vadd.f32 %v5740, 1.0
  %v5763 = vadd.f32 %v5742, 1.0
  %v5764 = vadd.f32 %v5744, 1.0
  %v5765 = vadd.f32 %v5746, 1.0
  %v5766 = vadd.f32 %v5748, 1.0
  %v5767 = vadd.f32 %v5750, 1.0
  %v5768 = vadd.f32 %v5752, 1.0
  %v5769 = vrcp.pop %v5753
  %v5770 = vmul.f32 1.0, %v5769
  %v5771 = vrcp.pop %v5754
  %v5772 = vmul.f32 1.0, %v5771
  %v5773 = vrcp.pop %v5755
  %v5774 = vmul.f32 1.0, %v5773
  %v5775 = vrcp.pop %v5756
  %v5776 = vmul.f32 1.0, %v5775
  %v5777 = vrcp.pop %v5757
  %v5778 = vmul.f32 1.0, %v5777
  %v5779 = vrcp.pop %v5758
  %v5780 = vmul.f32 1.0, %v5779
  %v5781 = vrcp.pop %v5759
  %v5782 = vmul.f32 1.0, %v5781
  %v5783 = vrcp.pop %v5760
  %v5784 = vmul.f32 1.0, %v5783
  %v5785 = vrcp.pop %v5761
  %v5786 = vmul.f32 1.0, %v5785
  %v5787 = vrcp.pop %v5762
  %v5788 = vmul.f32 1.0, %v5787
  %v5789 = vrcp.pop %v5763
  %v5790 = vmul.f32 1.0, %v5789
  %v5791 = vrcp.pop %v5764
  %v5792 = vmul.f32 1.0, %v5791
  %v5793 = vrcp.pop %v5765
  %v5794 = vmul.f32 1.0, %v5793
  %v5795 = vrcp.pop %v5766
  %v5796 = vmul.f32 1.0, %v5795
  %v5797 = vrcp.pop %v5767
  %v5798 = vmul.f32 1.0, %v5797
  %v5799 = vrcp.pop %v5768
  %v5800 = vmul.f32 1.0, %v5799
  %v5817 = vlaneseq
  %v5818 = vand.u32 %v5817, 127
  %v5819 = vlaneseq
  %v5820 = vshrl.u32 %v5819, 7
  %v5821 = vsub.s32 %v5818, %v5820
  %v5822 = vrot.slane %v5770, %v5821
  %v5823 = vadd.s32 %v5818, 4294967288
  %v5824 = vlaneseq
  %v5825 = vshrl.u32 %v5824, 7
  %v5826 = vsub.s32 %v5823, %v5825
  %v5827 = vrot.slane %v5772, %v5826
  %vm5828 = vcmask 130112
  %v5829 = vsel %vm5828, %v5827, %v5822
  %v5830 = vadd.s32 %v5818, 4294967280
  %v5831 = vlaneseq
  %v5832 = vshrl.u32 %v5831, 7
  %v5833 = vsub.s32 %v5830, %v5832
  %v5834 = vrot.slane %v5774, %v5833
  %vm5835 = vcmask 195712
  %v5836 = vsel %vm5835, %v5834, %v5829
  %v5837 = vadd.s32 %v5818, 4294967272
  %v5838 = vlaneseq
  %v5839 = vshrl.u32 %v5838, 7
  %v5840 = vsub.s32 %v5837, %v5839
  %v5841 = vrot.slane %v5776, %v5840
  %vm5842 = vcmask 261312
  %v5843 = vsel %vm5842, %v5841, %v5836
  %v5844 = vadd.s32 %v5818, 4294967264
  %v5845 = vlaneseq
  %v5846 = vshrl.u32 %v5845, 7
  %v5847 = vsub.s32 %v5844, %v5846
  %v5848 = vrot.slane %v5778, %v5847
  %vm5849 = vcmask 326912
  %v5850 = vsel %vm5849, %v5848, %v5843
  %v5851 = vadd.s32 %v5818, 4294967256
  %v5852 = vlaneseq
  %v5853 = vshrl.u32 %v5852, 7
  %v5854 = vsub.s32 %v5851, %v5853
  %v5855 = vrot.slane %v5780, %v5854
  %vm5856 = vcmask 392512
  %v5857 = vsel %vm5856, %v5855, %v5850
  %v5858 = vadd.s32 %v5818, 4294967248
  %v5859 = vlaneseq
  %v5860 = vshrl.u32 %v5859, 7
  %v5861 = vsub.s32 %v5858, %v5860
  %v5862 = vrot.slane %v5782, %v5861
  %vm5863 = vcmask 458112
  %v5864 = vsel %vm5863, %v5862, %v5857
  %v5865 = vadd.s32 %v5818, 4294967240
  %v5866 = vlaneseq
  %v5867 = vshrl.u32 %v5866, 7
  %v5868 = vsub.s32 %v5865, %v5867
  %v5869 = vrot.slane %v5784, %v5868
  %vm5870 = vcmask 523712
  %v5871 = vsel %vm5870, %v5869, %v5864
  %v5872 = vadd.s32 %v5818, 4294967232
  %v5873 = vlaneseq
  %v5874 = vshrl.u32 %v5873, 7
  %v5875 = vsub.s32 %v5872, %v5874
  %v5876 = vrot.slane %v5786, %v5875
  %vm5877 = vcmask 589312
  %v5878 = vsel %vm5877, %v5876, %v5871
  %v5879 = vadd.s32 %v5818, 4294967224
  %v5880 = vlaneseq
  %v5881 = vshrl.u32 %v5880, 7
  %v5882 = vsub.s32 %v5879, %v5881
  %v5883 = vrot.slane %v5788, %v5882
  %vm5884 = vcmask 654912
  %v5885 = vsel %vm5884, %v5883, %v5878
  %v5886 = vadd.s32 %v5818, 4294967216
  %v5887 = vlaneseq
  %v5888 = vshrl.u32 %v5887, 7
  %v5889 = vsub.s32 %v5886, %v5888
  %v5890 = vrot.slane %v5790, %v5889
  %vm5891 = vcmask 720512
  %v5892 = vsel %vm5891, %v5890, %v5885
  %v5893 = vadd.s32 %v5818, 4294967208
  %v5894 = vlaneseq
  %v5895 = vshrl.u32 %v5894, 7
  %v5896 = vsub.s32 %v5893, %v5895
  %v5897 = vrot.slane %v5792, %v5896
  %vm5898 = vcmask 786112
  %v5899 = vsel %vm5898, %v5897, %v5892
  %v5900 = vadd.s32 %v5818, 4294967200
  %v5901 = vlaneseq
  %v5902 = vshrl.u32 %v5901, 7
  %v5903 = vsub.s32 %v5900, %v5902
  %v5904 = vrot.slane %v5794, %v5903
  %vm5905 = vcmask 851712
  %v5906 = vsel %vm5905, %v5904, %v5899
  %v5907 = vadd.s32 %v5818, 4294967192
  %v5908 = vlaneseq
  %v5909 = vshrl.u32 %v5908, 7
  %v5910 = vsub.s32 %v5907, %v5909
  %v5911 = vrot.slane %v5796, %v5910
  %vm5912 = vcmask 917312
  %v5913 = vsel %vm5912, %v5911, %v5906
  %v5914 = vadd.s32 %v5818, 4294967184
  %v5915 = vlaneseq
  %v5916 = vshrl.u32 %v5915, 7
  %v5917 = vsub.s32 %v5914, %v5916
  %v5918 = vrot.slane %v5798, %v5917
  %vm5919 = vcmask 982912
  %v5920 = vsel %vm5919, %v5918, %v5913
  %v5921 = vadd.s32 %v5818, 4294967176
  %v5922 = vlaneseq
  %v5923 = vshrl.u32 %v5922, 7
  %v5924 = vsub.s32 %v5921, %v5923
  %v5925 = vrot.slane %v5800, %v5924
  %vm5926 = vcmask 1048512
  %v5927 = vsel %vm5926, %v5925, %v5920
  %5929 = vst [vmem:[%s9] sm:$0x1] %v5927
  // Predicated region
  $region38: #{dnn_forward.1} parent=0 // pred_check
    _
  $region39: #{dnn_forward.1} parent=0 // pred_check_branch
    %5931 = sbr.rel (0) target = $region41
  $region40: #{dnn_forward.1} parent=0 // pred_region
    _
  $region41: #{dnn_forward.1} parent=0 // pred_fallthru
    _
  // Predicated region
  $region42: #{dnn_forward.1} parent=0 // pred_check
    _
  $region43: #{dnn_forward.1} parent=0 // pred_check_branch
    %5933 = sbr.rel (0) target = $region45
  $region44: #{dnn_forward.1} parent=0 // pred_region
    _
  $region45: #{dnn_forward.1} parent=0 // pred_fallthru
    _

</llo_original>
